<compile_context>
chip_gen: v7x
topology: tpu7x:2x2x1
jax: 0.10.0
libtpu: 0.0.40
codegen_flags: <defaults>
</compile_context>

<pallas_src>
import numpy as np
import jax
import jax.numpy as jnp
from jax.experimental import pallas as pl
from jax.experimental.pallas import tpu as pltpu

C_IN = 512           # vgg16 feature channels feeding self.conv
NUM_CHANNELS = 2048  # self.num_channels (default)
H1, H2, H3, H4 = 128, 64, 32, 8
LANES = 128          # TPU vreg lane width


def _cdiv(a, b):
    return -(-a // b)


def _vmem_capacity_bytes():
    """Physical per-core VMEM; conservative fallback = v7x (smallest, 64 MiB)."""
    try:
        return int(pltpu.get_tpu_info().vmem_capacity_bytes)
    except Exception:
        return 64 << 20


def _pick_tb(n):
    """Largest tb in {8,4,2,1} dividing n such that the 'parallel' batch grid axis
    has >= 2 steps (keeps both v7x TensorCores busy); else the largest divisor."""
    for tb in (8, 4, 2, 1):
        if n % tb == 0 and n // tb >= 2:
            return tb
    for tb in (8, 4, 2, 1):
        if n % tb == 0:
            return tb
    return 1


def _plan_spatial(hw, tb, itemsize, vmem_phys):
    """Choose (thw, nhw, hw_pad) for the spatial (lane) axis.

    Budget: double-buffered x stream <= min(60% physical VMEM, 48 MiB), leaving
    room for weights (~0.3 MiB), the pooled-sum scratch, output and headroom.
    """
    x_budget = min(int(vmem_phys * 0.6), 48 << 20)
    row_bytes = tb * C_IN * itemsize
    max_block = max(x_budget // 2, row_bytes * LANES)

    # Case A: the whole spatial extent of a batch tile fits in one block.
    # No padding, maximal DMA contiguity; pipelining still happens across batch.
    # All realistic vgg16 spatial sizes (49, 196, ~1050, ...) land here.
    if hw * row_bytes <= max_block:
        return hw, 1, hw

    # Case B: tile the spatial axis in multiples of 128 lanes; zero-pad to a
    # multiple of thw with <= 12.5% extra traffic.  Zero padding is exact:
    # the 1/HW scale is folded with the *true* hw.
    n128 = _cdiv(hw, LANES)
    c_max = max(1, min(max_block // (row_bytes * LANES), 16))
    for c in range(int(c_max), 0, -1):
        waste = (_cdiv(n128, c) * c - n128) * LANES
        if waste == 0 or waste * 8 <= hw:
            thw = c * LANES
            nhw = _cdiv(n128, c)
            return thw, nhw, nhw * thw
    return LANES, n128, n128 * LANES  # unreachable (c=1 always accepted)


def backbone_forward(x_nchw, fused_params):
    """x_nchw: (N, C_IN, H, W) float32/bfloat16 trunk feature map (NCHW layout).
    fused_params: output of fuse_params(params, hw=H*W)."""
    n, c, h, w = x_nchw.shape
    assert c == C_IN, c
    hw = h * w
    wf, bf, (w2, b2), (w3, b3), (w4, b4), fused_hw = fused_params
    assert fused_hw == hw, "fused params were folded for a different spatial size"

    itemsize = int(jnp.dtype(x_nchw.dtype).itemsize)
    vmem_phys = _vmem_capacity_bytes()

    tb = _pick_tb(n)
    nb = n // tb
    thw, nhw, hw_pad = _plan_spatial(hw, tb, itemsize, vmem_phys)

    # NCHW -> (N, C, H*W) is a pure view reshape: channels on sublanes, spatial on
    # lanes, no HBM transpose.
    x = x_nchw.reshape(n, c, hw)
    if hw_pad != hw:
        # Only reached in Case B (very large, non-aligned hw).
        # TODO(synk): this pad materialises one extra copy of the feature map;
        # realistic vgg16 spatial sizes always hit Case A (no padding).
        x = jnp.pad(x, ((0, 0), (0, 0), (0, hw_pad - hw)))

    def const(shape):
        # Weights: constant block index -> fetched into VMEM once, stay resident.
        return pl.BlockSpec(shape, lambda b, s, _nd=len(shape): (0,) * _nd)

    def kernel(x_ref, wf_ref, bf_ref, w2_ref, b2_ref, w3_ref, b3_ref, w4_ref, b4_ref,
               out_ref, pool_acc):
        s = pl.program_id(1)

        if nhw > 1:
            @pl.when(s == 0)
            def _init():
                pool_acc[...] = jnp.zeros_like(pool_acc)

            # Lane-parallel partial sums: static 128-lane slices, pure VPU adds.
            # The single cross-lane reduce/relayout is deferred to the head.
            part = x_ref[:, :, 0:LANES].astype(jnp.float32)
            for off in range(LANES, thw, LANES):
                part = part + x_ref[:, :, off:off + LANES].astype(jnp.float32)
            pool_acc[...] += part

        def head():
            # AdaptiveAvgPool2d->1x1: raw spatial sum (1/HW is pre-folded into wf).
            if nhw > 1:
                pooled = jnp.sum(pool_acc[...], axis=-1)               # (tb, C_IN)
            else:
                pooled = jnp.sum(x_ref[...].astype(jnp.float32), axis=-1)
            hi = jax.lax.Precision.HIGHEST
            # avgpool-scale + Conv2d(512,2048,1) + Flatten + Linear(2048,128),
            # pre-folded offline into one (512,128) matmul.
            z = jnp.dot(pooled, wf_ref[...],
                        preferred_element_type=jnp.float32, precision=hi) + bf_ref[...]
            z = jnp.maximum(z, 0.0)                                    # .relu()
            z = jnp.dot(z, w2_ref[...],
                        preferred_element_type=jnp.float32, precision=hi) + b2_ref[...]
            z = jnp.maximum(z, 0.0)
            z = jnp.dot(z, w3_ref[...],
                        preferred_element_type=jnp.float32, precision=hi) + b3_ref[...]
            z = jnp.maximum(z, 0.0)
            z = jnp.dot(z, w4_ref[...],
                        preferred_element_type=jnp.float32, precision=hi) + b4_ref[...]
            out_ref[...] = jax.nn.sigmoid(z)[None]                     # .sigmoid()

        if nhw > 1:
            pl.when(s == pl.num_programs(1) - 1)(head)
        else:
            head()

    grid_spec = pltpu.PrefetchScalarGridSpec(
        num_scalar_prefetch=0,
        grid=(nb, nhw),
        in_specs=[
            pl.BlockSpec((tb, C_IN, thw), lambda b, s: (b, 0, s)),   # feature-map tile
            const((C_IN, H1)), const((1, H1)),                       # fused conv+linear1
            const((H1, H2)), const((1, H2)),                         # linear2
            const((H2, H3)), const((1, H3)),                         # linear3
            const((H3, H4)), const((1, H4)),                         # linear4
        ],
        # 3-D output (nb, tb, 8): last two block dims equal the full array dims,
        # so any tb (1/2/4/8) is layout-legal.
        out_specs=pl.BlockSpec((1, tb, H4), lambda b, s: (b, 0, 0)),
        scratch_shapes=[pltpu.VMEM((tb, C_IN, LANES), jnp.float32)],  # pooled partial sums
    )

    # Scoped-VMEM limit from the actual footprint (double-buffered x + weights +
    # scratch + output + headroom), capped below physical VMEM (v7x = 64 MiB).
    weight_bytes = sum(int(a.size) * int(jnp.dtype(a.dtype).itemsize)
                       for a in (wf, bf, w2, b2, w3, b3, w4, b4))
    block_bytes = tb * C_IN * thw * itemsize
    scratch_bytes = tb * C_IN * LANES * 4
    vmem_limit = (2 * block_bytes + 2 * weight_bytes + scratch_bytes
                  + 2 * tb * H4 * 4 + (4 << 20))
    vmem_limit = int(min(max(vmem_limit, 16 << 20), int(vmem_phys * 0.9)))

    out = pl.pallas_call(
        kernel,
        out_shape=jax.ShapeDtypeStruct((nb, tb, H4), jnp.float32),
        grid_spec=grid_spec,
        compiler_params=pltpu.CompilerParams(
            dimension_semantics=("parallel", "arbitrary"),
            vmem_limit_bytes=vmem_limit),
    )(x, wf, bf, w2, b2, w3, b3, w4, b4)

    return out.reshape(-1, 2, 4)  # x.reshape((-1, 2, 4))


def _init_dense(key, fan_in, fan_out):
    """PyTorch-style uniform(-1/sqrt(fan_in), 1/sqrt(fan_in)) init.

    NOTE: weights are stored as (fan_in, fan_out) — transposed vs torch's (out, in);
    real pretrained Backbone weights must be transposed when loaded.
    """
    kw, kb = jax.random.split(key)
    bound = 1.0 / np.sqrt(fan_in)
    wgt = jax.random.uniform(kw, (fan_in, fan_out), jnp.float32, -bound, bound)
    b = jax.random.uniform(kb, (1, fan_out), jnp.float32, -bound, bound)
    return wgt, b


def make_params(key):
    ks = jax.random.split(key, 5)
    conv = _init_dense(ks[0], C_IN, NUM_CHANNELS)   # Conv2d(512, 2048, 1) as dense
    lin1 = _init_dense(ks[1], NUM_CHANNELS, H1)     # Linear(2048, 128)
    lin2 = _init_dense(ks[2], H1, H2)               # Linear(128, 64)
    lin3 = _init_dense(ks[3], H2, H3)               # Linear(64, 32)
    lin4 = _init_dense(ks[4], H3, H4)               # Linear(32, 8)
    return conv, lin1, lin2, lin3, lin4


def fuse_params(params, hw):
    """Offline fold: avgpool scale + Conv2d(512,2048,1) + Linear(2048,128) -> one matrix.
    No nonlinearity sits between them, so this is algebraically exact:
        linear1(conv(mean_hw(x))) == sum_hw(x) @ [(wc @ w1)/HW] + (bc @ w1 + b1)
    """
    (wc, bc), (w1, b1), lin2, lin3, lin4 = params
    hi = jax.lax.Precision.HIGHEST
    wf = jnp.dot(wc, w1, precision=hi) * (1.0 / hw)   # (512, 128)
    bf = jnp.dot(bc, w1, precision=hi) + b1           # (1, 128)
    return wf, bf, lin2, lin3, lin4, hw


def _reference(x_nchw, params):
    """Pure-JAX reference of the unfused module math (correctness check)."""
    n, c, h, w = x_nchw.shape
    hi = jax.lax.Precision.HIGHEST
    pooled = jnp.mean(x_nchw.reshape(n, c, h * w), axis=2)   # adaptive avgpool -> 1x1
    (wc, bc), (w1, b1), (w2, b2), (w3, b3), (w4, b4) = params
    z = jnp.dot(pooled, wc, precision=hi) + bc               # 1x1 conv + flatten
    z = jnp.maximum(jnp.dot(z, w1, precision=hi) + b1, 0.0)
    z = jnp.maximum(jnp.dot(z, w2, precision=hi) + b2, 0.0)
    z = jnp.maximum(jnp.dot(z, w3, precision=hi) + b3, 0.0)
    z = jax.nn.sigmoid(jnp.dot(z, w4, precision=hi) + b4)
    return z.reshape(-1, 2, 4)


if __name__ == "__main__":
    key = jax.random.PRNGKey(0)
    k_params, k_x, k_x2 = jax.random.split(key, 3)

    params = make_params(k_params)

    # Small deterministic example: batch=2, vgg trunk feature map 512 x 4 x 4 (NCHW).
    x = jax.random.normal(k_x, (2, C_IN, 4, 4), dtype=jnp.float32)
    fused = fuse_params(params, hw=4 * 4)
    y = jax.block_until_ready(backbone_forward(x, fused))

    assert y.shape == (2, 2, 4), y.shape
    assert bool(jnp.all(jnp.isfinite(y)))
    assert bool(jnp.all((y >= 0.0) & (y <= 1.0)))            # sigmoid output range
    y_ref = _reference(x, params)
    assert bool(jnp.allclose(y, y_ref, atol=2e-3, rtol=2e-3)), \
        float(jnp.max(jnp.abs(y - y_ref)))

    # Second shape: realistic vgg-like 14x14 spatial extent (not a multiple of 128)
    # and batch 4 (tb=2, nb=2) — exercises the full-extent (Case A) path.
    x2 = jax.random.normal(k_x2, (4, C_IN, 14, 14), dtype=jnp.float32)
    fused2 = fuse_params(params, hw=14 * 14)
    y2 = jax.block_until_ready(backbone_forward(x2, fused2))
    assert y2.shape == (4, 2, 4), y2.shape
    y2_ref = _reference(x2, params)
    assert bool(jnp.allclose(y2, y2_ref, atol=2e-3, rtol=2e-3)), \
        float(jnp.max(jnp.abs(y2 - y2_ref)))

    print("KERNEL_OK")
</pallas_src>

<mosaic_0001>
module attributes {stable_mosaic.version = 11 : i64} {
  func.func @kernel(%arg0: i32, %arg1: i32, %arg2: memref<1x512x16xf32, #tpu.memory_space<vmem>>, %arg3: memref<512x128xf32, #tpu.memory_space<vmem>>, %arg4: memref<1x128xf32, #tpu.memory_space<vmem>>, %arg5: memref<128x64xf32, #tpu.memory_space<vmem>>, %arg6: memref<1x64xf32, #tpu.memory_space<vmem>>, %arg7: memref<64x32xf32, #tpu.memory_space<vmem>>, %arg8: memref<1x32xf32, #tpu.memory_space<vmem>>, %arg9: memref<32x8xf32, #tpu.memory_space<vmem>>, %arg10: memref<1x8xf32, #tpu.memory_space<vmem>>, %arg11: memref<1x1x8xf32, #tpu.memory_space<vmem>>, %arg12: memref<1x512x128xf32, #tpu.memory_space<vmem>>) attributes {dimension_semantics = [#tpu.dimension_semantics<parallel>, #tpu.dimension_semantics<arbitrary>], iteration_bounds = array<i64: 2, 1>, scalar_prefetch = 0 : i64, scratch_operands = 1 : i64, tpu.core_type = #tpu.core_type<tc>, window_params = [{transform_indices = @transform_0, window_bounds = array<i64: 1, 512, 16>}, {pipeline_mode = #tpu.pipeline_mode<synchronous>, transform_indices = @transform_1, window_bounds = array<i64: 512, 128>}, {pipeline_mode = #tpu.pipeline_mode<synchronous>, transform_indices = @transform_2, window_bounds = array<i64: 1, 128>}, {pipeline_mode = #tpu.pipeline_mode<synchronous>, transform_indices = @transform_3, window_bounds = array<i64: 128, 64>}, {pipeline_mode = #tpu.pipeline_mode<synchronous>, transform_indices = @transform_4, window_bounds = array<i64: 1, 64>}, {pipeline_mode = #tpu.pipeline_mode<synchronous>, transform_indices = @transform_5, window_bounds = array<i64: 64, 32>}, {pipeline_mode = #tpu.pipeline_mode<synchronous>, transform_indices = @transform_6, window_bounds = array<i64: 1, 32>}, {pipeline_mode = #tpu.pipeline_mode<synchronous>, transform_indices = @transform_7, window_bounds = array<i64: 32, 8>}, {pipeline_mode = #tpu.pipeline_mode<synchronous>, transform_indices = @transform_8, window_bounds = array<i64: 1, 8>}, {transform_indices = @transform_9, window_bounds = array<i64: 1, 1, 8>}]} {
    %c0 = arith.constant 0 : index
    %c0_0 = arith.constant 0 : index
    %c0_1 = arith.constant 0 : index
    %0 = vector.load %arg2[%c0, %c0_0, %c0_1] : memref<1x512x16xf32, #tpu.memory_space<vmem>>, vector<1x512x16xf32>
    %cst = arith.constant dense<0.000000e+00> : vector<1x512xf32>
    %1 = vector.multi_reduction <add>, %0, %cst [2] : vector<1x512x16xf32> to vector<1x512xf32>
    %c0_2 = arith.constant 0 : index
    %c0_3 = arith.constant 0 : index
    %2 = vector.load %arg3[%c0_2, %c0_3] : memref<512x128xf32, #tpu.memory_space<vmem>>, vector<512x128xf32>
    %cst_4 = arith.constant dense<0.000000e+00> : vector<1x128xf32>
    %3 = tpu.matmul %1, %2, %cst_4 {dimension_numbers = #tpu.dot_dimension_numbers<[1], [0], [0], [1], [0, 0, 1, 1], [], []>, precision = #tpu.contract_precision<fp32>} : vector<1x512xf32>, vector<512x128xf32>, vector<1x128xf32> -> vector<1x128xf32>
    %c0_5 = arith.constant 0 : index
    %c0_6 = arith.constant 0 : index
    %4 = vector.load %arg4[%c0_5, %c0_6] : memref<1x128xf32, #tpu.memory_space<vmem>>, vector<1x128xf32>
    %5 = arith.addf %3, %4 : vector<1x128xf32>
    %cst_7 = arith.constant 0.000000e+00 : f32
    %6 = vector.broadcast %cst_7 : f32 to vector<1x128xf32>
    %7 = arith.maximumf %5, %6 : vector<1x128xf32>
    %c0_8 = arith.constant 0 : index
    %c0_9 = arith.constant 0 : index
    %8 = vector.load %arg5[%c0_8, %c0_9] : memref<128x64xf32, #tpu.memory_space<vmem>>, vector<128x64xf32>
    %cst_10 = arith.constant dense<0.000000e+00> : vector<1x64xf32>
    %9 = tpu.matmul %7, %8, %cst_10 {dimension_numbers = #tpu.dot_dimension_numbers<[1], [0], [0], [1], [0, 0, 1, 1], [], []>, precision = #tpu.contract_precision<fp32>} : vector<1x128xf32>, vector<128x64xf32>, vector<1x64xf32> -> vector<1x64xf32>
    %c0_11 = arith.constant 0 : index
    %c0_12 = arith.constant 0 : index
    %10 = vector.load %arg6[%c0_11, %c0_12] : memref<1x64xf32, #tpu.memory_space<vmem>>, vector<1x64xf32>
    %11 = arith.addf %9, %10 : vector<1x64xf32>
    %cst_13 = arith.constant 0.000000e+00 : f32
    %12 = vector.broadcast %cst_13 : f32 to vector<1x64xf32>
    %13 = arith.maximumf %11, %12 : vector<1x64xf32>
    %c0_14 = arith.constant 0 : index
    %c0_15 = arith.constant 0 : index
    %14 = vector.load %arg7[%c0_14, %c0_15] : memref<64x32xf32, #tpu.memory_space<vmem>>, vector<64x32xf32>
    %cst_16 = arith.constant dense<0.000000e+00> : vector<1x32xf32>
    %15 = tpu.matmul %13, %14, %cst_16 {dimension_numbers = #tpu.dot_dimension_numbers<[1], [0], [0], [1], [0, 0, 1, 1], [], []>, precision = #tpu.contract_precision<fp32>} : vector<1x64xf32>, vector<64x32xf32>, vector<1x32xf32> -> vector<1x32xf32>
    %c0_17 = arith.constant 0 : index
    %c0_18 = arith.constant 0 : index
    %16 = vector.load %arg8[%c0_17, %c0_18] : memref<1x32xf32, #tpu.memory_space<vmem>>, vector<1x32xf32>
    %17 = arith.addf %15, %16 : vector<1x32xf32>
    %cst_19 = arith.constant 0.000000e+00 : f32
    %18 = vector.broadcast %cst_19 : f32 to vector<1x32xf32>
    %19 = arith.maximumf %17, %18 : vector<1x32xf32>
    %c0_20 = arith.constant 0 : index
    %c0_21 = arith.constant 0 : index
    %20 = vector.load %arg9[%c0_20, %c0_21] : memref<32x8xf32, #tpu.memory_space<vmem>>, vector<32x8xf32>
    %cst_22 = arith.constant dense<0.000000e+00> : vector<1x8xf32>
    %21 = tpu.matmul %19, %20, %cst_22 {dimension_numbers = #tpu.dot_dimension_numbers<[1], [0], [0], [1], [0, 0, 1, 1], [], []>, precision = #tpu.contract_precision<fp32>} : vector<1x32xf32>, vector<32x8xf32>, vector<1x8xf32> -> vector<1x8xf32>
    %c0_23 = arith.constant 0 : index
    %c0_24 = arith.constant 0 : index
    %22 = vector.load %arg10[%c0_23, %c0_24] : memref<1x8xf32, #tpu.memory_space<vmem>>, vector<1x8xf32>
    %23 = arith.addf %21, %22 : vector<1x8xf32>
    %24 = arith.negf %23 : vector<1x8xf32>
    %25 = math.exp %24 : vector<1x8xf32>
    %cst_25 = arith.constant 1.000000e+00 : f32
    %26 = vector.broadcast %cst_25 : f32 to vector<1x8xf32>
    %27 = arith.addf %26, %25 : vector<1x8xf32>
    %28 = arith.divf %26, %27 : vector<1x8xf32>
    %29 = vector.shape_cast %28 : vector<1x8xf32> to vector<1x1x8xf32>
    %c0_26 = arith.constant 0 : index
    %c0_27 = arith.constant 0 : index
    %c0_28 = arith.constant 0 : index
    %30 = vector.load %arg11[%c0_26, %c0_27, %c0_28] : memref<1x1x8xf32, #tpu.memory_space<vmem>>, vector<1x1x8xf32>
    tpu.vector_store %arg11[%c0_26, %c0_27, %c0_28], %29 {strides = array<i32>} : memref<1x1x8xf32, #tpu.memory_space<vmem>>, vector<1x1x8xf32>,
    return
  }
  func.func @transform_0(%arg0: i32, %arg1: i32) -> (i32, i32, i32) {
    %c0_i32 = arith.constant 0 : i32
    %c0_i32_0 = arith.constant 0 : i32
    return %arg0, %c0_i32, %arg1 : i32, i32, i32
  }
  func.func @transform_1(%arg0: i32, %arg1: i32) -> (i32, i32) {
    %c0_i32 = arith.constant 0 : i32
    %c0_i32_0 = arith.constant 0 : i32
    %c0_i32_1 = arith.constant 0 : i32
    return %c0_i32, %c0_i32_0 : i32, i32
  }
  func.func @transform_2(%arg0: i32, %arg1: i32) -> (i32, i32) {
    %c0_i32 = arith.constant 0 : i32
    %c0_i32_0 = arith.constant 0 : i32
    %c0_i32_1 = arith.constant 0 : i32
    return %c0_i32, %c0_i32_0 : i32, i32
  }
  func.func @transform_3(%arg0: i32, %arg1: i32) -> (i32, i32) {
    %c0_i32 = arith.constant 0 : i32
    %c0_i32_0 = arith.constant 0 : i32
    %c0_i32_1 = arith.constant 0 : i32
    return %c0_i32, %c0_i32_0 : i32, i32
  }
  func.func @transform_4(%arg0: i32, %arg1: i32) -> (i32, i32) {
    %c0_i32 = arith.constant 0 : i32
    %c0_i32_0 = arith.constant 0 : i32
    %c0_i32_1 = arith.constant 0 : i32
    return %c0_i32, %c0_i32_0 : i32, i32
  }
  func.func @transform_5(%arg0: i32, %arg1: i32) -> (i32, i32) {
    %c0_i32 = arith.constant 0 : i32
    %c0_i32_0 = arith.constant 0 : i32
    %c0_i32_1 = arith.constant 0 : i32
    return %c0_i32, %c0_i32_0 : i32, i32
  }
  func.func @transform_6(%arg0: i32, %arg1: i32) -> (i32, i32) {
    %c0_i32 = arith.constant 0 : i32
    %c0_i32_0 = arith.constant 0 : i32
    %c0_i32_1 = arith.constant 0 : i32
    return %c0_i32, %c0_i32_0 : i32, i32
  }
  func.func @transform_7(%arg0: i32, %arg1: i32) -> (i32, i32) {
    %c0_i32 = arith.constant 0 : i32
    %c0_i32_0 = arith.constant 0 : i32
    %c0_i32_1 = arith.constant 0 : i32
    return %c0_i32, %c0_i32_0 : i32, i32
  }
  func.func @transform_8(%arg0: i32, %arg1: i32) -> (i32, i32) {
    %c0_i32 = arith.constant 0 : i32
    %c0_i32_0 = arith.constant 0 : i32
    %c0_i32_1 = arith.constant 0 : i32
    return %c0_i32, %c0_i32_0 : i32, i32
  }
  func.func @transform_9(%arg0: i32, %arg1: i32) -> (i32, i32, i32) {
    %c0_i32 = arith.constant 0 : i32
    %c0_i32_0 = arith.constant 0 : i32
    %c0_i32_1 = arith.constant 0 : i32
    return %arg0, %c0_i32, %c0_i32_0 : i32, i32, i32
  }
}

</mosaic_0001>

<llo_original>
// kernel: tpu_custom_call.1
$region0: #{tpu_custom_call.1}
  #allocation0 [shape = 'u32[]', space=smem, size = 0x4, offset = 0x4, fixed_abs, tag = 'smem constant byte address 0x4 - core index']
  #allocation1 [shape = 'u32[144,128]{1,0:T(1,128)}', space=vmem, size = 0x12000, scoped, tag = 'internal scratch']
  #allocation2 [shape = 'f32[1,512,128]{2,1,0:T(8,128)}', space=vmem, size = 0x40000, scoped, tag = 'scratch operand']
  %s0 = inlined_call_operand.vmem [shape: f32[2,512,16], index: 0, kind: input, shape index: {}]
  %s1 = inlined_call_operand.vmem [shape: f32[512,128], index: 1, kind: input, shape index: {}]
  %s2 = inlined_call_operand.vmem [shape: f32[1,128], index: 2, kind: input, shape index: {}]
  %s3 = inlined_call_operand.vmem [shape: f32[128,64], index: 3, kind: input, shape index: {}]
  %s4 = inlined_call_operand.vmem [shape: f32[1,64], index: 4, kind: input, shape index: {}]
  %s5 = inlined_call_operand.vmem [shape: f32[64,32], index: 5, kind: input, shape index: {}]
  %s6 = inlined_call_operand.vmem [shape: f32[1,32], index: 6, kind: input, shape index: {}]
  %s7 = inlined_call_operand.vmem [shape: f32[32,8], index: 7, kind: input, shape index: {}]
  %s8 = inlined_call_operand.vmem [shape: f32[1,8], index: 8, kind: input, shape index: {}]
  %s9 = inlined_call_operand.hbm [shape: f32[2,1,8], index: 9, kind: output, shape index: {}]
  %s10 = sld [smem:[#allocation0]]
  $region69: #{tpu_custom_call.1} parent=0
    _
  %s12 = ssub.s32 1, %s10
  %s13 = scalar_select 0, %s12, %s10
  $region1: #{tpu_custom_call.1} parent=0
    #allocation3 [shape = 'u8[1024]{0}', space=vmem, size = 0x400, scoped, tag = 'output window, operand 0']
    #allocation4 [shape = 's32[2]{0}', space=sflag, size = 0x8, scoped, tag = 'scoped memory for tpu_custom_call.1']
    %14 = vsyncpa [#allocation4], 0
    %s15 = scalar_lea.sflag [#allocation4], 1
    %16 = vsyncpa %s15, 0
    loop: start=0, step=1, limit=4
    $region2: #{tpu_custom_call.1} parent=1 // loop_pre_header
      _
    $region3: #{tpu_custom_call.1} parent=1 // loop_header
      %s18 = sphi 0, %s22
      %p19 = scmp.ge.s32.totalorder %s18, 4
      %s25 = sphi 0, %s37
      %s26 = sphi 0, %s33
      %s27 = sphi 0, %s25
      %s28 = sphi 0, %s26
      %s29 = sphi 0, %s27
      %s30 = sphi 0, %s28
      %s42 = sphi 0, %s44
      %s45 = sphi 0, %s42
      %s46 = sphi 0, %s45
      %s62 = sphi 0, %s46
      %s66 = sphi 0, %s66
      %s68 = sphi 0, %s66
      %s69 = sphi 0, %s68
      %s83 = sphi 0, %s69
      %s87 = sphi 0, %s87
      %s89 = sphi 0, %s87
      %s90 = sphi 0, %s89
      %s104 = sphi 0, %s90
      %s108 = sphi 0, %s108
      %s110 = sphi 0, %s108
      %s111 = sphi 0, %s110
      %s125 = sphi 0, %s111
      %s129 = sphi 0, %s129
      %s131 = sphi 0, %s129
      %s132 = sphi 0, %s131
      %s146 = sphi 0, %s132
      %s150 = sphi 0, %s150
      %s152 = sphi 0, %s150
      %s153 = sphi 0, %s152
      %s167 = sphi 0, %s153
      %s171 = sphi 0, %s171
      %s173 = sphi 0, %s171
      %s174 = sphi 0, %s173
      %s188 = sphi 0, %s174
      %s192 = sphi 0, %s192
      %s194 = sphi 0, %s192
      %s195 = sphi 0, %s194
      %s209 = sphi 0, %s195
      %s213 = sphi 0, %s213
      %s215 = sphi 0, %s213
      %s216 = sphi 0, %s215
      %s230 = sphi 0, %s216
      %s236 = sphi 0, %s238
      %s239 = sphi 0, %s236
      %s240 = sphi 0, %s239
      %s256 = sphi 0, %s240
    $region4: #{tpu_custom_call.1} parent=1 // loop_header_branch
      %21 = sbr.rel (%p19) target = $region8
    $region5: #{tpu_custom_call.1} parent=1 // loop_body
      %s23 = ssub.s32 %s18, 1
      %s24 = ssub.s32 %s18, 2
      %s31 = sadd.s32 1, %s26
      %p32 = scmp.ge.s32.totalorder %s31, 1
      %s33 = scalar_select %p32, 0, %s31
      %s34 = sadd.s32 1, %s25
      %s35 = scalar_select %p32, %s34, %s25
      %p36 = scmp.ge.s32.totalorder %s35, 2
      %s37 = scalar_select %p36, 0, %s35
      %s38 = ssub.s32 %s25, %s37
      %s39 = ssub.s32 %s26, %s33
      %s40 = sor.u32 %s38, %s39
      %p41 = scmp.eq.s32.totalorder %s40, 0
      %s43 = sadd.s32 %s42, 1
      %s44 = scalar_select %p41, %s42, %s43
      %p47 = pneg %p41
      %p48 = scmp.eq.s32.totalorder %s18, 1
      %p49 = por %p47, %p48
      %p50 = scmp.ne.s32.totalorder %s42, %s45
      %p51 = scmp.eq.s32.totalorder %s18, 0
      %p52 = por %p50, %p51
      %p53 = scmp.ne.s32.totalorder %s42, %s45
      %p54 = scmp.eq.s32.totalorder %s23, 1
      %p55 = por %p53, %p54
      %p56 = scmp.ne.s32.totalorder %s45, %s46
      %p57 = scmp.eq.s32.totalorder %s23, 0
      %p58 = por %p56, %p57
      %p59 = scmp.ne.s32.totalorder %s45, %s46
      %p60 = scmp.eq.s32.totalorder %s24, 1
      %p61 = por %p59, %p60
      %p63 = scmp.ne.s32.totalorder %s46, %s62
      %p64 = scmp.eq.s32.totalorder %s24, 0
      %p65 = por %p63, %p64
      %s67 = sadd.s32 %s66, 1
      %p70 = scmp.eq.s32.totalorder %s18, 1
      %p71 = scmp.ne.s32.totalorder %s66, %s68
      %p72 = scmp.eq.s32.totalorder %s18, 0
      %p73 = por %p71, %p72
      %p74 = scmp.ne.s32.totalorder %s66, %s68
      %p75 = scmp.eq.s32.totalorder %s23, 1
      %p76 = por %p74, %p75
      %p77 = scmp.ne.s32.totalorder %s68, %s69
      %p78 = scmp.eq.s32.totalorder %s23, 0
      %p79 = por %p77, %p78
      %p80 = scmp.ne.s32.totalorder %s68, %s69
      %p81 = scmp.eq.s32.totalorder %s24, 1
      %p82 = por %p80, %p81
      %p84 = scmp.ne.s32.totalorder %s69, %s83
      %p85 = scmp.eq.s32.totalorder %s24, 0
      %p86 = por %p84, %p85
      %s88 = sadd.s32 %s87, 1
      %p91 = scmp.eq.s32.totalorder %s18, 1
      %p92 = scmp.ne.s32.totalorder %s87, %s89
      %p93 = scmp.eq.s32.totalorder %s18, 0
      %p94 = por %p92, %p93
      %p95 = scmp.ne.s32.totalorder %s87, %s89
      %p96 = scmp.eq.s32.totalorder %s23, 1
      %p97 = por %p95, %p96
      %p98 = scmp.ne.s32.totalorder %s89, %s90
      %p99 = scmp.eq.s32.totalorder %s23, 0
      %p100 = por %p98, %p99
      %p101 = scmp.ne.s32.totalorder %s89, %s90
      %p102 = scmp.eq.s32.totalorder %s24, 1
      %p103 = por %p101, %p102
      %p105 = scmp.ne.s32.totalorder %s90, %s104
      %p106 = scmp.eq.s32.totalorder %s24, 0
      %p107 = por %p105, %p106
      %s109 = sadd.s32 %s108, 1
      %p112 = scmp.eq.s32.totalorder %s18, 1
      %p113 = scmp.ne.s32.totalorder %s108, %s110
      %p114 = scmp.eq.s32.totalorder %s18, 0
      %p115 = por %p113, %p114
      %p116 = scmp.ne.s32.totalorder %s108, %s110
      %p117 = scmp.eq.s32.totalorder %s23, 1
      %p118 = por %p116, %p117
      %p119 = scmp.ne.s32.totalorder %s110, %s111
      %p120 = scmp.eq.s32.totalorder %s23, 0
      %p121 = por %p119, %p120
      %p122 = scmp.ne.s32.totalorder %s110, %s111
      %p123 = scmp.eq.s32.totalorder %s24, 1
      %p124 = por %p122, %p123
      %p126 = scmp.ne.s32.totalorder %s111, %s125
      %p127 = scmp.eq.s32.totalorder %s24, 0
      %p128 = por %p126, %p127
      %s130 = sadd.s32 %s129, 1
      %p133 = scmp.eq.s32.totalorder %s18, 1
      %p134 = scmp.ne.s32.totalorder %s129, %s131
      %p135 = scmp.eq.s32.totalorder %s18, 0
      %p136 = por %p134, %p135
      %p137 = scmp.ne.s32.totalorder %s129, %s131
      %p138 = scmp.eq.s32.totalorder %s23, 1
      %p139 = por %p137, %p138
      %p140 = scmp.ne.s32.totalorder %s131, %s132
      %p141 = scmp.eq.s32.totalorder %s23, 0
      %p142 = por %p140, %p141
      %p143 = scmp.ne.s32.totalorder %s131, %s132
      %p144 = scmp.eq.s32.totalorder %s24, 1
      %p145 = por %p143, %p144
      %p147 = scmp.ne.s32.totalorder %s132, %s146
      %p148 = scmp.eq.s32.totalorder %s24, 0
      %p149 = por %p147, %p148
      %s151 = sadd.s32 %s150, 1
      %p154 = scmp.eq.s32.totalorder %s18, 1
      %p155 = scmp.ne.s32.totalorder %s150, %s152
      %p156 = scmp.eq.s32.totalorder %s18, 0
      %p157 = por %p155, %p156
      %p158 = scmp.ne.s32.totalorder %s150, %s152
      %p159 = scmp.eq.s32.totalorder %s23, 1
      %p160 = por %p158, %p159
      %p161 = scmp.ne.s32.totalorder %s152, %s153
      %p162 = scmp.eq.s32.totalorder %s23, 0
      %p163 = por %p161, %p162
      %p164 = scmp.ne.s32.totalorder %s152, %s153
      %p165 = scmp.eq.s32.totalorder %s24, 1
      %p166 = por %p164, %p165
      %p168 = scmp.ne.s32.totalorder %s153, %s167
      %p169 = scmp.eq.s32.totalorder %s24, 0
      %p170 = por %p168, %p169
      %s172 = sadd.s32 %s171, 1
      %p175 = scmp.eq.s32.totalorder %s18, 1
      %p176 = scmp.ne.s32.totalorder %s171, %s173
      %p177 = scmp.eq.s32.totalorder %s18, 0
      %p178 = por %p176, %p177
      %p179 = scmp.ne.s32.totalorder %s171, %s173
      %p180 = scmp.eq.s32.totalorder %s23, 1
      %p181 = por %p179, %p180
      %p182 = scmp.ne.s32.totalorder %s173, %s174
      %p183 = scmp.eq.s32.totalorder %s23, 0
      %p184 = por %p182, %p183
      %p185 = scmp.ne.s32.totalorder %s173, %s174
      %p186 = scmp.eq.s32.totalorder %s24, 1
      %p187 = por %p185, %p186
      %p189 = scmp.ne.s32.totalorder %s174, %s188
      %p190 = scmp.eq.s32.totalorder %s24, 0
      %p191 = por %p189, %p190
      %s193 = sadd.s32 %s192, 1
      %p196 = scmp.eq.s32.totalorder %s18, 1
      %p197 = scmp.ne.s32.totalorder %s192, %s194
      %p198 = scmp.eq.s32.totalorder %s18, 0
      %p199 = por %p197, %p198
      %p200 = scmp.ne.s32.totalorder %s192, %s194
      %p201 = scmp.eq.s32.totalorder %s23, 1
      %p202 = por %p200, %p201
      %p203 = scmp.ne.s32.totalorder %s194, %s195
      %p204 = scmp.eq.s32.totalorder %s23, 0
      %p205 = por %p203, %p204
      %p206 = scmp.ne.s32.totalorder %s194, %s195
      %p207 = scmp.eq.s32.totalorder %s24, 1
      %p208 = por %p206, %p207
      %p210 = scmp.ne.s32.totalorder %s195, %s209
      %p211 = scmp.eq.s32.totalorder %s24, 0
      %p212 = por %p210, %p211
      %s214 = sadd.s32 %s213, 1
      %p217 = scmp.eq.s32.totalorder %s18, 1
      %p218 = scmp.ne.s32.totalorder %s213, %s215
      %p219 = scmp.eq.s32.totalorder %s18, 0
      %p220 = por %p218, %p219
      %p221 = scmp.ne.s32.totalorder %s213, %s215
      %p222 = scmp.eq.s32.totalorder %s23, 1
      %p223 = por %p221, %p222
      %p224 = scmp.ne.s32.totalorder %s215, %s216
      %p225 = scmp.eq.s32.totalorder %s23, 0
      %p226 = por %p224, %p225
      %p227 = scmp.ne.s32.totalorder %s215, %s216
      %p228 = scmp.eq.s32.totalorder %s24, 1
      %p229 = por %p227, %p228
      %p231 = scmp.ne.s32.totalorder %s216, %s230
      %p232 = scmp.eq.s32.totalorder %s24, 0
      %p233 = por %p231, %p232
      %s234 = ssub.s32 %s25, %s37
      %p235 = scmp.eq.s32.totalorder %s234, 0
      %s237 = sadd.s32 %s236, 1
      %s238 = scalar_select %p235, %s236, %s237
      %p241 = pneg %p235
      %p242 = scmp.eq.s32.totalorder %s18, 1
      %p243 = por %p241, %p242
      %p244 = scmp.ne.s32.totalorder %s236, %s239
      %p245 = scmp.eq.s32.totalorder %s18, 0
      %p246 = por %p244, %p245
      %p247 = scmp.ne.s32.totalorder %s236, %s239
      %p248 = scmp.eq.s32.totalorder %s23, 1
      %p249 = por %p247, %p248
      %p250 = scmp.ne.s32.totalorder %s239, %s240
      %p251 = scmp.eq.s32.totalorder %s23, 0
      %p252 = por %p250, %p251
      %p253 = scmp.ne.s32.totalorder %s239, %s240
      %p254 = scmp.eq.s32.totalorder %s24, 1
      %p255 = por %p253, %p254
      %p257 = scmp.ne.s32.totalorder %s240, %s256
      %p258 = scmp.eq.s32.totalorder %s24, 0
      %p259 = por %p257, %p258
      %p260 = scmp.le.s32.totalorder 1, %s18
      %p261 = scmp.lt.s32.totalorder %s18, 3
      %p262 = pnand %p260, %p261
      %p263 = pneg %p262
      // Predicated region
      $region9: #{tpu_custom_call.1} parent=5 // pred_check
        _
      $region10: #{tpu_custom_call.1} parent=5 // pred_check_branch
        %265 = sbr.rel (%p262) target = $region12
      $region11: #{tpu_custom_call.1} parent=5 // pred_region
        %s266 = ssub.s32 %s18, 1
        // Predicated region
        $region13: #{tpu_custom_call.1} parent=11 // pred_check
          %p267 = pneg %p79
        $region14: #{tpu_custom_call.1} parent=11 // pred_check_branch
          %269 = sbr.rel (%p267) target = $region16
        $region15: #{tpu_custom_call.1} parent=11 // pred_region
          _
        $region16: #{tpu_custom_call.1} parent=11 // pred_fallthru
          _
        // Predicated region
        $region17: #{tpu_custom_call.1} parent=11 // pred_check
          %p270 = pneg %p100
        $region18: #{tpu_custom_call.1} parent=11 // pred_check_branch
          %272 = sbr.rel (%p270) target = $region20
        $region19: #{tpu_custom_call.1} parent=11 // pred_region
          _
        $region20: #{tpu_custom_call.1} parent=11 // pred_fallthru
          _
        // Predicated region
        $region21: #{tpu_custom_call.1} parent=11 // pred_check
          %p273 = pneg %p121
        $region22: #{tpu_custom_call.1} parent=11 // pred_check_branch
          %275 = sbr.rel (%p273) target = $region24
        $region23: #{tpu_custom_call.1} parent=11 // pred_region
          _
        $region24: #{tpu_custom_call.1} parent=11 // pred_fallthru
          _
        // Predicated region
        $region25: #{tpu_custom_call.1} parent=11 // pred_check
          %p276 = pneg %p142
        $region26: #{tpu_custom_call.1} parent=11 // pred_check_branch
          %278 = sbr.rel (%p276) target = $region28
        $region27: #{tpu_custom_call.1} parent=11 // pred_region
          _
        $region28: #{tpu_custom_call.1} parent=11 // pred_fallthru
          _
        // Predicated region
        $region29: #{tpu_custom_call.1} parent=11 // pred_check
          %p279 = pneg %p163
        $region30: #{tpu_custom_call.1} parent=11 // pred_check_branch
          %281 = sbr.rel (%p279) target = $region32
        $region31: #{tpu_custom_call.1} parent=11 // pred_region
          _
        $region32: #{tpu_custom_call.1} parent=11 // pred_fallthru
          _
        // Predicated region
        $region33: #{tpu_custom_call.1} parent=11 // pred_check
          %p282 = pneg %p184
        $region34: #{tpu_custom_call.1} parent=11 // pred_check_branch
          %284 = sbr.rel (%p282) target = $region36
        $region35: #{tpu_custom_call.1} parent=11 // pred_region
          _
        $region36: #{tpu_custom_call.1} parent=11 // pred_fallthru
          _
        // Predicated region
        $region37: #{tpu_custom_call.1} parent=11 // pred_check
          %p285 = pneg %p205
        $region38: #{tpu_custom_call.1} parent=11 // pred_check_branch
          %287 = sbr.rel (%p285) target = $region40
        $region39: #{tpu_custom_call.1} parent=11 // pred_region
          _
        $region40: #{tpu_custom_call.1} parent=11 // pred_fallthru
          _
        // Predicated region
        $region41: #{tpu_custom_call.1} parent=11 // pred_check
          %p288 = pneg %p226
        $region42: #{tpu_custom_call.1} parent=11 // pred_check_branch
          %290 = sbr.rel (%p288) target = $region44
        $region43: #{tpu_custom_call.1} parent=11 // pred_region
          _
        $region44: #{tpu_custom_call.1} parent=11 // pred_fallthru
          _
      $region12: #{tpu_custom_call.1} parent=5 // pred_fallthru
        _
      %p291 = scmp.lt.s32.totalorder %s18, 2
      // Predicated region
      $region45: #{tpu_custom_call.1} parent=5 // pred_check
        %p292 = pneg %p291
      $region46: #{tpu_custom_call.1} parent=5 // pred_check_branch
        %294 = sbr.rel (%p292) target = $region48
      $region47: #{tpu_custom_call.1} parent=5 // pred_region
        // Predicated region
        $region49: #{tpu_custom_call.1} parent=47 // pred_check
          %p295 = pneg %p52
        $region50: #{tpu_custom_call.1} parent=47 // pred_check_branch
          %297 = sbr.rel (%p295) target = $region52
        $region51: #{tpu_custom_call.1} parent=47 // pred_region
          %p298 = scmp.lt.s32.totalorder %s25, 1
          %s299 = scalar_select %p298, %s25, 1
          %p300 = scmp.lt.s32.totalorder %s26, 0
          %s301 = scalar_select %p300, %s26, 0
          %s302 = smul.addr %s299, 64
          %s303 = sadd.s32 %s301, %s302
          %s304 = smul.addr %s303, 8
          %s305 = scalar_lea.vmem %s0, %s304
        $region52: #{tpu_custom_call.1} parent=47 // pred_fallthru
          _
      $region48: #{tpu_custom_call.1} parent=5 // pred_fallthru
        _
      %p306 = scmp.le.s32.totalorder 1, %s18
      %p307 = scmp.lt.s32.totalorder %s18, 3
      %p308 = pnand %p306, %p307
      %p309 = pneg %p308
      // Predicated region
      $region53: #{tpu_custom_call.1} parent=5 // pred_check
        _
      $region54: #{tpu_custom_call.1} parent=5 // pred_check_branch
        %311 = sbr.rel (%p308) target = $region56
      $region55: #{tpu_custom_call.1} parent=5 // pred_region
        %s312 = ssub.s32 %s18, 1
        %p313 = scmp.lt.s32.totalorder %s27, 1
        %s314 = scalar_select %p313, %s27, 1
        %p315 = scmp.lt.s32.totalorder %s28, 0
        %s316 = scalar_select %p315, %s28, 0
        %s317 = smul.addr %s314, 64
        %s318 = sadd.s32 %s316, %s317
        %s319 = smul.addr %s318, 8
        %s320 = scalar_lea.vmem %s0, %s319
        %p321 = pneg %p58
        %p322 = pneg %p55
        %p323 = pneg %p79
        %p324 = pneg %p76
        %p325 = pneg %p100
        %p326 = pneg %p97
        %p327 = pneg %p121
        %p328 = pneg %p118
        %p329 = pneg %p142
        %p330 = pneg %p139
        %p331 = pneg %p163
        %p332 = pneg %p160
        %p333 = pneg %p184
        %p334 = pneg %p181
        %p335 = pneg %p205
        %p336 = pneg %p202
        %p337 = pneg %p226
        %p338 = pneg %p223
        %p339 = pneg %p252
        %p340 = pneg %p249
        %s341 = sand.u32 %s239, 1
        %s342 = scalar_lea.sflag [#allocation4], %s341
        %s343 = sand.u32 %s239, 1
        %s344 = scalar_lea.vmem [#allocation3], %s343
        %p345 = scmp.lt.s32.totalorder %s27, 1
        %s346 = scalar_select %p345, %s27, 1
        %p347 = scmp.lt.s32.totalorder %s28, 0
        %s348 = scalar_select %p347, %s28, 0
        %s349 = smul.addr %s346, 64
        %s350 = sadd.s32 %s348, %s349
        %s351 = smul.addr %s350, 8
        %s352 = scalar_lea.vmem %s0, %s351
        %v353 = vld [vmem:[%s352] sm:$0xff]
        %v354 = vld [vmem:[%s352 + $0x8] sm:$0xff]
        %v355 = vld [vmem:[%s352 + $0x10] sm:$0xff]
        %v356 = vld [vmem:[%s352 + $0x18] sm:$0xff]
        %v357 = vld [vmem:[%s352 + $0x20] sm:$0xff]
        %v358 = vld [vmem:[%s352 + $0x28] sm:$0xff]
        %v359 = vld [vmem:[%s352 + $0x30] sm:$0xff]
        %v360 = vld [vmem:[%s352 + $0x38] sm:$0xff]
        %v361 = vld [vmem:[%s352 + $0x40] sm:$0xff]
        %v362 = vld [vmem:[%s352 + $0x48] sm:$0xff]
        %v363 = vld [vmem:[%s352 + $0x50] sm:$0xff]
        %v364 = vld [vmem:[%s352 + $0x58] sm:$0xff]
        %v365 = vld [vmem:[%s352 + $0x60] sm:$0xff]
        %v366 = vld [vmem:[%s352 + $0x68] sm:$0xff]
        %v367 = vld [vmem:[%s352 + $0x70] sm:$0xff]
        %v368 = vld [vmem:[%s352 + $0x78] sm:$0xff]
        %v369 = vld [vmem:[%s352 + $0x80] sm:$0xff]
        %v370 = vld [vmem:[%s352 + $0x88] sm:$0xff]
        %v371 = vld [vmem:[%s352 + $0x90] sm:$0xff]
        %v372 = vld [vmem:[%s352 + $0x98] sm:$0xff]
        %v373 = vld [vmem:[%s352 + $0xa0] sm:$0xff]
        %v374 = vld [vmem:[%s352 + $0xa8] sm:$0xff]
        %v375 = vld [vmem:[%s352 + $0xb0] sm:$0xff]
        %v376 = vld [vmem:[%s352 + $0xb8] sm:$0xff]
        %v377 = vld [vmem:[%s352 + $0xc0] sm:$0xff]
        %v378 = vld [vmem:[%s352 + $0xc8] sm:$0xff]
        %v379 = vld [vmem:[%s352 + $0xd0] sm:$0xff]
        %v380 = vld [vmem:[%s352 + $0xd8] sm:$0xff]
        %v381 = vld [vmem:[%s352 + $0xe0] sm:$0xff]
        %v382 = vld [vmem:[%s352 + $0xe8] sm:$0xff]
        %v383 = vld [vmem:[%s352 + $0xf0] sm:$0xff]
        %v384 = vld [vmem:[%s352 + $0xf8] sm:$0xff]
        %v385 = vld [vmem:[%s352 + $0x100] sm:$0xff]
        %v386 = vld [vmem:[%s352 + $0x108] sm:$0xff]
        %v387 = vld [vmem:[%s352 + $0x110] sm:$0xff]
        %v388 = vld [vmem:[%s352 + $0x118] sm:$0xff]
        %v389 = vld [vmem:[%s352 + $0x120] sm:$0xff]
        %v390 = vld [vmem:[%s352 + $0x128] sm:$0xff]
        %v391 = vld [vmem:[%s352 + $0x130] sm:$0xff]
        %v392 = vld [vmem:[%s352 + $0x138] sm:$0xff]
        %v393 = vld [vmem:[%s352 + $0x140] sm:$0xff]
        %v394 = vld [vmem:[%s352 + $0x148] sm:$0xff]
        %v395 = vld [vmem:[%s352 + $0x150] sm:$0xff]
        %v396 = vld [vmem:[%s352 + $0x158] sm:$0xff]
        %v397 = vld [vmem:[%s352 + $0x160] sm:$0xff]
        %v398 = vld [vmem:[%s352 + $0x168] sm:$0xff]
        %v399 = vld [vmem:[%s352 + $0x170] sm:$0xff]
        %v400 = vld [vmem:[%s352 + $0x178] sm:$0xff]
        %v401 = vld [vmem:[%s352 + $0x180] sm:$0xff]
        %v402 = vld [vmem:[%s352 + $0x188] sm:$0xff]
        %v403 = vld [vmem:[%s352 + $0x190] sm:$0xff]
        %v404 = vld [vmem:[%s352 + $0x198] sm:$0xff]
        %v405 = vld [vmem:[%s352 + $0x1a0] sm:$0xff]
        %v406 = vld [vmem:[%s352 + $0x1a8] sm:$0xff]
        %v407 = vld [vmem:[%s352 + $0x1b0] sm:$0xff]
        %v408 = vld [vmem:[%s352 + $0x1b8] sm:$0xff]
        %v409 = vld [vmem:[%s352 + $0x1c0] sm:$0xff]
        %v410 = vld [vmem:[%s352 + $0x1c8] sm:$0xff]
        %v411 = vld [vmem:[%s352 + $0x1d0] sm:$0xff]
        %v412 = vld [vmem:[%s352 + $0x1d8] sm:$0xff]
        %v413 = vld [vmem:[%s352 + $0x1e0] sm:$0xff]
        %v414 = vld [vmem:[%s352 + $0x1e8] sm:$0xff]
        %v415 = vld [vmem:[%s352 + $0x1f0] sm:$0xff]
        %v416 = vld [vmem:[%s352 + $0x1f8] sm:$0xff]
        %vm417 = vcmask 130048
        %v418 = vsel %vm417, %v353, 0.0
        %419 = vadd.xlane.f32.xlu0 %v418
        %v420 = vpop.xlane.xlu0 %419
        %v421 = vsel %vm417, %v354, 0.0
        %422 = vadd.xlane.f32.xlu0 %v421
        %v423 = vpop.xlane.xlu0 %422
        %v424 = vsel %vm417, %v355, 0.0
        %425 = vadd.xlane.f32.xlu0 %v424
        %v426 = vpop.xlane.xlu0 %425
        %v427 = vsel %vm417, %v356, 0.0
        %428 = vadd.xlane.f32.xlu0 %v427
        %v429 = vpop.xlane.xlu0 %428
        %v430 = vsel %vm417, %v357, 0.0
        %431 = vadd.xlane.f32.xlu0 %v430
        %v432 = vpop.xlane.xlu0 %431
        %v433 = vsel %vm417, %v358, 0.0
        %434 = vadd.xlane.f32.xlu0 %v433
        %v435 = vpop.xlane.xlu0 %434
        %v436 = vsel %vm417, %v359, 0.0
        %437 = vadd.xlane.f32.xlu0 %v436
        %v438 = vpop.xlane.xlu0 %437
        %v439 = vsel %vm417, %v360, 0.0
        %440 = vadd.xlane.f32.xlu0 %v439
        %v441 = vpop.xlane.xlu0 %440
        %v442 = vsel %vm417, %v361, 0.0
        %443 = vadd.xlane.f32.xlu0 %v442
        %v444 = vpop.xlane.xlu0 %443
        %v445 = vsel %vm417, %v362, 0.0
        %446 = vadd.xlane.f32.xlu0 %v445
        %v447 = vpop.xlane.xlu0 %446
        %v448 = vsel %vm417, %v363, 0.0
        %449 = vadd.xlane.f32.xlu0 %v448
        %v450 = vpop.xlane.xlu0 %449
        %v451 = vsel %vm417, %v364, 0.0
        %452 = vadd.xlane.f32.xlu0 %v451
        %v453 = vpop.xlane.xlu0 %452
        %v454 = vsel %vm417, %v365, 0.0
        %455 = vadd.xlane.f32.xlu0 %v454
        %v456 = vpop.xlane.xlu0 %455
        %v457 = vsel %vm417, %v366, 0.0
        %458 = vadd.xlane.f32.xlu0 %v457
        %v459 = vpop.xlane.xlu0 %458
        %v460 = vsel %vm417, %v367, 0.0
        %461 = vadd.xlane.f32.xlu0 %v460
        %v462 = vpop.xlane.xlu0 %461
        %v463 = vsel %vm417, %v368, 0.0
        %464 = vadd.xlane.f32.xlu0 %v463
        %v465 = vpop.xlane.xlu0 %464
        %v466 = vsel %vm417, %v369, 0.0
        %467 = vadd.xlane.f32.xlu0 %v466
        %v468 = vpop.xlane.xlu0 %467
        %v469 = vsel %vm417, %v370, 0.0
        %470 = vadd.xlane.f32.xlu0 %v469
        %v471 = vpop.xlane.xlu0 %470
        %v472 = vsel %vm417, %v371, 0.0
        %473 = vadd.xlane.f32.xlu0 %v472
        %v474 = vpop.xlane.xlu0 %473
        %v475 = vsel %vm417, %v372, 0.0
        %476 = vadd.xlane.f32.xlu0 %v475
        %v477 = vpop.xlane.xlu0 %476
        %v478 = vsel %vm417, %v373, 0.0
        %479 = vadd.xlane.f32.xlu0 %v478
        %v480 = vpop.xlane.xlu0 %479
        %v481 = vsel %vm417, %v374, 0.0
        %482 = vadd.xlane.f32.xlu0 %v481
        %v483 = vpop.xlane.xlu0 %482
        %v484 = vsel %vm417, %v375, 0.0
        %485 = vadd.xlane.f32.xlu0 %v484
        %v486 = vpop.xlane.xlu0 %485
        %v487 = vsel %vm417, %v376, 0.0
        %488 = vadd.xlane.f32.xlu0 %v487
        %v489 = vpop.xlane.xlu0 %488
        %v490 = vsel %vm417, %v377, 0.0
        %491 = vadd.xlane.f32.xlu0 %v490
        %v492 = vpop.xlane.xlu0 %491
        %v493 = vsel %vm417, %v378, 0.0
        %494 = vadd.xlane.f32.xlu0 %v493
        %v495 = vpop.xlane.xlu0 %494
        %v496 = vsel %vm417, %v379, 0.0
        %497 = vadd.xlane.f32.xlu0 %v496
        %v498 = vpop.xlane.xlu0 %497
        %v499 = vsel %vm417, %v380, 0.0
        %500 = vadd.xlane.f32.xlu0 %v499
        %v501 = vpop.xlane.xlu0 %500
        %v502 = vsel %vm417, %v381, 0.0
        %503 = vadd.xlane.f32.xlu0 %v502
        %v504 = vpop.xlane.xlu0 %503
        %v505 = vsel %vm417, %v382, 0.0
        %506 = vadd.xlane.f32.xlu0 %v505
        %v507 = vpop.xlane.xlu0 %506
        %v508 = vsel %vm417, %v383, 0.0
        %509 = vadd.xlane.f32.xlu0 %v508
        %v510 = vpop.xlane.xlu0 %509
        %v511 = vsel %vm417, %v384, 0.0
        %512 = vadd.xlane.f32.xlu0 %v511
        %v513 = vpop.xlane.xlu0 %512
        %v514 = vsel %vm417, %v385, 0.0
        %515 = vadd.xlane.f32.xlu0 %v514
        %v516 = vpop.xlane.xlu0 %515
        %v517 = vsel %vm417, %v386, 0.0
        %518 = vadd.xlane.f32.xlu0 %v517
        %v519 = vpop.xlane.xlu0 %518
        %v520 = vsel %vm417, %v387, 0.0
        %521 = vadd.xlane.f32.xlu0 %v520
        %v522 = vpop.xlane.xlu0 %521
        %v523 = vsel %vm417, %v388, 0.0
        %524 = vadd.xlane.f32.xlu0 %v523
        %v525 = vpop.xlane.xlu0 %524
        %v526 = vsel %vm417, %v389, 0.0
        %527 = vadd.xlane.f32.xlu0 %v526
        %v528 = vpop.xlane.xlu0 %527
        %v529 = vsel %vm417, %v390, 0.0
        %530 = vadd.xlane.f32.xlu0 %v529
        %v531 = vpop.xlane.xlu0 %530
        %v532 = vsel %vm417, %v391, 0.0
        %533 = vadd.xlane.f32.xlu0 %v532
        %v534 = vpop.xlane.xlu0 %533
        %v535 = vsel %vm417, %v392, 0.0
        %536 = vadd.xlane.f32.xlu0 %v535
        %v537 = vpop.xlane.xlu0 %536
        %v538 = vsel %vm417, %v393, 0.0
        %539 = vadd.xlane.f32.xlu0 %v538
        %v540 = vpop.xlane.xlu0 %539
        %v541 = vsel %vm417, %v394, 0.0
        %542 = vadd.xlane.f32.xlu0 %v541
        %v543 = vpop.xlane.xlu0 %542
        %v544 = vsel %vm417, %v395, 0.0
        %545 = vadd.xlane.f32.xlu0 %v544
        %v546 = vpop.xlane.xlu0 %545
        %v547 = vsel %vm417, %v396, 0.0
        %548 = vadd.xlane.f32.xlu0 %v547
        %v549 = vpop.xlane.xlu0 %548
        %v550 = vsel %vm417, %v397, 0.0
        %551 = vadd.xlane.f32.xlu0 %v550
        %v552 = vpop.xlane.xlu0 %551
        %v553 = vsel %vm417, %v398, 0.0
        %554 = vadd.xlane.f32.xlu0 %v553
        %v555 = vpop.xlane.xlu0 %554
        %v556 = vsel %vm417, %v399, 0.0
        %557 = vadd.xlane.f32.xlu0 %v556
        %v558 = vpop.xlane.xlu0 %557
        %v559 = vsel %vm417, %v400, 0.0
        %560 = vadd.xlane.f32.xlu0 %v559
        %v561 = vpop.xlane.xlu0 %560
        %v562 = vsel %vm417, %v401, 0.0
        %563 = vadd.xlane.f32.xlu0 %v562
        %v564 = vpop.xlane.xlu0 %563
        %v565 = vsel %vm417, %v402, 0.0
        %566 = vadd.xlane.f32.xlu0 %v565
        %v567 = vpop.xlane.xlu0 %566
        %v568 = vsel %vm417, %v403, 0.0
        %569 = vadd.xlane.f32.xlu0 %v568
        %v570 = vpop.xlane.xlu0 %569
        %v571 = vsel %vm417, %v404, 0.0
        %572 = vadd.xlane.f32.xlu0 %v571
        %v573 = vpop.xlane.xlu0 %572
        %v574 = vsel %vm417, %v405, 0.0
        %575 = vadd.xlane.f32.xlu0 %v574
        %v576 = vpop.xlane.xlu0 %575
        %v577 = vsel %vm417, %v406, 0.0
        %578 = vadd.xlane.f32.xlu0 %v577
        %v579 = vpop.xlane.xlu0 %578
        %v580 = vsel %vm417, %v407, 0.0
        %581 = vadd.xlane.f32.xlu0 %v580
        %v582 = vpop.xlane.xlu0 %581
        %v583 = vsel %vm417, %v408, 0.0
        %584 = vadd.xlane.f32.xlu0 %v583
        %v585 = vpop.xlane.xlu0 %584
        %v586 = vsel %vm417, %v409, 0.0
        %587 = vadd.xlane.f32.xlu0 %v586
        %v588 = vpop.xlane.xlu0 %587
        %v589 = vsel %vm417, %v410, 0.0
        %590 = vadd.xlane.f32.xlu0 %v589
        %v591 = vpop.xlane.xlu0 %590
        %v592 = vsel %vm417, %v411, 0.0
        %593 = vadd.xlane.f32.xlu0 %v592
        %v594 = vpop.xlane.xlu0 %593
        %v595 = vsel %vm417, %v412, 0.0
        %596 = vadd.xlane.f32.xlu0 %v595
        %v597 = vpop.xlane.xlu0 %596
        %v598 = vsel %vm417, %v413, 0.0
        %599 = vadd.xlane.f32.xlu0 %v598
        %v600 = vpop.xlane.xlu0 %599
        %v601 = vsel %vm417, %v414, 0.0
        %602 = vadd.xlane.f32.xlu0 %v601
        %v603 = vpop.xlane.xlu0 %602
        %v604 = vsel %vm417, %v415, 0.0
        %605 = vadd.xlane.f32.xlu0 %v604
        %v606 = vpop.xlane.xlu0 %605
        %v607 = vsel %vm417, %v416, 0.0
        %608 = vadd.xlane.f32.xlu0 %v607
        %v609 = vpop.xlane.xlu0 %608
        %v610 = vld [vmem:[%s1] sm:$0xff]
        %v611 = vld [vmem:[%s1 + $0x8] sm:$0xff]
        %v612 = vld [vmem:[%s1 + $0x10] sm:$0xff]
        %v613 = vld [vmem:[%s1 + $0x18] sm:$0xff]
        %v614 = vld [vmem:[%s1 + $0x20] sm:$0xff]
        %v615 = vld [vmem:[%s1 + $0x28] sm:$0xff]
        %v616 = vld [vmem:[%s1 + $0x30] sm:$0xff]
        %v617 = vld [vmem:[%s1 + $0x38] sm:$0xff]
        %v618 = vld [vmem:[%s1 + $0x40] sm:$0xff]
        %v619 = vld [vmem:[%s1 + $0x48] sm:$0xff]
        %v620 = vld [vmem:[%s1 + $0x50] sm:$0xff]
        %v621 = vld [vmem:[%s1 + $0x58] sm:$0xff]
        %v622 = vld [vmem:[%s1 + $0x60] sm:$0xff]
        %v623 = vld [vmem:[%s1 + $0x68] sm:$0xff]
        %v624 = vld [vmem:[%s1 + $0x70] sm:$0xff]
        %v625 = vld [vmem:[%s1 + $0x78] sm:$0xff]
        %v626 = vld [vmem:[%s1 + $0x80] sm:$0xff]
        %v627 = vld [vmem:[%s1 + $0x88] sm:$0xff]
        %v628 = vld [vmem:[%s1 + $0x90] sm:$0xff]
        %v629 = vld [vmem:[%s1 + $0x98] sm:$0xff]
        %v630 = vld [vmem:[%s1 + $0xa0] sm:$0xff]
        %v631 = vld [vmem:[%s1 + $0xa8] sm:$0xff]
        %v632 = vld [vmem:[%s1 + $0xb0] sm:$0xff]
        %v633 = vld [vmem:[%s1 + $0xb8] sm:$0xff]
        %v634 = vld [vmem:[%s1 + $0xc0] sm:$0xff]
        %v635 = vld [vmem:[%s1 + $0xc8] sm:$0xff]
        %v636 = vld [vmem:[%s1 + $0xd0] sm:$0xff]
        %v637 = vld [vmem:[%s1 + $0xd8] sm:$0xff]
        %v638 = vld [vmem:[%s1 + $0xe0] sm:$0xff]
        %v639 = vld [vmem:[%s1 + $0xe8] sm:$0xff]
        %v640 = vld [vmem:[%s1 + $0xf0] sm:$0xff]
        %v641 = vld [vmem:[%s1 + $0xf8] sm:$0xff]
        %v642 = vld [vmem:[%s1 + $0x100] sm:$0xff]
        %v643 = vld [vmem:[%s1 + $0x108] sm:$0xff]
        %v644 = vld [vmem:[%s1 + $0x110] sm:$0xff]
        %v645 = vld [vmem:[%s1 + $0x118] sm:$0xff]
        %v646 = vld [vmem:[%s1 + $0x120] sm:$0xff]
        %v647 = vld [vmem:[%s1 + $0x128] sm:$0xff]
        %v648 = vld [vmem:[%s1 + $0x130] sm:$0xff]
        %v649 = vld [vmem:[%s1 + $0x138] sm:$0xff]
        %v650 = vld [vmem:[%s1 + $0x140] sm:$0xff]
        %v651 = vld [vmem:[%s1 + $0x148] sm:$0xff]
        %v652 = vld [vmem:[%s1 + $0x150] sm:$0xff]
        %v653 = vld [vmem:[%s1 + $0x158] sm:$0xff]
        %v654 = vld [vmem:[%s1 + $0x160] sm:$0xff]
        %v655 = vld [vmem:[%s1 + $0x168] sm:$0xff]
        %v656 = vld [vmem:[%s1 + $0x170] sm:$0xff]
        %v657 = vld [vmem:[%s1 + $0x178] sm:$0xff]
        %v658 = vld [vmem:[%s1 + $0x180] sm:$0xff]
        %v659 = vld [vmem:[%s1 + $0x188] sm:$0xff]
        %v660 = vld [vmem:[%s1 + $0x190] sm:$0xff]
        %v661 = vld [vmem:[%s1 + $0x198] sm:$0xff]
        %v662 = vld [vmem:[%s1 + $0x1a0] sm:$0xff]
        %v663 = vld [vmem:[%s1 + $0x1a8] sm:$0xff]
        %v664 = vld [vmem:[%s1 + $0x1b0] sm:$0xff]
        %v665 = vld [vmem:[%s1 + $0x1b8] sm:$0xff]
        %v666 = vld [vmem:[%s1 + $0x1c0] sm:$0xff]
        %v667 = vld [vmem:[%s1 + $0x1c8] sm:$0xff]
        %v668 = vld [vmem:[%s1 + $0x1d0] sm:$0xff]
        %v669 = vld [vmem:[%s1 + $0x1d8] sm:$0xff]
        %v670 = vld [vmem:[%s1 + $0x1e0] sm:$0xff]
        %v671 = vld [vmem:[%s1 + $0x1e8] sm:$0xff]
        %v672 = vld [vmem:[%s1 + $0x1f0] sm:$0xff]
        %v673 = vld [vmem:[%s1 + $0x1f8] sm:$0xff]
        %v674 = vld [vmem:[%s2] sm:$0x1]
        %v739 = vlaneseq
        %v740 = vand.u32 %v739, 127
        %v741 = vlaneseq
        %v742 = vshrl.u32 %v741, 7
        %v743 = vsub.s32 %v740, %v742
        %v744 = vrot.slane %v420, %v743
        %v745 = vadd.s32 %v740, 4294967288
        %v746 = vlaneseq
        %v747 = vshrl.u32 %v746, 7
        %v748 = vsub.s32 %v745, %v747
        %v749 = vrot.slane %v423, %v748
        %vm750 = vcmask 130112
        %v751 = vsel %vm750, %v749, %v744
        %v752 = vadd.s32 %v740, 4294967280
        %v753 = vlaneseq
        %v754 = vshrl.u32 %v753, 7
        %v755 = vsub.s32 %v752, %v754
        %v756 = vrot.slane %v426, %v755
        %vm757 = vcmask 195712
        %v758 = vsel %vm757, %v756, %v751
        %v759 = vadd.s32 %v740, 4294967272
        %v760 = vlaneseq
        %v761 = vshrl.u32 %v760, 7
        %v762 = vsub.s32 %v759, %v761
        %v763 = vrot.slane %v429, %v762
        %vm764 = vcmask 261312
        %v765 = vsel %vm764, %v763, %v758
        %v766 = vadd.s32 %v740, 4294967264
        %v767 = vlaneseq
        %v768 = vshrl.u32 %v767, 7
        %v769 = vsub.s32 %v766, %v768
        %v770 = vrot.slane %v432, %v769
        %vm771 = vcmask 326912
        %v772 = vsel %vm771, %v770, %v765
        %v773 = vadd.s32 %v740, 4294967256
        %v774 = vlaneseq
        %v775 = vshrl.u32 %v774, 7
        %v776 = vsub.s32 %v773, %v775
        %v777 = vrot.slane %v435, %v776
        %vm778 = vcmask 392512
        %v779 = vsel %vm778, %v777, %v772
        %v780 = vadd.s32 %v740, 4294967248
        %v781 = vlaneseq
        %v782 = vshrl.u32 %v781, 7
        %v783 = vsub.s32 %v780, %v782
        %v784 = vrot.slane %v438, %v783
        %vm785 = vcmask 458112
        %v786 = vsel %vm785, %v784, %v779
        %v787 = vadd.s32 %v740, 4294967240
        %v788 = vlaneseq
        %v789 = vshrl.u32 %v788, 7
        %v790 = vsub.s32 %v787, %v789
        %v791 = vrot.slane %v441, %v790
        %vm792 = vcmask 523712
        %v793 = vsel %vm792, %v791, %v786
        %v794 = vadd.s32 %v740, 4294967232
        %v795 = vlaneseq
        %v796 = vshrl.u32 %v795, 7
        %v797 = vsub.s32 %v794, %v796
        %v798 = vrot.slane %v444, %v797
        %vm799 = vcmask 589312
        %v800 = vsel %vm799, %v798, %v793
        %v801 = vadd.s32 %v740, 4294967224
        %v802 = vlaneseq
        %v803 = vshrl.u32 %v802, 7
        %v804 = vsub.s32 %v801, %v803
        %v805 = vrot.slane %v447, %v804
        %vm806 = vcmask 654912
        %v807 = vsel %vm806, %v805, %v800
        %v808 = vadd.s32 %v740, 4294967216
        %v809 = vlaneseq
        %v810 = vshrl.u32 %v809, 7
        %v811 = vsub.s32 %v808, %v810
        %v812 = vrot.slane %v450, %v811
        %vm813 = vcmask 720512
        %v814 = vsel %vm813, %v812, %v807
        %v815 = vadd.s32 %v740, 4294967208
        %v816 = vlaneseq
        %v817 = vshrl.u32 %v816, 7
        %v818 = vsub.s32 %v815, %v817
        %v819 = vrot.slane %v453, %v818
        %vm820 = vcmask 786112
        %v821 = vsel %vm820, %v819, %v814
        %v822 = vadd.s32 %v740, 4294967200
        %v823 = vlaneseq
        %v824 = vshrl.u32 %v823, 7
        %v825 = vsub.s32 %v822, %v824
        %v826 = vrot.slane %v456, %v825
        %vm827 = vcmask 851712
        %v828 = vsel %vm827, %v826, %v821
        %v829 = vadd.s32 %v740, 4294967192
        %v830 = vlaneseq
        %v831 = vshrl.u32 %v830, 7
        %v832 = vsub.s32 %v829, %v831
        %v833 = vrot.slane %v459, %v832
        %vm834 = vcmask 917312
        %v835 = vsel %vm834, %v833, %v828
        %v836 = vadd.s32 %v740, 4294967184
        %v837 = vlaneseq
        %v838 = vshrl.u32 %v837, 7
        %v839 = vsub.s32 %v836, %v838
        %v840 = vrot.slane %v462, %v839
        %vm841 = vcmask 982912
        %v842 = vsel %vm841, %v840, %v835
        %v843 = vadd.s32 %v740, 4294967176
        %v844 = vlaneseq
        %v845 = vshrl.u32 %v844, 7
        %v846 = vsub.s32 %v843, %v845
        %v847 = vrot.slane %v465, %v846
        %vm848 = vcmask 1048512
        %v849 = vsel %vm848, %v847, %v842
        %v850 = vlaneseq
        %v851 = vshrl.u32 %v850, 7
        %v852 = vsub.s32 %v740, %v851
        %v853 = vrot.slane %v468, %v852
        %v854 = vlaneseq
        %v855 = vshrl.u32 %v854, 7
        %v856 = vsub.s32 %v745, %v855
        %v857 = vrot.slane %v471, %v856
        %v858 = vsel %vm750, %v857, %v853
        %v859 = vlaneseq
        %v860 = vshrl.u32 %v859, 7
        %v861 = vsub.s32 %v752, %v860
        %v862 = vrot.slane %v474, %v861
        %v863 = vsel %vm757, %v862, %v858
        %v864 = vlaneseq
        %v865 = vshrl.u32 %v864, 7
        %v866 = vsub.s32 %v759, %v865
        %v867 = vrot.slane %v477, %v866
        %v868 = vsel %vm764, %v867, %v863
        %v869 = vlaneseq
        %v870 = vshrl.u32 %v869, 7
        %v871 = vsub.s32 %v766, %v870
        %v872 = vrot.slane %v480, %v871
        %v873 = vsel %vm771, %v872, %v868
        %v874 = vlaneseq
        %v875 = vshrl.u32 %v874, 7
        %v876 = vsub.s32 %v773, %v875
        %v877 = vrot.slane %v483, %v876
        %v878 = vsel %vm778, %v877, %v873
        %v879 = vlaneseq
        %v880 = vshrl.u32 %v879, 7
        %v881 = vsub.s32 %v780, %v880
        %v882 = vrot.slane %v486, %v881
        %v883 = vsel %vm785, %v882, %v878
        %v884 = vlaneseq
        %v885 = vshrl.u32 %v884, 7
        %v886 = vsub.s32 %v787, %v885
        %v887 = vrot.slane %v489, %v886
        %v888 = vsel %vm792, %v887, %v883
        %v889 = vlaneseq
        %v890 = vshrl.u32 %v889, 7
        %v891 = vsub.s32 %v794, %v890
        %v892 = vrot.slane %v492, %v891
        %v893 = vsel %vm799, %v892, %v888
        %v894 = vlaneseq
        %v895 = vshrl.u32 %v894, 7
        %v896 = vsub.s32 %v801, %v895
        %v897 = vrot.slane %v495, %v896
        %v898 = vsel %vm806, %v897, %v893
        %v899 = vlaneseq
        %v900 = vshrl.u32 %v899, 7
        %v901 = vsub.s32 %v808, %v900
        %v902 = vrot.slane %v498, %v901
        %v903 = vsel %vm813, %v902, %v898
        %v904 = vlaneseq
        %v905 = vshrl.u32 %v904, 7
        %v906 = vsub.s32 %v815, %v905
        %v907 = vrot.slane %v501, %v906
        %v908 = vsel %vm820, %v907, %v903
        %v909 = vlaneseq
        %v910 = vshrl.u32 %v909, 7
        %v911 = vsub.s32 %v822, %v910
        %v912 = vrot.slane %v504, %v911
        %v913 = vsel %vm827, %v912, %v908
        %v914 = vlaneseq
        %v915 = vshrl.u32 %v914, 7
        %v916 = vsub.s32 %v829, %v915
        %v917 = vrot.slane %v507, %v916
        %v918 = vsel %vm834, %v917, %v913
        %v919 = vlaneseq
        %v920 = vshrl.u32 %v919, 7
        %v921 = vsub.s32 %v836, %v920
        %v922 = vrot.slane %v510, %v921
        %v923 = vsel %vm841, %v922, %v918
        %v924 = vlaneseq
        %v925 = vshrl.u32 %v924, 7
        %v926 = vsub.s32 %v843, %v925
        %v927 = vrot.slane %v513, %v926
        %v928 = vsel %vm848, %v927, %v923
        %v929 = vlaneseq
        %v930 = vshrl.u32 %v929, 7
        %v931 = vsub.s32 %v740, %v930
        %v932 = vrot.slane %v516, %v931
        %v933 = vlaneseq
        %v934 = vshrl.u32 %v933, 7
        %v935 = vsub.s32 %v745, %v934
        %v936 = vrot.slane %v519, %v935
        %v937 = vsel %vm750, %v936, %v932
        %v938 = vlaneseq
        %v939 = vshrl.u32 %v938, 7
        %v940 = vsub.s32 %v752, %v939
        %v941 = vrot.slane %v522, %v940
        %v942 = vsel %vm757, %v941, %v937
        %v943 = vlaneseq
        %v944 = vshrl.u32 %v943, 7
        %v945 = vsub.s32 %v759, %v944
        %v946 = vrot.slane %v525, %v945
        %v947 = vsel %vm764, %v946, %v942
        %v948 = vlaneseq
        %v949 = vshrl.u32 %v948, 7
        %v950 = vsub.s32 %v766, %v949
        %v951 = vrot.slane %v528, %v950
        %v952 = vsel %vm771, %v951, %v947
        %v953 = vlaneseq
        %v954 = vshrl.u32 %v953, 7
        %v955 = vsub.s32 %v773, %v954
        %v956 = vrot.slane %v531, %v955
        %v957 = vsel %vm778, %v956, %v952
        %v958 = vlaneseq
        %v959 = vshrl.u32 %v958, 7
        %v960 = vsub.s32 %v780, %v959
        %v961 = vrot.slane %v534, %v960
        %v962 = vsel %vm785, %v961, %v957
        %v963 = vlaneseq
        %v964 = vshrl.u32 %v963, 7
        %v965 = vsub.s32 %v787, %v964
        %v966 = vrot.slane %v537, %v965
        %v967 = vsel %vm792, %v966, %v962
        %v968 = vlaneseq
        %v969 = vshrl.u32 %v968, 7
        %v970 = vsub.s32 %v794, %v969
        %v971 = vrot.slane %v540, %v970
        %v972 = vsel %vm799, %v971, %v967
        %v973 = vlaneseq
        %v974 = vshrl.u32 %v973, 7
        %v975 = vsub.s32 %v801, %v974
        %v976 = vrot.slane %v543, %v975
        %v977 = vsel %vm806, %v976, %v972
        %v978 = vlaneseq
        %v979 = vshrl.u32 %v978, 7
        %v980 = vsub.s32 %v808, %v979
        %v981 = vrot.slane %v546, %v980
        %v982 = vsel %vm813, %v981, %v977
        %v983 = vlaneseq
        %v984 = vshrl.u32 %v983, 7
        %v985 = vsub.s32 %v815, %v984
        %v986 = vrot.slane %v549, %v985
        %v987 = vsel %vm820, %v986, %v982
        %v988 = vlaneseq
        %v989 = vshrl.u32 %v988, 7
        %v990 = vsub.s32 %v822, %v989
        %v991 = vrot.slane %v552, %v990
        %v992 = vsel %vm827, %v991, %v987
        %v993 = vlaneseq
        %v994 = vshrl.u32 %v993, 7
        %v995 = vsub.s32 %v829, %v994
        %v996 = vrot.slane %v555, %v995
        %v997 = vsel %vm834, %v996, %v992
        %v998 = vlaneseq
        %v999 = vshrl.u32 %v998, 7
        %v1000 = vsub.s32 %v836, %v999
        %v1001 = vrot.slane %v558, %v1000
        %v1002 = vsel %vm841, %v1001, %v997
        %v1003 = vlaneseq
        %v1004 = vshrl.u32 %v1003, 7
        %v1005 = vsub.s32 %v843, %v1004
        %v1006 = vrot.slane %v561, %v1005
        %v1007 = vsel %vm848, %v1006, %v1002
        %v1008 = vlaneseq
        %v1009 = vshrl.u32 %v1008, 7
        %v1010 = vsub.s32 %v740, %v1009
        %v1011 = vrot.slane %v564, %v1010
        %v1012 = vlaneseq
        %v1013 = vshrl.u32 %v1012, 7
        %v1014 = vsub.s32 %v745, %v1013
        %v1015 = vrot.slane %v567, %v1014
        %v1016 = vsel %vm750, %v1015, %v1011
        %v1017 = vlaneseq
        %v1018 = vshrl.u32 %v1017, 7
        %v1019 = vsub.s32 %v752, %v1018
        %v1020 = vrot.slane %v570, %v1019
        %v1021 = vsel %vm757, %v1020, %v1016
        %v1022 = vlaneseq
        %v1023 = vshrl.u32 %v1022, 7
        %v1024 = vsub.s32 %v759, %v1023
        %v1025 = vrot.slane %v573, %v1024
        %v1026 = vsel %vm764, %v1025, %v1021
        %v1027 = vlaneseq
        %v1028 = vshrl.u32 %v1027, 7
        %v1029 = vsub.s32 %v766, %v1028
        %v1030 = vrot.slane %v576, %v1029
        %v1031 = vsel %vm771, %v1030, %v1026
        %v1032 = vlaneseq
        %v1033 = vshrl.u32 %v1032, 7
        %v1034 = vsub.s32 %v773, %v1033
        %v1035 = vrot.slane %v579, %v1034
        %v1036 = vsel %vm778, %v1035, %v1031
        %v1037 = vlaneseq
        %v1038 = vshrl.u32 %v1037, 7
        %v1039 = vsub.s32 %v780, %v1038
        %v1040 = vrot.slane %v582, %v1039
        %v1041 = vsel %vm785, %v1040, %v1036
        %v1042 = vlaneseq
        %v1043 = vshrl.u32 %v1042, 7
        %v1044 = vsub.s32 %v787, %v1043
        %v1045 = vrot.slane %v585, %v1044
        %v1046 = vsel %vm792, %v1045, %v1041
        %v1047 = vlaneseq
        %v1048 = vshrl.u32 %v1047, 7
        %v1049 = vsub.s32 %v794, %v1048
        %v1050 = vrot.slane %v588, %v1049
        %v1051 = vsel %vm799, %v1050, %v1046
        %v1052 = vlaneseq
        %v1053 = vshrl.u32 %v1052, 7
        %v1054 = vsub.s32 %v801, %v1053
        %v1055 = vrot.slane %v591, %v1054
        %v1056 = vsel %vm806, %v1055, %v1051
        %v1057 = vlaneseq
        %v1058 = vshrl.u32 %v1057, 7
        %v1059 = vsub.s32 %v808, %v1058
        %v1060 = vrot.slane %v594, %v1059
        %v1061 = vsel %vm813, %v1060, %v1056
        %v1062 = vlaneseq
        %v1063 = vshrl.u32 %v1062, 7
        %v1064 = vsub.s32 %v815, %v1063
        %v1065 = vrot.slane %v597, %v1064
        %v1066 = vsel %vm820, %v1065, %v1061
        %v1067 = vlaneseq
        %v1068 = vshrl.u32 %v1067, 7
        %v1069 = vsub.s32 %v822, %v1068
        %v1070 = vrot.slane %v600, %v1069
        %v1071 = vsel %vm827, %v1070, %v1066
        %v1072 = vlaneseq
        %v1073 = vshrl.u32 %v1072, 7
        %v1074 = vsub.s32 %v829, %v1073
        %v1075 = vrot.slane %v603, %v1074
        %v1076 = vsel %vm834, %v1075, %v1071
        %v1077 = vlaneseq
        %v1078 = vshrl.u32 %v1077, 7
        %v1079 = vsub.s32 %v836, %v1078
        %v1080 = vrot.slane %v606, %v1079
        %v1081 = vsel %vm841, %v1080, %v1076
        %v1082 = vlaneseq
        %v1083 = vshrl.u32 %v1082, 7
        %v1084 = vsub.s32 %v843, %v1083
        %v1085 = vrot.slane %v609, %v1084
        %v1086 = vsel %vm848, %v1085, %v1081
        %1091 = vmatprep.subr.mxu0 0.0
        %v1092 = vand.u32 %v610, 4294901760
        %1093 = vmatpush1.msra.mxu0 %v1092
        %1094 = vmatprep.subr.mxu0 0.0
        %v1095 = vand.u32 %v611, 4294901760
        %1096 = vmatpush1.msra.mxu0 %v1095
        %1097 = vmatprep.subr.mxu0 0.0
        %v1098 = vand.u32 %v612, 4294901760
        %1099 = vmatpush1.msra.mxu0 %v1098
        %1100 = vmatprep.subr.mxu0 0.0
        %v1101 = vand.u32 %v613, 4294901760
        %1102 = vmatpush1.msra.mxu0 %v1101
        %1103 = vmatprep.subr.mxu0 0.0
        %v1104 = vand.u32 %v614, 4294901760
        %1105 = vmatpush1.msra.mxu0 %v1104
        %1106 = vmatprep.subr.mxu0 0.0
        %v1107 = vand.u32 %v615, 4294901760
        %1108 = vmatpush1.msra.mxu0 %v1107
        %1109 = vmatprep.subr.mxu0 0.0
        %v1110 = vand.u32 %v616, 4294901760
        %1111 = vmatpush1.msra.mxu0 %v1110
        %1112 = vmatprep.subr.mxu0 0.0
        %v1113 = vand.u32 %v617, 4294901760
        %1114 = vmatpush1.msra.mxu0 %v1113
        %1115 = vmatprep.subr.mxu0 0.0
        %v1116 = vand.u32 %v618, 4294901760
        %1117 = vmatpush1.msra.mxu0 %v1116
        %1118 = vmatprep.subr.mxu0 0.0
        %v1119 = vand.u32 %v619, 4294901760
        %1120 = vmatpush1.msra.mxu0 %v1119
        %1121 = vmatprep.subr.mxu0 0.0
        %v1122 = vand.u32 %v620, 4294901760
        %1123 = vmatpush1.msra.mxu0 %v1122
        %1124 = vmatprep.subr.mxu0 0.0
        %v1125 = vand.u32 %v621, 4294901760
        %1126 = vmatpush1.msra.mxu0 %v1125
        %1127 = vmatprep.subr.mxu0 0.0
        %v1128 = vand.u32 %v622, 4294901760
        %1129 = vmatpush1.msra.mxu0 %v1128
        %1130 = vmatprep.subr.mxu0 0.0
        %v1131 = vand.u32 %v623, 4294901760
        %1132 = vmatpush1.msra.mxu0 %v1131
        %1133 = vmatprep.subr.mxu0 0.0
        %v1134 = vand.u32 %v624, 4294901760
        %1135 = vmatpush1.msra.mxu0 %v1134
        %1136 = vmatprep.subr.mxu0 0.0
        %v1137 = vand.u32 %v625, 4294901760
        %1138 = vmatpush1.msra.mxu0 %v1137
        %1139 = vmatprep.subr.mxu0 0.0
        %v1140 = vand.u32 %v626, 4294901760
        %1141 = vmatpush1.msra.mxu0 %v1140
        %1142 = vmatprep.subr.mxu0 0.0
        %v1143 = vand.u32 %v627, 4294901760
        %1144 = vmatpush1.msra.mxu0 %v1143
        %1145 = vmatprep.subr.mxu0 0.0
        %v1146 = vand.u32 %v628, 4294901760
        %1147 = vmatpush1.msra.mxu0 %v1146
        %1148 = vmatprep.subr.mxu0 0.0
        %v1149 = vand.u32 %v629, 4294901760
        %1150 = vmatpush1.msra.mxu0 %v1149
        %1151 = vmatprep.subr.mxu0 0.0
        %v1152 = vand.u32 %v630, 4294901760
        %1153 = vmatpush1.msra.mxu0 %v1152
        %1154 = vmatprep.subr.mxu0 0.0
        %v1155 = vand.u32 %v631, 4294901760
        %1156 = vmatpush1.msra.mxu0 %v1155
        %1157 = vmatprep.subr.mxu0 0.0
        %v1158 = vand.u32 %v632, 4294901760
        %1159 = vmatpush1.msra.mxu0 %v1158
        %1160 = vmatprep.subr.mxu0 0.0
        %v1161 = vand.u32 %v633, 4294901760
        %1162 = vmatpush1.msra.mxu0 %v1161
        %1163 = vmatprep.subr.mxu0 0.0
        %v1164 = vand.u32 %v634, 4294901760
        %1165 = vmatpush1.msra.mxu0 %v1164
        %1166 = vmatprep.subr.mxu0 0.0
        %v1167 = vand.u32 %v635, 4294901760
        %1168 = vmatpush1.msra.mxu0 %v1167
        %1169 = vmatprep.subr.mxu0 0.0
        %v1170 = vand.u32 %v636, 4294901760
        %1171 = vmatpush1.msra.mxu0 %v1170
        %1172 = vmatprep.subr.mxu0 0.0
        %v1173 = vand.u32 %v637, 4294901760
        %1174 = vmatpush1.msra.mxu0 %v1173
        %1175 = vmatprep.subr.mxu0 0.0
        %v1176 = vand.u32 %v638, 4294901760
        %1177 = vmatpush1.msra.mxu0 %v1176
        %1178 = vmatprep.subr.mxu0 0.0
        %v1179 = vand.u32 %v639, 4294901760
        %1180 = vmatpush1.msra.mxu0 %v1179
        %1181 = vmatprep.subr.mxu0 0.0
        %v1182 = vand.u32 %v640, 4294901760
        %1183 = vmatpush1.msra.mxu0 %v1182
        %1184 = vmatprep.subr.mxu0 0.0
        %v1185 = vand.u32 %v641, 4294901760
        %1186 = vmatpush1.msra.mxu0 %v1185
        %v1187 = vand.u32 %v928, 4294901760
        %v1188 = vsub.f32 %v928, %v1187
        %v1189 = vand.u32 %v1188, 4294901760
        %v1190 = vsub.f32 %v1188, %v1189
        %v1191 = vand.u32 %v1190, 4294901760
        %1192 = vmatprep.mubr.f32.mxu0 %v1191
        %v1193 = vand.u32 %v849, 4294901760
        %v1194 = vsub.f32 %v849, %v1193
        %v1195 = vand.u32 %v1194, 4294901760
        %v1196 = vsub.f32 %v1194, %v1195
        %v1197 = vand.u32 %v1196, 4294901760
        %1198 = vmatmul.mubr.f32.gmra.mrb[0].mxu0 %v1197
        %v1199 = vpop.f32.mrb[0].mxu0
        %v1200 = vadd.f32 %v674, %v1199
        %v1201 = vpop.f32.mrb[0].mxu0
        %1202 = vdwg.mxu0
        %1203 = vmatprep.subr.mxu0 0.0
        %v1204 = vand.u32 %v610, 4294901760
        %v1205 = vsub.f32 %v610, %v1204
        %v1206 = vand.u32 %v1205, 4294901760
        %v1207 = vsub.f32 %v1205, %v1206
        %v1208 = vand.u32 %v1207, 4294901760
        %1209 = vmatpush1.msra.mxu0 %v1208
        %1210 = vmatprep.subr.mxu0 0.0
        %v1211 = vand.u32 %v611, 4294901760
        %v1212 = vsub.f32 %v611, %v1211
        %v1213 = vand.u32 %v1212, 4294901760
        %v1214 = vsub.f32 %v1212, %v1213
        %v1215 = vand.u32 %v1214, 4294901760
        %1216 = vmatpush1.msra.mxu0 %v1215
        %1217 = vmatprep.subr.mxu0 0.0
        %v1218 = vand.u32 %v612, 4294901760
        %v1219 = vsub.f32 %v612, %v1218
        %v1220 = vand.u32 %v1219, 4294901760
        %v1221 = vsub.f32 %v1219, %v1220
        %v1222 = vand.u32 %v1221, 4294901760
        %1223 = vmatpush1.msra.mxu0 %v1222
        %1224 = vmatprep.subr.mxu0 0.0
        %v1225 = vand.u32 %v613, 4294901760
        %v1226 = vsub.f32 %v613, %v1225
        %v1227 = vand.u32 %v1226, 4294901760
        %v1228 = vsub.f32 %v1226, %v1227
        %v1229 = vand.u32 %v1228, 4294901760
        %1230 = vmatpush1.msra.mxu0 %v1229
        %1231 = vmatprep.subr.mxu0 0.0
        %v1232 = vand.u32 %v614, 4294901760
        %v1233 = vsub.f32 %v614, %v1232
        %v1234 = vand.u32 %v1233, 4294901760
        %v1235 = vsub.f32 %v1233, %v1234
        %v1236 = vand.u32 %v1235, 4294901760
        %1237 = vmatpush1.msra.mxu0 %v1236
        %1238 = vmatprep.subr.mxu0 0.0
        %v1239 = vand.u32 %v615, 4294901760
        %v1240 = vsub.f32 %v615, %v1239
        %v1241 = vand.u32 %v1240, 4294901760
        %v1242 = vsub.f32 %v1240, %v1241
        %v1243 = vand.u32 %v1242, 4294901760
        %1244 = vmatpush1.msra.mxu0 %v1243
        %1245 = vmatprep.subr.mxu0 0.0
        %v1246 = vand.u32 %v616, 4294901760
        %v1247 = vsub.f32 %v616, %v1246
        %v1248 = vand.u32 %v1247, 4294901760
        %v1249 = vsub.f32 %v1247, %v1248
        %v1250 = vand.u32 %v1249, 4294901760
        %1251 = vmatpush1.msra.mxu0 %v1250
        %1252 = vmatprep.subr.mxu0 0.0
        %v1253 = vand.u32 %v617, 4294901760
        %v1254 = vsub.f32 %v617, %v1253
        %v1255 = vand.u32 %v1254, 4294901760
        %v1256 = vsub.f32 %v1254, %v1255
        %v1257 = vand.u32 %v1256, 4294901760
        %1258 = vmatpush1.msra.mxu0 %v1257
        %1259 = vmatprep.subr.mxu0 0.0
        %v1260 = vand.u32 %v618, 4294901760
        %v1261 = vsub.f32 %v618, %v1260
        %v1262 = vand.u32 %v1261, 4294901760
        %v1263 = vsub.f32 %v1261, %v1262
        %v1264 = vand.u32 %v1263, 4294901760
        %1265 = vmatpush1.msra.mxu0 %v1264
        %1266 = vmatprep.subr.mxu0 0.0
        %v1267 = vand.u32 %v619, 4294901760
        %v1268 = vsub.f32 %v619, %v1267
        %v1269 = vand.u32 %v1268, 4294901760
        %v1270 = vsub.f32 %v1268, %v1269
        %v1271 = vand.u32 %v1270, 4294901760
        %1272 = vmatpush1.msra.mxu0 %v1271
        %1273 = vmatprep.subr.mxu0 0.0
        %v1274 = vand.u32 %v620, 4294901760
        %v1275 = vsub.f32 %v620, %v1274
        %v1276 = vand.u32 %v1275, 4294901760
        %v1277 = vsub.f32 %v1275, %v1276
        %v1278 = vand.u32 %v1277, 4294901760
        %1279 = vmatpush1.msra.mxu0 %v1278
        %1280 = vmatprep.subr.mxu0 0.0
        %v1281 = vand.u32 %v621, 4294901760
        %v1282 = vsub.f32 %v621, %v1281
        %v1283 = vand.u32 %v1282, 4294901760
        %v1284 = vsub.f32 %v1282, %v1283
        %v1285 = vand.u32 %v1284, 4294901760
        %1286 = vmatpush1.msra.mxu0 %v1285
        %1287 = vmatprep.subr.mxu0 0.0
        %v1288 = vand.u32 %v622, 4294901760
        %v1289 = vsub.f32 %v622, %v1288
        %v1290 = vand.u32 %v1289, 4294901760
        %v1291 = vsub.f32 %v1289, %v1290
        %v1292 = vand.u32 %v1291, 4294901760
        %1293 = vmatpush1.msra.mxu0 %v1292
        %1294 = vmatprep.subr.mxu0 0.0
        %v1295 = vand.u32 %v623, 4294901760
        %v1296 = vsub.f32 %v623, %v1295
        %v1297 = vand.u32 %v1296, 4294901760
        %v1298 = vsub.f32 %v1296, %v1297
        %v1299 = vand.u32 %v1298, 4294901760
        %1300 = vmatpush1.msra.mxu0 %v1299
        %1301 = vmatprep.subr.mxu0 0.0
        %v1302 = vand.u32 %v624, 4294901760
        %v1303 = vsub.f32 %v624, %v1302
        %v1304 = vand.u32 %v1303, 4294901760
        %v1305 = vsub.f32 %v1303, %v1304
        %v1306 = vand.u32 %v1305, 4294901760
        %1307 = vmatpush1.msra.mxu0 %v1306
        %1308 = vmatprep.subr.mxu0 0.0
        %v1309 = vand.u32 %v625, 4294901760
        %v1310 = vsub.f32 %v625, %v1309
        %v1311 = vand.u32 %v1310, 4294901760
        %v1312 = vsub.f32 %v1310, %v1311
        %v1313 = vand.u32 %v1312, 4294901760
        %1314 = vmatpush1.msra.mxu0 %v1313
        %1315 = vmatprep.subr.mxu0 0.0
        %v1316 = vand.u32 %v626, 4294901760
        %v1317 = vsub.f32 %v626, %v1316
        %v1318 = vand.u32 %v1317, 4294901760
        %v1319 = vsub.f32 %v1317, %v1318
        %v1320 = vand.u32 %v1319, 4294901760
        %1321 = vmatpush1.msra.mxu0 %v1320
        %1322 = vmatprep.subr.mxu0 0.0
        %v1323 = vand.u32 %v627, 4294901760
        %v1324 = vsub.f32 %v627, %v1323
        %v1325 = vand.u32 %v1324, 4294901760
        %v1326 = vsub.f32 %v1324, %v1325
        %v1327 = vand.u32 %v1326, 4294901760
        %1328 = vmatpush1.msra.mxu0 %v1327
        %1329 = vmatprep.subr.mxu0 0.0
        %v1330 = vand.u32 %v628, 4294901760
        %v1331 = vsub.f32 %v628, %v1330
        %v1332 = vand.u32 %v1331, 4294901760
        %v1333 = vsub.f32 %v1331, %v1332
        %v1334 = vand.u32 %v1333, 4294901760
        %1335 = vmatpush1.msra.mxu0 %v1334
        %1336 = vmatprep.subr.mxu0 0.0
        %v1337 = vand.u32 %v629, 4294901760
        %v1338 = vsub.f32 %v629, %v1337
        %v1339 = vand.u32 %v1338, 4294901760
        %v1340 = vsub.f32 %v1338, %v1339
        %v1341 = vand.u32 %v1340, 4294901760
        %1342 = vmatpush1.msra.mxu0 %v1341
        %1343 = vmatprep.subr.mxu0 0.0
        %v1344 = vand.u32 %v630, 4294901760
        %v1345 = vsub.f32 %v630, %v1344
        %v1346 = vand.u32 %v1345, 4294901760
        %v1347 = vsub.f32 %v1345, %v1346
        %v1348 = vand.u32 %v1347, 4294901760
        %1349 = vmatpush1.msra.mxu0 %v1348
        %1350 = vmatprep.subr.mxu0 0.0
        %v1351 = vand.u32 %v631, 4294901760
        %v1352 = vsub.f32 %v631, %v1351
        %v1353 = vand.u32 %v1352, 4294901760
        %v1354 = vsub.f32 %v1352, %v1353
        %v1355 = vand.u32 %v1354, 4294901760
        %1356 = vmatpush1.msra.mxu0 %v1355
        %1357 = vmatprep.subr.mxu0 0.0
        %v1358 = vand.u32 %v632, 4294901760
        %v1359 = vsub.f32 %v632, %v1358
        %v1360 = vand.u32 %v1359, 4294901760
        %v1361 = vsub.f32 %v1359, %v1360
        %v1362 = vand.u32 %v1361, 4294901760
        %1363 = vmatpush1.msra.mxu0 %v1362
        %1364 = vmatprep.subr.mxu0 0.0
        %v1365 = vand.u32 %v633, 4294901760
        %v1366 = vsub.f32 %v633, %v1365
        %v1367 = vand.u32 %v1366, 4294901760
        %v1368 = vsub.f32 %v1366, %v1367
        %v1369 = vand.u32 %v1368, 4294901760
        %1370 = vmatpush1.msra.mxu0 %v1369
        %1371 = vmatprep.subr.mxu0 0.0
        %v1372 = vand.u32 %v634, 4294901760
        %v1373 = vsub.f32 %v634, %v1372
        %v1374 = vand.u32 %v1373, 4294901760
        %v1375 = vsub.f32 %v1373, %v1374
        %v1376 = vand.u32 %v1375, 4294901760
        %1377 = vmatpush1.msra.mxu0 %v1376
        %1378 = vmatprep.subr.mxu0 0.0
        %v1379 = vand.u32 %v635, 4294901760
        %v1380 = vsub.f32 %v635, %v1379
        %v1381 = vand.u32 %v1380, 4294901760
        %v1382 = vsub.f32 %v1380, %v1381
        %v1383 = vand.u32 %v1382, 4294901760
        %1384 = vmatpush1.msra.mxu0 %v1383
        %1385 = vmatprep.subr.mxu0 0.0
        %v1386 = vand.u32 %v636, 4294901760
        %v1387 = vsub.f32 %v636, %v1386
        %v1388 = vand.u32 %v1387, 4294901760
        %v1389 = vsub.f32 %v1387, %v1388
        %v1390 = vand.u32 %v1389, 4294901760
        %1391 = vmatpush1.msra.mxu0 %v1390
        %1392 = vmatprep.subr.mxu0 0.0
        %v1393 = vand.u32 %v637, 4294901760
        %v1394 = vsub.f32 %v637, %v1393
        %v1395 = vand.u32 %v1394, 4294901760
        %v1396 = vsub.f32 %v1394, %v1395
        %v1397 = vand.u32 %v1396, 4294901760
        %1398 = vmatpush1.msra.mxu0 %v1397
        %1399 = vmatprep.subr.mxu0 0.0
        %v1400 = vand.u32 %v638, 4294901760
        %v1401 = vsub.f32 %v638, %v1400
        %v1402 = vand.u32 %v1401, 4294901760
        %v1403 = vsub.f32 %v1401, %v1402
        %v1404 = vand.u32 %v1403, 4294901760
        %1405 = vmatpush1.msra.mxu0 %v1404
        %1406 = vmatprep.subr.mxu0 0.0
        %v1407 = vand.u32 %v639, 4294901760
        %v1408 = vsub.f32 %v639, %v1407
        %v1409 = vand.u32 %v1408, 4294901760
        %v1410 = vsub.f32 %v1408, %v1409
        %v1411 = vand.u32 %v1410, 4294901760
        %1412 = vmatpush1.msra.mxu0 %v1411
        %1413 = vmatprep.subr.mxu0 0.0
        %v1414 = vand.u32 %v640, 4294901760
        %v1415 = vsub.f32 %v640, %v1414
        %v1416 = vand.u32 %v1415, 4294901760
        %v1417 = vsub.f32 %v1415, %v1416
        %v1418 = vand.u32 %v1417, 4294901760
        %1419 = vmatpush1.msra.mxu0 %v1418
        %1420 = vmatprep.subr.mxu0 0.0
        %v1421 = vand.u32 %v641, 4294901760
        %v1422 = vsub.f32 %v641, %v1421
        %v1423 = vand.u32 %v1422, 4294901760
        %v1424 = vsub.f32 %v1422, %v1423
        %v1425 = vand.u32 %v1424, 4294901760
        %1426 = vmatpush1.msra.mxu0 %v1425
        %v1427 = vand.u32 %v928, 4294901760
        %1428 = vmatprep.mubr.f32.mxu0 %v1427
        %v1429 = vand.u32 %v849, 4294901760
        %1430 = vmatmul.mubr.f32.gmra.mrb[0].mxu0 %v1429
        %v1431 = vpop.f32.mrb[0].mxu0
        %v1432 = vadd.f32 %v1200, %v1431
        %v1433 = vpop.f32.mrb[0].mxu0
        %1434 = vdwg.mxu0
        %1435 = vmatprep.subr.mxu0 0.0
        %v1436 = vand.u32 %v610, 4294901760
        %v1437 = vsub.f32 %v610, %v1436
        %1438 = vmatpush1.msra.mxu0 %v1437
        %1439 = vmatprep.subr.mxu0 0.0
        %v1440 = vand.u32 %v611, 4294901760
        %v1441 = vsub.f32 %v611, %v1440
        %1442 = vmatpush1.msra.mxu0 %v1441
        %1443 = vmatprep.subr.mxu0 0.0
        %v1444 = vand.u32 %v612, 4294901760
        %v1445 = vsub.f32 %v612, %v1444
        %1446 = vmatpush1.msra.mxu0 %v1445
        %1447 = vmatprep.subr.mxu0 0.0
        %v1448 = vand.u32 %v613, 4294901760
        %v1449 = vsub.f32 %v613, %v1448
        %1450 = vmatpush1.msra.mxu0 %v1449
        %1451 = vmatprep.subr.mxu0 0.0
        %v1452 = vand.u32 %v614, 4294901760
        %v1453 = vsub.f32 %v614, %v1452
        %1454 = vmatpush1.msra.mxu0 %v1453
        %1455 = vmatprep.subr.mxu0 0.0
        %v1456 = vand.u32 %v615, 4294901760
        %v1457 = vsub.f32 %v615, %v1456
        %1458 = vmatpush1.msra.mxu0 %v1457
        %1459 = vmatprep.subr.mxu0 0.0
        %v1460 = vand.u32 %v616, 4294901760
        %v1461 = vsub.f32 %v616, %v1460
        %1462 = vmatpush1.msra.mxu0 %v1461
        %1463 = vmatprep.subr.mxu0 0.0
        %v1464 = vand.u32 %v617, 4294901760
        %v1465 = vsub.f32 %v617, %v1464
        %1466 = vmatpush1.msra.mxu0 %v1465
        %1467 = vmatprep.subr.mxu0 0.0
        %v1468 = vand.u32 %v618, 4294901760
        %v1469 = vsub.f32 %v618, %v1468
        %1470 = vmatpush1.msra.mxu0 %v1469
        %1471 = vmatprep.subr.mxu0 0.0
        %v1472 = vand.u32 %v619, 4294901760
        %v1473 = vsub.f32 %v619, %v1472
        %1474 = vmatpush1.msra.mxu0 %v1473
        %1475 = vmatprep.subr.mxu0 0.0
        %v1476 = vand.u32 %v620, 4294901760
        %v1477 = vsub.f32 %v620, %v1476
        %1478 = vmatpush1.msra.mxu0 %v1477
        %1479 = vmatprep.subr.mxu0 0.0
        %v1480 = vand.u32 %v621, 4294901760
        %v1481 = vsub.f32 %v621, %v1480
        %1482 = vmatpush1.msra.mxu0 %v1481
        %1483 = vmatprep.subr.mxu0 0.0
        %v1484 = vand.u32 %v622, 4294901760
        %v1485 = vsub.f32 %v622, %v1484
        %1486 = vmatpush1.msra.mxu0 %v1485
        %1487 = vmatprep.subr.mxu0 0.0
        %v1488 = vand.u32 %v623, 4294901760
        %v1489 = vsub.f32 %v623, %v1488
        %1490 = vmatpush1.msra.mxu0 %v1489
        %1491 = vmatprep.subr.mxu0 0.0
        %v1492 = vand.u32 %v624, 4294901760
        %v1493 = vsub.f32 %v624, %v1492
        %1494 = vmatpush1.msra.mxu0 %v1493
        %1495 = vmatprep.subr.mxu0 0.0
        %v1496 = vand.u32 %v625, 4294901760
        %v1497 = vsub.f32 %v625, %v1496
        %1498 = vmatpush1.msra.mxu0 %v1497
        %1499 = vmatprep.subr.mxu0 0.0
        %v1500 = vand.u32 %v626, 4294901760
        %v1501 = vsub.f32 %v626, %v1500
        %1502 = vmatpush1.msra.mxu0 %v1501
        %1503 = vmatprep.subr.mxu0 0.0
        %v1504 = vand.u32 %v627, 4294901760
        %v1505 = vsub.f32 %v627, %v1504
        %1506 = vmatpush1.msra.mxu0 %v1505
        %1507 = vmatprep.subr.mxu0 0.0
        %v1508 = vand.u32 %v628, 4294901760
        %v1509 = vsub.f32 %v628, %v1508
        %1510 = vmatpush1.msra.mxu0 %v1509
        %1511 = vmatprep.subr.mxu0 0.0
        %v1512 = vand.u32 %v629, 4294901760
        %v1513 = vsub.f32 %v629, %v1512
        %1514 = vmatpush1.msra.mxu0 %v1513
        %1515 = vmatprep.subr.mxu0 0.0
        %v1516 = vand.u32 %v630, 4294901760
        %v1517 = vsub.f32 %v630, %v1516
        %1518 = vmatpush1.msra.mxu0 %v1517
        %1519 = vmatprep.subr.mxu0 0.0
        %v1520 = vand.u32 %v631, 4294901760
        %v1521 = vsub.f32 %v631, %v1520
        %1522 = vmatpush1.msra.mxu0 %v1521
        %1523 = vmatprep.subr.mxu0 0.0
        %v1524 = vand.u32 %v632, 4294901760
        %v1525 = vsub.f32 %v632, %v1524
        %1526 = vmatpush1.msra.mxu0 %v1525
        %1527 = vmatprep.subr.mxu0 0.0
        %v1528 = vand.u32 %v633, 4294901760
        %v1529 = vsub.f32 %v633, %v1528
        %1530 = vmatpush1.msra.mxu0 %v1529
        %1531 = vmatprep.subr.mxu0 0.0
        %v1532 = vand.u32 %v634, 4294901760
        %v1533 = vsub.f32 %v634, %v1532
        %1534 = vmatpush1.msra.mxu0 %v1533
        %1535 = vmatprep.subr.mxu0 0.0
        %v1536 = vand.u32 %v635, 4294901760
        %v1537 = vsub.f32 %v635, %v1536
        %1538 = vmatpush1.msra.mxu0 %v1537
        %1539 = vmatprep.subr.mxu0 0.0
        %v1540 = vand.u32 %v636, 4294901760
        %v1541 = vsub.f32 %v636, %v1540
        %1542 = vmatpush1.msra.mxu0 %v1541
        %1543 = vmatprep.subr.mxu0 0.0
        %v1544 = vand.u32 %v637, 4294901760
        %v1545 = vsub.f32 %v637, %v1544
        %1546 = vmatpush1.msra.mxu0 %v1545
        %1547 = vmatprep.subr.mxu0 0.0
        %v1548 = vand.u32 %v638, 4294901760
        %v1549 = vsub.f32 %v638, %v1548
        %1550 = vmatpush1.msra.mxu0 %v1549
        %1551 = vmatprep.subr.mxu0 0.0
        %v1552 = vand.u32 %v639, 4294901760
        %v1553 = vsub.f32 %v639, %v1552
        %1554 = vmatpush1.msra.mxu0 %v1553
        %1555 = vmatprep.subr.mxu0 0.0
        %v1556 = vand.u32 %v640, 4294901760
        %v1557 = vsub.f32 %v640, %v1556
        %1558 = vmatpush1.msra.mxu0 %v1557
        %1559 = vmatprep.subr.mxu0 0.0
        %v1560 = vand.u32 %v641, 4294901760
        %v1561 = vsub.f32 %v641, %v1560
        %1562 = vmatpush1.msra.mxu0 %v1561
        %v1563 = vand.u32 %v928, 4294901760
        %v1564 = vsub.f32 %v928, %v1563
        %1565 = vmatprep.mubr.f32.mxu0 %v1564
        %v1566 = vand.u32 %v849, 4294901760
        %v1567 = vsub.f32 %v849, %v1566
        %1568 = vmatmul.mubr.f32.gmra.mrb[0].mxu0 %v1567
        %v1569 = vpop.f32.mrb[0].mxu0
        %v1570 = vadd.f32 %v1432, %v1569
        %v1571 = vpop.f32.mrb[0].mxu0
        %1572 = vdwg.mxu0
        %1573 = vmatprep.subr.mxu0 0.0
        %v1574 = vand.u32 %v610, 4294901760
        %1575 = vmatpush1.msra.mxu0 %v1574
        %1576 = vmatprep.subr.mxu0 0.0
        %v1577 = vand.u32 %v611, 4294901760
        %1578 = vmatpush1.msra.mxu0 %v1577
        %1579 = vmatprep.subr.mxu0 0.0
        %v1580 = vand.u32 %v612, 4294901760
        %1581 = vmatpush1.msra.mxu0 %v1580
        %1582 = vmatprep.subr.mxu0 0.0
        %v1583 = vand.u32 %v613, 4294901760
        %1584 = vmatpush1.msra.mxu0 %v1583
        %1585 = vmatprep.subr.mxu0 0.0
        %v1586 = vand.u32 %v614, 4294901760
        %1587 = vmatpush1.msra.mxu0 %v1586
        %1588 = vmatprep.subr.mxu0 0.0
        %v1589 = vand.u32 %v615, 4294901760
        %1590 = vmatpush1.msra.mxu0 %v1589
        %1591 = vmatprep.subr.mxu0 0.0
        %v1592 = vand.u32 %v616, 4294901760
        %1593 = vmatpush1.msra.mxu0 %v1592
        %1594 = vmatprep.subr.mxu0 0.0
        %v1595 = vand.u32 %v617, 4294901760
        %1596 = vmatpush1.msra.mxu0 %v1595
        %1597 = vmatprep.subr.mxu0 0.0
        %v1598 = vand.u32 %v618, 4294901760
        %1599 = vmatpush1.msra.mxu0 %v1598
        %1600 = vmatprep.subr.mxu0 0.0
        %v1601 = vand.u32 %v619, 4294901760
        %1602 = vmatpush1.msra.mxu0 %v1601
        %1603 = vmatprep.subr.mxu0 0.0
        %v1604 = vand.u32 %v620, 4294901760
        %1605 = vmatpush1.msra.mxu0 %v1604
        %1606 = vmatprep.subr.mxu0 0.0
        %v1607 = vand.u32 %v621, 4294901760
        %1608 = vmatpush1.msra.mxu0 %v1607
        %1609 = vmatprep.subr.mxu0 0.0
        %v1610 = vand.u32 %v622, 4294901760
        %1611 = vmatpush1.msra.mxu0 %v1610
        %1612 = vmatprep.subr.mxu0 0.0
        %v1613 = vand.u32 %v623, 4294901760
        %1614 = vmatpush1.msra.mxu0 %v1613
        %1615 = vmatprep.subr.mxu0 0.0
        %v1616 = vand.u32 %v624, 4294901760
        %1617 = vmatpush1.msra.mxu0 %v1616
        %1618 = vmatprep.subr.mxu0 0.0
        %v1619 = vand.u32 %v625, 4294901760
        %1620 = vmatpush1.msra.mxu0 %v1619
        %1621 = vmatprep.subr.mxu0 0.0
        %v1622 = vand.u32 %v626, 4294901760
        %1623 = vmatpush1.msra.mxu0 %v1622
        %1624 = vmatprep.subr.mxu0 0.0
        %v1625 = vand.u32 %v627, 4294901760
        %1626 = vmatpush1.msra.mxu0 %v1625
        %1627 = vmatprep.subr.mxu0 0.0
        %v1628 = vand.u32 %v628, 4294901760
        %1629 = vmatpush1.msra.mxu0 %v1628
        %1630 = vmatprep.subr.mxu0 0.0
        %v1631 = vand.u32 %v629, 4294901760
        %1632 = vmatpush1.msra.mxu0 %v1631
        %1633 = vmatprep.subr.mxu0 0.0
        %v1634 = vand.u32 %v630, 4294901760
        %1635 = vmatpush1.msra.mxu0 %v1634
        %1636 = vmatprep.subr.mxu0 0.0
        %v1637 = vand.u32 %v631, 4294901760
        %1638 = vmatpush1.msra.mxu0 %v1637
        %1639 = vmatprep.subr.mxu0 0.0
        %v1640 = vand.u32 %v632, 4294901760
        %1641 = vmatpush1.msra.mxu0 %v1640
        %1642 = vmatprep.subr.mxu0 0.0
        %v1643 = vand.u32 %v633, 4294901760
        %1644 = vmatpush1.msra.mxu0 %v1643
        %1645 = vmatprep.subr.mxu0 0.0
        %v1646 = vand.u32 %v634, 4294901760
        %1647 = vmatpush1.msra.mxu0 %v1646
        %1648 = vmatprep.subr.mxu0 0.0
        %v1649 = vand.u32 %v635, 4294901760
        %1650 = vmatpush1.msra.mxu0 %v1649
        %1651 = vmatprep.subr.mxu0 0.0
        %v1652 = vand.u32 %v636, 4294901760
        %1653 = vmatpush1.msra.mxu0 %v1652
        %1654 = vmatprep.subr.mxu0 0.0
        %v1655 = vand.u32 %v637, 4294901760
        %1656 = vmatpush1.msra.mxu0 %v1655
        %1657 = vmatprep.subr.mxu0 0.0
        %v1658 = vand.u32 %v638, 4294901760
        %1659 = vmatpush1.msra.mxu0 %v1658
        %1660 = vmatprep.subr.mxu0 0.0
        %v1661 = vand.u32 %v639, 4294901760
        %1662 = vmatpush1.msra.mxu0 %v1661
        %1663 = vmatprep.subr.mxu0 0.0
        %v1664 = vand.u32 %v640, 4294901760
        %1665 = vmatpush1.msra.mxu0 %v1664
        %1666 = vmatprep.subr.mxu0 0.0
        %v1667 = vand.u32 %v641, 4294901760
        %1668 = vmatpush1.msra.mxu0 %v1667
        %v1669 = vand.u32 %v928, 4294901760
        %v1670 = vsub.f32 %v928, %v1669
        %v1671 = vand.u32 %v1670, 4294901760
        %1672 = vmatprep.mubr.f32.mxu0 %v1671
        %v1673 = vand.u32 %v849, 4294901760
        %v1674 = vsub.f32 %v849, %v1673
        %v1675 = vand.u32 %v1674, 4294901760
        %1676 = vmatmul.mubr.f32.gmra.mrb[0].mxu0 %v1675
        %v1677 = vpop.f32.mrb[0].mxu0
        %v1678 = vadd.f32 %v1570, %v1677
        %v1679 = vpop.f32.mrb[0].mxu0
        %1680 = vdwg.mxu0
        %1681 = vmatprep.subr.mxu0 0.0
        %v1682 = vand.u32 %v610, 4294901760
        %v1683 = vsub.f32 %v610, %v1682
        %v1684 = vand.u32 %v1683, 4294901760
        %1685 = vmatpush1.msra.mxu0 %v1684
        %1686 = vmatprep.subr.mxu0 0.0
        %v1687 = vand.u32 %v611, 4294901760
        %v1688 = vsub.f32 %v611, %v1687
        %v1689 = vand.u32 %v1688, 4294901760
        %1690 = vmatpush1.msra.mxu0 %v1689
        %1691 = vmatprep.subr.mxu0 0.0
        %v1692 = vand.u32 %v612, 4294901760
        %v1693 = vsub.f32 %v612, %v1692
        %v1694 = vand.u32 %v1693, 4294901760
        %1695 = vmatpush1.msra.mxu0 %v1694
        %1696 = vmatprep.subr.mxu0 0.0
        %v1697 = vand.u32 %v613, 4294901760
        %v1698 = vsub.f32 %v613, %v1697
        %v1699 = vand.u32 %v1698, 4294901760
        %1700 = vmatpush1.msra.mxu0 %v1699
        %1701 = vmatprep.subr.mxu0 0.0
        %v1702 = vand.u32 %v614, 4294901760
        %v1703 = vsub.f32 %v614, %v1702
        %v1704 = vand.u32 %v1703, 4294901760
        %1705 = vmatpush1.msra.mxu0 %v1704
        %1706 = vmatprep.subr.mxu0 0.0
        %v1707 = vand.u32 %v615, 4294901760
        %v1708 = vsub.f32 %v615, %v1707
        %v1709 = vand.u32 %v1708, 4294901760
        %1710 = vmatpush1.msra.mxu0 %v1709
        %1711 = vmatprep.subr.mxu0 0.0
        %v1712 = vand.u32 %v616, 4294901760
        %v1713 = vsub.f32 %v616, %v1712
        %v1714 = vand.u32 %v1713, 4294901760
        %1715 = vmatpush1.msra.mxu0 %v1714
        %1716 = vmatprep.subr.mxu0 0.0
        %v1717 = vand.u32 %v617, 4294901760
        %v1718 = vsub.f32 %v617, %v1717
        %v1719 = vand.u32 %v1718, 4294901760
        %1720 = vmatpush1.msra.mxu0 %v1719
        %1721 = vmatprep.subr.mxu0 0.0
        %v1722 = vand.u32 %v618, 4294901760
        %v1723 = vsub.f32 %v618, %v1722
        %v1724 = vand.u32 %v1723, 4294901760
        %1725 = vmatpush1.msra.mxu0 %v1724
        %1726 = vmatprep.subr.mxu0 0.0
        %v1727 = vand.u32 %v619, 4294901760
        %v1728 = vsub.f32 %v619, %v1727
        %v1729 = vand.u32 %v1728, 4294901760
        %1730 = vmatpush1.msra.mxu0 %v1729
        %1731 = vmatprep.subr.mxu0 0.0
        %v1732 = vand.u32 %v620, 4294901760
        %v1733 = vsub.f32 %v620, %v1732
        %v1734 = vand.u32 %v1733, 4294901760
        %1735 = vmatpush1.msra.mxu0 %v1734
        %1736 = vmatprep.subr.mxu0 0.0
        %v1737 = vand.u32 %v621, 4294901760
        %v1738 = vsub.f32 %v621, %v1737
        %v1739 = vand.u32 %v1738, 4294901760
        %1740 = vmatpush1.msra.mxu0 %v1739
        %1741 = vmatprep.subr.mxu0 0.0
        %v1742 = vand.u32 %v622, 4294901760
        %v1743 = vsub.f32 %v622, %v1742
        %v1744 = vand.u32 %v1743, 4294901760
        %1745 = vmatpush1.msra.mxu0 %v1744
        %1746 = vmatprep.subr.mxu0 0.0
        %v1747 = vand.u32 %v623, 4294901760
        %v1748 = vsub.f32 %v623, %v1747
        %v1749 = vand.u32 %v1748, 4294901760
        %1750 = vmatpush1.msra.mxu0 %v1749
        %1751 = vmatprep.subr.mxu0 0.0
        %v1752 = vand.u32 %v624, 4294901760
        %v1753 = vsub.f32 %v624, %v1752
        %v1754 = vand.u32 %v1753, 4294901760
        %1755 = vmatpush1.msra.mxu0 %v1754
        %1756 = vmatprep.subr.mxu0 0.0
        %v1757 = vand.u32 %v625, 4294901760
        %v1758 = vsub.f32 %v625, %v1757
        %v1759 = vand.u32 %v1758, 4294901760
        %1760 = vmatpush1.msra.mxu0 %v1759
        %1761 = vmatprep.subr.mxu0 0.0
        %v1762 = vand.u32 %v626, 4294901760
        %v1763 = vsub.f32 %v626, %v1762
        %v1764 = vand.u32 %v1763, 4294901760
        %1765 = vmatpush1.msra.mxu0 %v1764
        %1766 = vmatprep.subr.mxu0 0.0
        %v1767 = vand.u32 %v627, 4294901760
        %v1768 = vsub.f32 %v627, %v1767
        %v1769 = vand.u32 %v1768, 4294901760
        %1770 = vmatpush1.msra.mxu0 %v1769
        %1771 = vmatprep.subr.mxu0 0.0
        %v1772 = vand.u32 %v628, 4294901760
        %v1773 = vsub.f32 %v628, %v1772
        %v1774 = vand.u32 %v1773, 4294901760
        %1775 = vmatpush1.msra.mxu0 %v1774
        %1776 = vmatprep.subr.mxu0 0.0
        %v1777 = vand.u32 %v629, 4294901760
        %v1778 = vsub.f32 %v629, %v1777
        %v1779 = vand.u32 %v1778, 4294901760
        %1780 = vmatpush1.msra.mxu0 %v1779
        %1781 = vmatprep.subr.mxu0 0.0
        %v1782 = vand.u32 %v630, 4294901760
        %v1783 = vsub.f32 %v630, %v1782
        %v1784 = vand.u32 %v1783, 4294901760
        %1785 = vmatpush1.msra.mxu0 %v1784
        %1786 = vmatprep.subr.mxu0 0.0
        %v1787 = vand.u32 %v631, 4294901760
        %v1788 = vsub.f32 %v631, %v1787
        %v1789 = vand.u32 %v1788, 4294901760
        %1790 = vmatpush1.msra.mxu0 %v1789
        %1791 = vmatprep.subr.mxu0 0.0
        %v1792 = vand.u32 %v632, 4294901760
        %v1793 = vsub.f32 %v632, %v1792
        %v1794 = vand.u32 %v1793, 4294901760
        %1795 = vmatpush1.msra.mxu0 %v1794
        %1796 = vmatprep.subr.mxu0 0.0
        %v1797 = vand.u32 %v633, 4294901760
        %v1798 = vsub.f32 %v633, %v1797
        %v1799 = vand.u32 %v1798, 4294901760
        %1800 = vmatpush1.msra.mxu0 %v1799
        %1801 = vmatprep.subr.mxu0 0.0
        %v1802 = vand.u32 %v634, 4294901760
        %v1803 = vsub.f32 %v634, %v1802
        %v1804 = vand.u32 %v1803, 4294901760
        %1805 = vmatpush1.msra.mxu0 %v1804
        %1806 = vmatprep.subr.mxu0 0.0
        %v1807 = vand.u32 %v635, 4294901760
        %v1808 = vsub.f32 %v635, %v1807
        %v1809 = vand.u32 %v1808, 4294901760
        %1810 = vmatpush1.msra.mxu0 %v1809
        %1811 = vmatprep.subr.mxu0 0.0
        %v1812 = vand.u32 %v636, 4294901760
        %v1813 = vsub.f32 %v636, %v1812
        %v1814 = vand.u32 %v1813, 4294901760
        %1815 = vmatpush1.msra.mxu0 %v1814
        %1816 = vmatprep.subr.mxu0 0.0
        %v1817 = vand.u32 %v637, 4294901760
        %v1818 = vsub.f32 %v637, %v1817
        %v1819 = vand.u32 %v1818, 4294901760
        %1820 = vmatpush1.msra.mxu0 %v1819
        %1821 = vmatprep.subr.mxu0 0.0
        %v1822 = vand.u32 %v638, 4294901760
        %v1823 = vsub.f32 %v638, %v1822
        %v1824 = vand.u32 %v1823, 4294901760
        %1825 = vmatpush1.msra.mxu0 %v1824
        %1826 = vmatprep.subr.mxu0 0.0
        %v1827 = vand.u32 %v639, 4294901760
        %v1828 = vsub.f32 %v639, %v1827
        %v1829 = vand.u32 %v1828, 4294901760
        %1830 = vmatpush1.msra.mxu0 %v1829
        %1831 = vmatprep.subr.mxu0 0.0
        %v1832 = vand.u32 %v640, 4294901760
        %v1833 = vsub.f32 %v640, %v1832
        %v1834 = vand.u32 %v1833, 4294901760
        %1835 = vmatpush1.msra.mxu0 %v1834
        %1836 = vmatprep.subr.mxu0 0.0
        %v1837 = vand.u32 %v641, 4294901760
        %v1838 = vsub.f32 %v641, %v1837
        %v1839 = vand.u32 %v1838, 4294901760
        %1840 = vmatpush1.msra.mxu0 %v1839
        %v1841 = vand.u32 %v928, 4294901760
        %1842 = vmatprep.mubr.f32.mxu0 %v1841
        %v1843 = vand.u32 %v849, 4294901760
        %1844 = vmatmul.mubr.f32.gmra.mrb[0].mxu0 %v1843
        %v1845 = vpop.f32.mrb[0].mxu0
        %v1846 = vadd.f32 %v1678, %v1845
        %v1847 = vpop.f32.mrb[0].mxu0
        %1848 = vdwg.mxu0
        %1849 = vmatprep.subr.mxu0 0.0
        %v1850 = vand.u32 %v610, 4294901760
        %1851 = vmatpush1.msra.mxu0 %v1850
        %1852 = vmatprep.subr.mxu0 0.0
        %v1853 = vand.u32 %v611, 4294901760
        %1854 = vmatpush1.msra.mxu0 %v1853
        %1855 = vmatprep.subr.mxu0 0.0
        %v1856 = vand.u32 %v612, 4294901760
        %1857 = vmatpush1.msra.mxu0 %v1856
        %1858 = vmatprep.subr.mxu0 0.0
        %v1859 = vand.u32 %v613, 4294901760
        %1860 = vmatpush1.msra.mxu0 %v1859
        %1861 = vmatprep.subr.mxu0 0.0
        %v1862 = vand.u32 %v614, 4294901760
        %1863 = vmatpush1.msra.mxu0 %v1862
        %1864 = vmatprep.subr.mxu0 0.0
        %v1865 = vand.u32 %v615, 4294901760
        %1866 = vmatpush1.msra.mxu0 %v1865
        %1867 = vmatprep.subr.mxu0 0.0
        %v1868 = vand.u32 %v616, 4294901760
        %1869 = vmatpush1.msra.mxu0 %v1868
        %1870 = vmatprep.subr.mxu0 0.0
        %v1871 = vand.u32 %v617, 4294901760
        %1872 = vmatpush1.msra.mxu0 %v1871
        %1873 = vmatprep.subr.mxu0 0.0
        %v1874 = vand.u32 %v618, 4294901760
        %1875 = vmatpush1.msra.mxu0 %v1874
        %1876 = vmatprep.subr.mxu0 0.0
        %v1877 = vand.u32 %v619, 4294901760
        %1878 = vmatpush1.msra.mxu0 %v1877
        %1879 = vmatprep.subr.mxu0 0.0
        %v1880 = vand.u32 %v620, 4294901760
        %1881 = vmatpush1.msra.mxu0 %v1880
        %1882 = vmatprep.subr.mxu0 0.0
        %v1883 = vand.u32 %v621, 4294901760
        %1884 = vmatpush1.msra.mxu0 %v1883
        %1885 = vmatprep.subr.mxu0 0.0
        %v1886 = vand.u32 %v622, 4294901760
        %1887 = vmatpush1.msra.mxu0 %v1886
        %1888 = vmatprep.subr.mxu0 0.0
        %v1889 = vand.u32 %v623, 4294901760
        %1890 = vmatpush1.msra.mxu0 %v1889
        %1891 = vmatprep.subr.mxu0 0.0
        %v1892 = vand.u32 %v624, 4294901760
        %1893 = vmatpush1.msra.mxu0 %v1892
        %1894 = vmatprep.subr.mxu0 0.0
        %v1895 = vand.u32 %v625, 4294901760
        %1896 = vmatpush1.msra.mxu0 %v1895
        %1897 = vmatprep.subr.mxu0 0.0
        %v1898 = vand.u32 %v626, 4294901760
        %1899 = vmatpush1.msra.mxu0 %v1898
        %1900 = vmatprep.subr.mxu0 0.0
        %v1901 = vand.u32 %v627, 4294901760
        %1902 = vmatpush1.msra.mxu0 %v1901
        %1903 = vmatprep.subr.mxu0 0.0
        %v1904 = vand.u32 %v628, 4294901760
        %1905 = vmatpush1.msra.mxu0 %v1904
        %1906 = vmatprep.subr.mxu0 0.0
        %v1907 = vand.u32 %v629, 4294901760
        %1908 = vmatpush1.msra.mxu0 %v1907
        %1909 = vmatprep.subr.mxu0 0.0
        %v1910 = vand.u32 %v630, 4294901760
        %1911 = vmatpush1.msra.mxu0 %v1910
        %1912 = vmatprep.subr.mxu0 0.0
        %v1913 = vand.u32 %v631, 4294901760
        %1914 = vmatpush1.msra.mxu0 %v1913
        %1915 = vmatprep.subr.mxu0 0.0
        %v1916 = vand.u32 %v632, 4294901760
        %1917 = vmatpush1.msra.mxu0 %v1916
        %1918 = vmatprep.subr.mxu0 0.0
        %v1919 = vand.u32 %v633, 4294901760
        %1920 = vmatpush1.msra.mxu0 %v1919
        %1921 = vmatprep.subr.mxu0 0.0
        %v1922 = vand.u32 %v634, 4294901760
        %1923 = vmatpush1.msra.mxu0 %v1922
        %1924 = vmatprep.subr.mxu0 0.0
        %v1925 = vand.u32 %v635, 4294901760
        %1926 = vmatpush1.msra.mxu0 %v1925
        %1927 = vmatprep.subr.mxu0 0.0
        %v1928 = vand.u32 %v636, 4294901760
        %1929 = vmatpush1.msra.mxu0 %v1928
        %1930 = vmatprep.subr.mxu0 0.0
        %v1931 = vand.u32 %v637, 4294901760
        %1932 = vmatpush1.msra.mxu0 %v1931
        %1933 = vmatprep.subr.mxu0 0.0
        %v1934 = vand.u32 %v638, 4294901760
        %1935 = vmatpush1.msra.mxu0 %v1934
        %1936 = vmatprep.subr.mxu0 0.0
        %v1937 = vand.u32 %v639, 4294901760
        %1938 = vmatpush1.msra.mxu0 %v1937
        %1939 = vmatprep.subr.mxu0 0.0
        %v1940 = vand.u32 %v640, 4294901760
        %1941 = vmatpush1.msra.mxu0 %v1940
        %1942 = vmatprep.subr.mxu0 0.0
        %v1943 = vand.u32 %v641, 4294901760
        %1944 = vmatpush1.msra.mxu0 %v1943
        %v1945 = vand.u32 %v928, 4294901760
        %1946 = vmatprep.mubr.f32.mxu0 %v1945
        %v1947 = vand.u32 %v849, 4294901760
        %1948 = vmatmul.mubr.f32.gmra.mrb[0].mxu0 %v1947
        %v1949 = vpop.f32.mrb[0].mxu0
        %v1950 = vadd.f32 %v1846, %v1949
        %v1951 = vpop.f32.mrb[0].mxu0
        %1952 = vdwg.mxu0
        %1953 = vmatprep.subr.mxu0 0.0
        %v1954 = vand.u32 %v642, 4294901760
        %1955 = vmatpush1.msra.mxu0 %v1954
        %1956 = vmatprep.subr.mxu0 0.0
        %v1957 = vand.u32 %v643, 4294901760
        %1958 = vmatpush1.msra.mxu0 %v1957
        %1959 = vmatprep.subr.mxu0 0.0
        %v1960 = vand.u32 %v644, 4294901760
        %1961 = vmatpush1.msra.mxu0 %v1960
        %1962 = vmatprep.subr.mxu0 0.0
        %v1963 = vand.u32 %v645, 4294901760
        %1964 = vmatpush1.msra.mxu0 %v1963
        %1965 = vmatprep.subr.mxu0 0.0
        %v1966 = vand.u32 %v646, 4294901760
        %1967 = vmatpush1.msra.mxu0 %v1966
        %1968 = vmatprep.subr.mxu0 0.0
        %v1969 = vand.u32 %v647, 4294901760
        %1970 = vmatpush1.msra.mxu0 %v1969
        %1971 = vmatprep.subr.mxu0 0.0
        %v1972 = vand.u32 %v648, 4294901760
        %1973 = vmatpush1.msra.mxu0 %v1972
        %1974 = vmatprep.subr.mxu0 0.0
        %v1975 = vand.u32 %v649, 4294901760
        %1976 = vmatpush1.msra.mxu0 %v1975
        %1977 = vmatprep.subr.mxu0 0.0
        %v1978 = vand.u32 %v650, 4294901760
        %1979 = vmatpush1.msra.mxu0 %v1978
        %1980 = vmatprep.subr.mxu0 0.0
        %v1981 = vand.u32 %v651, 4294901760
        %1982 = vmatpush1.msra.mxu0 %v1981
        %1983 = vmatprep.subr.mxu0 0.0
        %v1984 = vand.u32 %v652, 4294901760
        %1985 = vmatpush1.msra.mxu0 %v1984
        %1986 = vmatprep.subr.mxu0 0.0
        %v1987 = vand.u32 %v653, 4294901760
        %1988 = vmatpush1.msra.mxu0 %v1987
        %1989 = vmatprep.subr.mxu0 0.0
        %v1990 = vand.u32 %v654, 4294901760
        %1991 = vmatpush1.msra.mxu0 %v1990
        %1992 = vmatprep.subr.mxu0 0.0
        %v1993 = vand.u32 %v655, 4294901760
        %1994 = vmatpush1.msra.mxu0 %v1993
        %1995 = vmatprep.subr.mxu0 0.0
        %v1996 = vand.u32 %v656, 4294901760
        %1997 = vmatpush1.msra.mxu0 %v1996
        %1998 = vmatprep.subr.mxu0 0.0
        %v1999 = vand.u32 %v657, 4294901760
        %2000 = vmatpush1.msra.mxu0 %v1999
        %2001 = vmatprep.subr.mxu0 0.0
        %v2002 = vand.u32 %v658, 4294901760
        %2003 = vmatpush1.msra.mxu0 %v2002
        %2004 = vmatprep.subr.mxu0 0.0
        %v2005 = vand.u32 %v659, 4294901760
        %2006 = vmatpush1.msra.mxu0 %v2005
        %2007 = vmatprep.subr.mxu0 0.0
        %v2008 = vand.u32 %v660, 4294901760
        %2009 = vmatpush1.msra.mxu0 %v2008
        %2010 = vmatprep.subr.mxu0 0.0
        %v2011 = vand.u32 %v661, 4294901760
        %2012 = vmatpush1.msra.mxu0 %v2011
        %2013 = vmatprep.subr.mxu0 0.0
        %v2014 = vand.u32 %v662, 4294901760
        %2015 = vmatpush1.msra.mxu0 %v2014
        %2016 = vmatprep.subr.mxu0 0.0
        %v2017 = vand.u32 %v663, 4294901760
        %2018 = vmatpush1.msra.mxu0 %v2017
        %2019 = vmatprep.subr.mxu0 0.0
        %v2020 = vand.u32 %v664, 4294901760
        %2021 = vmatpush1.msra.mxu0 %v2020
        %2022 = vmatprep.subr.mxu0 0.0
        %v2023 = vand.u32 %v665, 4294901760
        %2024 = vmatpush1.msra.mxu0 %v2023
        %2025 = vmatprep.subr.mxu0 0.0
        %v2026 = vand.u32 %v666, 4294901760
        %2027 = vmatpush1.msra.mxu0 %v2026
        %2028 = vmatprep.subr.mxu0 0.0
        %v2029 = vand.u32 %v667, 4294901760
        %2030 = vmatpush1.msra.mxu0 %v2029
        %2031 = vmatprep.subr.mxu0 0.0
        %v2032 = vand.u32 %v668, 4294901760
        %2033 = vmatpush1.msra.mxu0 %v2032
        %2034 = vmatprep.subr.mxu0 0.0
        %v2035 = vand.u32 %v669, 4294901760
        %2036 = vmatpush1.msra.mxu0 %v2035
        %2037 = vmatprep.subr.mxu0 0.0
        %v2038 = vand.u32 %v670, 4294901760
        %2039 = vmatpush1.msra.mxu0 %v2038
        %2040 = vmatprep.subr.mxu0 0.0
        %v2041 = vand.u32 %v671, 4294901760
        %2042 = vmatpush1.msra.mxu0 %v2041
        %2043 = vmatprep.subr.mxu0 0.0
        %v2044 = vand.u32 %v672, 4294901760
        %2045 = vmatpush1.msra.mxu0 %v2044
        %2046 = vmatprep.subr.mxu0 0.0
        %v2047 = vand.u32 %v673, 4294901760
        %2048 = vmatpush1.msra.mxu0 %v2047
        %v2049 = vand.u32 %v1086, 4294901760
        %v2050 = vsub.f32 %v1086, %v2049
        %v2051 = vand.u32 %v2050, 4294901760
        %v2052 = vsub.f32 %v2050, %v2051
        %v2053 = vand.u32 %v2052, 4294901760
        %2054 = vmatprep.mubr.f32.mxu0 %v2053
        %v2055 = vand.u32 %v1007, 4294901760
        %v2056 = vsub.f32 %v1007, %v2055
        %v2057 = vand.u32 %v2056, 4294901760
        %v2058 = vsub.f32 %v2056, %v2057
        %v2059 = vand.u32 %v2058, 4294901760
        %2060 = vmatmul.mubr.f32.gmra.mrb[0].mxu0 %v2059
        %v2061 = vpop.f32.mrb[0].mxu0
        %v2062 = vadd.f32 %v1950, %v2061
        %v2063 = vpop.f32.mrb[0].mxu0
        %2064 = vdwg.mxu0
        %2065 = vmatprep.subr.mxu0 0.0
        %v2066 = vand.u32 %v642, 4294901760
        %v2067 = vsub.f32 %v642, %v2066
        %v2068 = vand.u32 %v2067, 4294901760
        %v2069 = vsub.f32 %v2067, %v2068
        %v2070 = vand.u32 %v2069, 4294901760
        %2071 = vmatpush1.msra.mxu0 %v2070
        %2072 = vmatprep.subr.mxu0 0.0
        %v2073 = vand.u32 %v643, 4294901760
        %v2074 = vsub.f32 %v643, %v2073
        %v2075 = vand.u32 %v2074, 4294901760
        %v2076 = vsub.f32 %v2074, %v2075
        %v2077 = vand.u32 %v2076, 4294901760
        %2078 = vmatpush1.msra.mxu0 %v2077
        %2079 = vmatprep.subr.mxu0 0.0
        %v2080 = vand.u32 %v644, 4294901760
        %v2081 = vsub.f32 %v644, %v2080
        %v2082 = vand.u32 %v2081, 4294901760
        %v2083 = vsub.f32 %v2081, %v2082
        %v2084 = vand.u32 %v2083, 4294901760
        %2085 = vmatpush1.msra.mxu0 %v2084
        %2086 = vmatprep.subr.mxu0 0.0
        %v2087 = vand.u32 %v645, 4294901760
        %v2088 = vsub.f32 %v645, %v2087
        %v2089 = vand.u32 %v2088, 4294901760
        %v2090 = vsub.f32 %v2088, %v2089
        %v2091 = vand.u32 %v2090, 4294901760
        %2092 = vmatpush1.msra.mxu0 %v2091
        %2093 = vmatprep.subr.mxu0 0.0
        %v2094 = vand.u32 %v646, 4294901760
        %v2095 = vsub.f32 %v646, %v2094
        %v2096 = vand.u32 %v2095, 4294901760
        %v2097 = vsub.f32 %v2095, %v2096
        %v2098 = vand.u32 %v2097, 4294901760
        %2099 = vmatpush1.msra.mxu0 %v2098
        %2100 = vmatprep.subr.mxu0 0.0
        %v2101 = vand.u32 %v647, 4294901760
        %v2102 = vsub.f32 %v647, %v2101
        %v2103 = vand.u32 %v2102, 4294901760
        %v2104 = vsub.f32 %v2102, %v2103
        %v2105 = vand.u32 %v2104, 4294901760
        %2106 = vmatpush1.msra.mxu0 %v2105
        %2107 = vmatprep.subr.mxu0 0.0
        %v2108 = vand.u32 %v648, 4294901760
        %v2109 = vsub.f32 %v648, %v2108
        %v2110 = vand.u32 %v2109, 4294901760
        %v2111 = vsub.f32 %v2109, %v2110
        %v2112 = vand.u32 %v2111, 4294901760
        %2113 = vmatpush1.msra.mxu0 %v2112
        %2114 = vmatprep.subr.mxu0 0.0
        %v2115 = vand.u32 %v649, 4294901760
        %v2116 = vsub.f32 %v649, %v2115
        %v2117 = vand.u32 %v2116, 4294901760
        %v2118 = vsub.f32 %v2116, %v2117
        %v2119 = vand.u32 %v2118, 4294901760
        %2120 = vmatpush1.msra.mxu0 %v2119
        %2121 = vmatprep.subr.mxu0 0.0
        %v2122 = vand.u32 %v650, 4294901760
        %v2123 = vsub.f32 %v650, %v2122
        %v2124 = vand.u32 %v2123, 4294901760
        %v2125 = vsub.f32 %v2123, %v2124
        %v2126 = vand.u32 %v2125, 4294901760
        %2127 = vmatpush1.msra.mxu0 %v2126
        %2128 = vmatprep.subr.mxu0 0.0
        %v2129 = vand.u32 %v651, 4294901760
        %v2130 = vsub.f32 %v651, %v2129
        %v2131 = vand.u32 %v2130, 4294901760
        %v2132 = vsub.f32 %v2130, %v2131
        %v2133 = vand.u32 %v2132, 4294901760
        %2134 = vmatpush1.msra.mxu0 %v2133
        %2135 = vmatprep.subr.mxu0 0.0
        %v2136 = vand.u32 %v652, 4294901760
        %v2137 = vsub.f32 %v652, %v2136
        %v2138 = vand.u32 %v2137, 4294901760
        %v2139 = vsub.f32 %v2137, %v2138
        %v2140 = vand.u32 %v2139, 4294901760
        %2141 = vmatpush1.msra.mxu0 %v2140
        %2142 = vmatprep.subr.mxu0 0.0
        %v2143 = vand.u32 %v653, 4294901760
        %v2144 = vsub.f32 %v653, %v2143
        %v2145 = vand.u32 %v2144, 4294901760
        %v2146 = vsub.f32 %v2144, %v2145
        %v2147 = vand.u32 %v2146, 4294901760
        %2148 = vmatpush1.msra.mxu0 %v2147
        %2149 = vmatprep.subr.mxu0 0.0
        %v2150 = vand.u32 %v654, 4294901760
        %v2151 = vsub.f32 %v654, %v2150
        %v2152 = vand.u32 %v2151, 4294901760
        %v2153 = vsub.f32 %v2151, %v2152
        %v2154 = vand.u32 %v2153, 4294901760
        %2155 = vmatpush1.msra.mxu0 %v2154
        %2156 = vmatprep.subr.mxu0 0.0
        %v2157 = vand.u32 %v655, 4294901760
        %v2158 = vsub.f32 %v655, %v2157
        %v2159 = vand.u32 %v2158, 4294901760
        %v2160 = vsub.f32 %v2158, %v2159
        %v2161 = vand.u32 %v2160, 4294901760
        %2162 = vmatpush1.msra.mxu0 %v2161
        %2163 = vmatprep.subr.mxu0 0.0
        %v2164 = vand.u32 %v656, 4294901760
        %v2165 = vsub.f32 %v656, %v2164
        %v2166 = vand.u32 %v2165, 4294901760
        %v2167 = vsub.f32 %v2165, %v2166
        %v2168 = vand.u32 %v2167, 4294901760
        %2169 = vmatpush1.msra.mxu0 %v2168
        %2170 = vmatprep.subr.mxu0 0.0
        %v2171 = vand.u32 %v657, 4294901760
        %v2172 = vsub.f32 %v657, %v2171
        %v2173 = vand.u32 %v2172, 4294901760
        %v2174 = vsub.f32 %v2172, %v2173
        %v2175 = vand.u32 %v2174, 4294901760
        %2176 = vmatpush1.msra.mxu0 %v2175
        %2177 = vmatprep.subr.mxu0 0.0
        %v2178 = vand.u32 %v658, 4294901760
        %v2179 = vsub.f32 %v658, %v2178
        %v2180 = vand.u32 %v2179, 4294901760
        %v2181 = vsub.f32 %v2179, %v2180
        %v2182 = vand.u32 %v2181, 4294901760
        %2183 = vmatpush1.msra.mxu0 %v2182
        %2184 = vmatprep.subr.mxu0 0.0
        %v2185 = vand.u32 %v659, 4294901760
        %v2186 = vsub.f32 %v659, %v2185
        %v2187 = vand.u32 %v2186, 4294901760
        %v2188 = vsub.f32 %v2186, %v2187
        %v2189 = vand.u32 %v2188, 4294901760
        %2190 = vmatpush1.msra.mxu0 %v2189
        %2191 = vmatprep.subr.mxu0 0.0
        %v2192 = vand.u32 %v660, 4294901760
        %v2193 = vsub.f32 %v660, %v2192
        %v2194 = vand.u32 %v2193, 4294901760
        %v2195 = vsub.f32 %v2193, %v2194
        %v2196 = vand.u32 %v2195, 4294901760
        %2197 = vmatpush1.msra.mxu0 %v2196
        %2198 = vmatprep.subr.mxu0 0.0
        %v2199 = vand.u32 %v661, 4294901760
        %v2200 = vsub.f32 %v661, %v2199
        %v2201 = vand.u32 %v2200, 4294901760
        %v2202 = vsub.f32 %v2200, %v2201
        %v2203 = vand.u32 %v2202, 4294901760
        %2204 = vmatpush1.msra.mxu0 %v2203
        %2205 = vmatprep.subr.mxu0 0.0
        %v2206 = vand.u32 %v662, 4294901760
        %v2207 = vsub.f32 %v662, %v2206
        %v2208 = vand.u32 %v2207, 4294901760
        %v2209 = vsub.f32 %v2207, %v2208
        %v2210 = vand.u32 %v2209, 4294901760
        %2211 = vmatpush1.msra.mxu0 %v2210
        %2212 = vmatprep.subr.mxu0 0.0
        %v2213 = vand.u32 %v663, 4294901760
        %v2214 = vsub.f32 %v663, %v2213
        %v2215 = vand.u32 %v2214, 4294901760
        %v2216 = vsub.f32 %v2214, %v2215
        %v2217 = vand.u32 %v2216, 4294901760
        %2218 = vmatpush1.msra.mxu0 %v2217
        %2219 = vmatprep.subr.mxu0 0.0
        %v2220 = vand.u32 %v664, 4294901760
        %v2221 = vsub.f32 %v664, %v2220
        %v2222 = vand.u32 %v2221, 4294901760
        %v2223 = vsub.f32 %v2221, %v2222
        %v2224 = vand.u32 %v2223, 4294901760
        %2225 = vmatpush1.msra.mxu0 %v2224
        %2226 = vmatprep.subr.mxu0 0.0
        %v2227 = vand.u32 %v665, 4294901760
        %v2228 = vsub.f32 %v665, %v2227
        %v2229 = vand.u32 %v2228, 4294901760
        %v2230 = vsub.f32 %v2228, %v2229
        %v2231 = vand.u32 %v2230, 4294901760
        %2232 = vmatpush1.msra.mxu0 %v2231
        %2233 = vmatprep.subr.mxu0 0.0
        %v2234 = vand.u32 %v666, 4294901760
        %v2235 = vsub.f32 %v666, %v2234
        %v2236 = vand.u32 %v2235, 4294901760
        %v2237 = vsub.f32 %v2235, %v2236
        %v2238 = vand.u32 %v2237, 4294901760
        %2239 = vmatpush1.msra.mxu0 %v2238
        %2240 = vmatprep.subr.mxu0 0.0
        %v2241 = vand.u32 %v667, 4294901760
        %v2242 = vsub.f32 %v667, %v2241
        %v2243 = vand.u32 %v2242, 4294901760
        %v2244 = vsub.f32 %v2242, %v2243
        %v2245 = vand.u32 %v2244, 4294901760
        %2246 = vmatpush1.msra.mxu0 %v2245
        %2247 = vmatprep.subr.mxu0 0.0
        %v2248 = vand.u32 %v668, 4294901760
        %v2249 = vsub.f32 %v668, %v2248
        %v2250 = vand.u32 %v2249, 4294901760
        %v2251 = vsub.f32 %v2249, %v2250
        %v2252 = vand.u32 %v2251, 4294901760
        %2253 = vmatpush1.msra.mxu0 %v2252
        %2254 = vmatprep.subr.mxu0 0.0
        %v2255 = vand.u32 %v669, 4294901760
        %v2256 = vsub.f32 %v669, %v2255
        %v2257 = vand.u32 %v2256, 4294901760
        %v2258 = vsub.f32 %v2256, %v2257
        %v2259 = vand.u32 %v2258, 4294901760
        %2260 = vmatpush1.msra.mxu0 %v2259
        %2261 = vmatprep.subr.mxu0 0.0
        %v2262 = vand.u32 %v670, 4294901760
        %v2263 = vsub.f32 %v670, %v2262
        %v2264 = vand.u32 %v2263, 4294901760
        %v2265 = vsub.f32 %v2263, %v2264
        %v2266 = vand.u32 %v2265, 4294901760
        %2267 = vmatpush1.msra.mxu0 %v2266
        %2268 = vmatprep.subr.mxu0 0.0
        %v2269 = vand.u32 %v671, 4294901760
        %v2270 = vsub.f32 %v671, %v2269
        %v2271 = vand.u32 %v2270, 4294901760
        %v2272 = vsub.f32 %v2270, %v2271
        %v2273 = vand.u32 %v2272, 4294901760
        %2274 = vmatpush1.msra.mxu0 %v2273
        %2275 = vmatprep.subr.mxu0 0.0
        %v2276 = vand.u32 %v672, 4294901760
        %v2277 = vsub.f32 %v672, %v2276
        %v2278 = vand.u32 %v2277, 4294901760
        %v2279 = vsub.f32 %v2277, %v2278
        %v2280 = vand.u32 %v2279, 4294901760
        %2281 = vmatpush1.msra.mxu0 %v2280
        %2282 = vmatprep.subr.mxu0 0.0
        %v2283 = vand.u32 %v673, 4294901760
        %v2284 = vsub.f32 %v673, %v2283
        %v2285 = vand.u32 %v2284, 4294901760
        %v2286 = vsub.f32 %v2284, %v2285
        %v2287 = vand.u32 %v2286, 4294901760
        %2288 = vmatpush1.msra.mxu0 %v2287
        %v2289 = vand.u32 %v1086, 4294901760
        %2290 = vmatprep.mubr.f32.mxu0 %v2289
        %v2291 = vand.u32 %v1007, 4294901760
        %2292 = vmatmul.mubr.f32.gmra.mrb[0].mxu0 %v2291
        %v2293 = vpop.f32.mrb[0].mxu0
        %v2294 = vadd.f32 %v2062, %v2293
        %v2295 = vpop.f32.mrb[0].mxu0
        %2296 = vdwg.mxu0
        %2297 = vmatprep.subr.mxu0 0.0
        %v2298 = vand.u32 %v642, 4294901760
        %v2299 = vsub.f32 %v642, %v2298
        %2300 = vmatpush1.msra.mxu0 %v2299
        %2301 = vmatprep.subr.mxu0 0.0
        %v2302 = vand.u32 %v643, 4294901760
        %v2303 = vsub.f32 %v643, %v2302
        %2304 = vmatpush1.msra.mxu0 %v2303
        %2305 = vmatprep.subr.mxu0 0.0
        %v2306 = vand.u32 %v644, 4294901760
        %v2307 = vsub.f32 %v644, %v2306
        %2308 = vmatpush1.msra.mxu0 %v2307
        %2309 = vmatprep.subr.mxu0 0.0
        %v2310 = vand.u32 %v645, 4294901760
        %v2311 = vsub.f32 %v645, %v2310
        %2312 = vmatpush1.msra.mxu0 %v2311
        %2313 = vmatprep.subr.mxu0 0.0
        %v2314 = vand.u32 %v646, 4294901760
        %v2315 = vsub.f32 %v646, %v2314
        %2316 = vmatpush1.msra.mxu0 %v2315
        %2317 = vmatprep.subr.mxu0 0.0
        %v2318 = vand.u32 %v647, 4294901760
        %v2319 = vsub.f32 %v647, %v2318
        %2320 = vmatpush1.msra.mxu0 %v2319
        %2321 = vmatprep.subr.mxu0 0.0
        %v2322 = vand.u32 %v648, 4294901760
        %v2323 = vsub.f32 %v648, %v2322
        %2324 = vmatpush1.msra.mxu0 %v2323
        %2325 = vmatprep.subr.mxu0 0.0
        %v2326 = vand.u32 %v649, 4294901760
        %v2327 = vsub.f32 %v649, %v2326
        %2328 = vmatpush1.msra.mxu0 %v2327
        %2329 = vmatprep.subr.mxu0 0.0
        %v2330 = vand.u32 %v650, 4294901760
        %v2331 = vsub.f32 %v650, %v2330
        %2332 = vmatpush1.msra.mxu0 %v2331
        %2333 = vmatprep.subr.mxu0 0.0
        %v2334 = vand.u32 %v651, 4294901760
        %v2335 = vsub.f32 %v651, %v2334
        %2336 = vmatpush1.msra.mxu0 %v2335
        %2337 = vmatprep.subr.mxu0 0.0
        %v2338 = vand.u32 %v652, 4294901760
        %v2339 = vsub.f32 %v652, %v2338
        %2340 = vmatpush1.msra.mxu0 %v2339
        %2341 = vmatprep.subr.mxu0 0.0
        %v2342 = vand.u32 %v653, 4294901760
        %v2343 = vsub.f32 %v653, %v2342
        %2344 = vmatpush1.msra.mxu0 %v2343
        %2345 = vmatprep.subr.mxu0 0.0
        %v2346 = vand.u32 %v654, 4294901760
        %v2347 = vsub.f32 %v654, %v2346
        %2348 = vmatpush1.msra.mxu0 %v2347
        %2349 = vmatprep.subr.mxu0 0.0
        %v2350 = vand.u32 %v655, 4294901760
        %v2351 = vsub.f32 %v655, %v2350
        %2352 = vmatpush1.msra.mxu0 %v2351
        %2353 = vmatprep.subr.mxu0 0.0
        %v2354 = vand.u32 %v656, 4294901760
        %v2355 = vsub.f32 %v656, %v2354
        %2356 = vmatpush1.msra.mxu0 %v2355
        %2357 = vmatprep.subr.mxu0 0.0
        %v2358 = vand.u32 %v657, 4294901760
        %v2359 = vsub.f32 %v657, %v2358
        %2360 = vmatpush1.msra.mxu0 %v2359
        %2361 = vmatprep.subr.mxu0 0.0
        %v2362 = vand.u32 %v658, 4294901760
        %v2363 = vsub.f32 %v658, %v2362
        %2364 = vmatpush1.msra.mxu0 %v2363
        %2365 = vmatprep.subr.mxu0 0.0
        %v2366 = vand.u32 %v659, 4294901760
        %v2367 = vsub.f32 %v659, %v2366
        %2368 = vmatpush1.msra.mxu0 %v2367
        %2369 = vmatprep.subr.mxu0 0.0
        %v2370 = vand.u32 %v660, 4294901760
        %v2371 = vsub.f32 %v660, %v2370
        %2372 = vmatpush1.msra.mxu0 %v2371
        %2373 = vmatprep.subr.mxu0 0.0
        %v2374 = vand.u32 %v661, 4294901760
        %v2375 = vsub.f32 %v661, %v2374
        %2376 = vmatpush1.msra.mxu0 %v2375
        %2377 = vmatprep.subr.mxu0 0.0
        %v2378 = vand.u32 %v662, 4294901760
        %v2379 = vsub.f32 %v662, %v2378
        %2380 = vmatpush1.msra.mxu0 %v2379
        %2381 = vmatprep.subr.mxu0 0.0
        %v2382 = vand.u32 %v663, 4294901760
        %v2383 = vsub.f32 %v663, %v2382
        %2384 = vmatpush1.msra.mxu0 %v2383
        %2385 = vmatprep.subr.mxu0 0.0
        %v2386 = vand.u32 %v664, 4294901760
        %v2387 = vsub.f32 %v664, %v2386
        %2388 = vmatpush1.msra.mxu0 %v2387
        %2389 = vmatprep.subr.mxu0 0.0
        %v2390 = vand.u32 %v665, 4294901760
        %v2391 = vsub.f32 %v665, %v2390
        %2392 = vmatpush1.msra.mxu0 %v2391
        %2393 = vmatprep.subr.mxu0 0.0
        %v2394 = vand.u32 %v666, 4294901760
        %v2395 = vsub.f32 %v666, %v2394
        %2396 = vmatpush1.msra.mxu0 %v2395
        %2397 = vmatprep.subr.mxu0 0.0
        %v2398 = vand.u32 %v667, 4294901760
        %v2399 = vsub.f32 %v667, %v2398
        %2400 = vmatpush1.msra.mxu0 %v2399
        %2401 = vmatprep.subr.mxu0 0.0
        %v2402 = vand.u32 %v668, 4294901760
        %v2403 = vsub.f32 %v668, %v2402
        %2404 = vmatpush1.msra.mxu0 %v2403
        %2405 = vmatprep.subr.mxu0 0.0
        %v2406 = vand.u32 %v669, 4294901760
        %v2407 = vsub.f32 %v669, %v2406
        %2408 = vmatpush1.msra.mxu0 %v2407
        %2409 = vmatprep.subr.mxu0 0.0
        %v2410 = vand.u32 %v670, 4294901760
        %v2411 = vsub.f32 %v670, %v2410
        %2412 = vmatpush1.msra.mxu0 %v2411
        %2413 = vmatprep.subr.mxu0 0.0
        %v2414 = vand.u32 %v671, 4294901760
        %v2415 = vsub.f32 %v671, %v2414
        %2416 = vmatpush1.msra.mxu0 %v2415
        %2417 = vmatprep.subr.mxu0 0.0
        %v2418 = vand.u32 %v672, 4294901760
        %v2419 = vsub.f32 %v672, %v2418
        %2420 = vmatpush1.msra.mxu0 %v2419
        %2421 = vmatprep.subr.mxu0 0.0
        %v2422 = vand.u32 %v673, 4294901760
        %v2423 = vsub.f32 %v673, %v2422
        %2424 = vmatpush1.msra.mxu0 %v2423
        %v2425 = vand.u32 %v1086, 4294901760
        %v2426 = vsub.f32 %v1086, %v2425
        %2427 = vmatprep.mubr.f32.mxu0 %v2426
        %v2428 = vand.u32 %v1007, 4294901760
        %v2429 = vsub.f32 %v1007, %v2428
        %2430 = vmatmul.mubr.f32.gmra.mrb[0].mxu0 %v2429
        %v2431 = vpop.f32.mrb[0].mxu0
        %v2432 = vadd.f32 %v2294, %v2431
        %v2433 = vpop.f32.mrb[0].mxu0
        %2434 = vdwg.mxu0
        %2435 = vmatprep.subr.mxu0 0.0
        %v2436 = vand.u32 %v642, 4294901760
        %2437 = vmatpush1.msra.mxu0 %v2436
        %2438 = vmatprep.subr.mxu0 0.0
        %v2439 = vand.u32 %v643, 4294901760
        %2440 = vmatpush1.msra.mxu0 %v2439
        %2441 = vmatprep.subr.mxu0 0.0
        %v2442 = vand.u32 %v644, 4294901760
        %2443 = vmatpush1.msra.mxu0 %v2442
        %2444 = vmatprep.subr.mxu0 0.0
        %v2445 = vand.u32 %v645, 4294901760
        %2446 = vmatpush1.msra.mxu0 %v2445
        %2447 = vmatprep.subr.mxu0 0.0
        %v2448 = vand.u32 %v646, 4294901760
        %2449 = vmatpush1.msra.mxu0 %v2448
        %2450 = vmatprep.subr.mxu0 0.0
        %v2451 = vand.u32 %v647, 4294901760
        %2452 = vmatpush1.msra.mxu0 %v2451
        %2453 = vmatprep.subr.mxu0 0.0
        %v2454 = vand.u32 %v648, 4294901760
        %2455 = vmatpush1.msra.mxu0 %v2454
        %2456 = vmatprep.subr.mxu0 0.0
        %v2457 = vand.u32 %v649, 4294901760
        %2458 = vmatpush1.msra.mxu0 %v2457
        %2459 = vmatprep.subr.mxu0 0.0
        %v2460 = vand.u32 %v650, 4294901760
        %2461 = vmatpush1.msra.mxu0 %v2460
        %2462 = vmatprep.subr.mxu0 0.0
        %v2463 = vand.u32 %v651, 4294901760
        %2464 = vmatpush1.msra.mxu0 %v2463
        %2465 = vmatprep.subr.mxu0 0.0
        %v2466 = vand.u32 %v652, 4294901760
        %2467 = vmatpush1.msra.mxu0 %v2466
        %2468 = vmatprep.subr.mxu0 0.0
        %v2469 = vand.u32 %v653, 4294901760
        %2470 = vmatpush1.msra.mxu0 %v2469
        %2471 = vmatprep.subr.mxu0 0.0
        %v2472 = vand.u32 %v654, 4294901760
        %2473 = vmatpush1.msra.mxu0 %v2472
        %2474 = vmatprep.subr.mxu0 0.0
        %v2475 = vand.u32 %v655, 4294901760
        %2476 = vmatpush1.msra.mxu0 %v2475
        %2477 = vmatprep.subr.mxu0 0.0
        %v2478 = vand.u32 %v656, 4294901760
        %2479 = vmatpush1.msra.mxu0 %v2478
        %2480 = vmatprep.subr.mxu0 0.0
        %v2481 = vand.u32 %v657, 4294901760
        %2482 = vmatpush1.msra.mxu0 %v2481
        %2483 = vmatprep.subr.mxu0 0.0
        %v2484 = vand.u32 %v658, 4294901760
        %2485 = vmatpush1.msra.mxu0 %v2484
        %2486 = vmatprep.subr.mxu0 0.0
        %v2487 = vand.u32 %v659, 4294901760
        %2488 = vmatpush1.msra.mxu0 %v2487
        %2489 = vmatprep.subr.mxu0 0.0
        %v2490 = vand.u32 %v660, 4294901760
        %2491 = vmatpush1.msra.mxu0 %v2490
        %2492 = vmatprep.subr.mxu0 0.0
        %v2493 = vand.u32 %v661, 4294901760
        %2494 = vmatpush1.msra.mxu0 %v2493
        %2495 = vmatprep.subr.mxu0 0.0
        %v2496 = vand.u32 %v662, 4294901760
        %2497 = vmatpush1.msra.mxu0 %v2496
        %2498 = vmatprep.subr.mxu0 0.0
        %v2499 = vand.u32 %v663, 4294901760
        %2500 = vmatpush1.msra.mxu0 %v2499
        %2501 = vmatprep.subr.mxu0 0.0
        %v2502 = vand.u32 %v664, 4294901760
        %2503 = vmatpush1.msra.mxu0 %v2502
        %2504 = vmatprep.subr.mxu0 0.0
        %v2505 = vand.u32 %v665, 4294901760
        %2506 = vmatpush1.msra.mxu0 %v2505
        %2507 = vmatprep.subr.mxu0 0.0
        %v2508 = vand.u32 %v666, 4294901760
        %2509 = vmatpush1.msra.mxu0 %v2508
        %2510 = vmatprep.subr.mxu0 0.0
        %v2511 = vand.u32 %v667, 4294901760
        %2512 = vmatpush1.msra.mxu0 %v2511
        %2513 = vmatprep.subr.mxu0 0.0
        %v2514 = vand.u32 %v668, 4294901760
        %2515 = vmatpush1.msra.mxu0 %v2514
        %2516 = vmatprep.subr.mxu0 0.0
        %v2517 = vand.u32 %v669, 4294901760
        %2518 = vmatpush1.msra.mxu0 %v2517
        %2519 = vmatprep.subr.mxu0 0.0
        %v2520 = vand.u32 %v670, 4294901760
        %2521 = vmatpush1.msra.mxu0 %v2520
        %2522 = vmatprep.subr.mxu0 0.0
        %v2523 = vand.u32 %v671, 4294901760
        %2524 = vmatpush1.msra.mxu0 %v2523
        %2525 = vmatprep.subr.mxu0 0.0
        %v2526 = vand.u32 %v672, 4294901760
        %2527 = vmatpush1.msra.mxu0 %v2526
        %2528 = vmatprep.subr.mxu0 0.0
        %v2529 = vand.u32 %v673, 4294901760
        %2530 = vmatpush1.msra.mxu0 %v2529
        %v2531 = vand.u32 %v1086, 4294901760
        %v2532 = vsub.f32 %v1086, %v2531
        %v2533 = vand.u32 %v2532, 4294901760
        %2534 = vmatprep.mubr.f32.mxu0 %v2533
        %v2535 = vand.u32 %v1007, 4294901760
        %v2536 = vsub.f32 %v1007, %v2535
        %v2537 = vand.u32 %v2536, 4294901760
        %2538 = vmatmul.mubr.f32.gmra.mrb[0].mxu0 %v2537
        %v2539 = vpop.f32.mrb[0].mxu0
        %v2540 = vadd.f32 %v2432, %v2539
        %v2541 = vpop.f32.mrb[0].mxu0
        %2542 = vdwg.mxu0
        %2543 = vmatprep.subr.mxu0 0.0
        %v2544 = vand.u32 %v642, 4294901760
        %v2545 = vsub.f32 %v642, %v2544
        %v2546 = vand.u32 %v2545, 4294901760
        %2547 = vmatpush1.msra.mxu0 %v2546
        %2548 = vmatprep.subr.mxu0 0.0
        %v2549 = vand.u32 %v643, 4294901760
        %v2550 = vsub.f32 %v643, %v2549
        %v2551 = vand.u32 %v2550, 4294901760
        %2552 = vmatpush1.msra.mxu0 %v2551
        %2553 = vmatprep.subr.mxu0 0.0
        %v2554 = vand.u32 %v644, 4294901760
        %v2555 = vsub.f32 %v644, %v2554
        %v2556 = vand.u32 %v2555, 4294901760
        %2557 = vmatpush1.msra.mxu0 %v2556
        %2558 = vmatprep.subr.mxu0 0.0
        %v2559 = vand.u32 %v645, 4294901760
        %v2560 = vsub.f32 %v645, %v2559
        %v2561 = vand.u32 %v2560, 4294901760
        %2562 = vmatpush1.msra.mxu0 %v2561
        %2563 = vmatprep.subr.mxu0 0.0
        %v2564 = vand.u32 %v646, 4294901760
        %v2565 = vsub.f32 %v646, %v2564
        %v2566 = vand.u32 %v2565, 4294901760
        %2567 = vmatpush1.msra.mxu0 %v2566
        %2568 = vmatprep.subr.mxu0 0.0
        %v2569 = vand.u32 %v647, 4294901760
        %v2570 = vsub.f32 %v647, %v2569
        %v2571 = vand.u32 %v2570, 4294901760
        %2572 = vmatpush1.msra.mxu0 %v2571
        %2573 = vmatprep.subr.mxu0 0.0
        %v2574 = vand.u32 %v648, 4294901760
        %v2575 = vsub.f32 %v648, %v2574
        %v2576 = vand.u32 %v2575, 4294901760
        %2577 = vmatpush1.msra.mxu0 %v2576
        %2578 = vmatprep.subr.mxu0 0.0
        %v2579 = vand.u32 %v649, 4294901760
        %v2580 = vsub.f32 %v649, %v2579
        %v2581 = vand.u32 %v2580, 4294901760
        %2582 = vmatpush1.msra.mxu0 %v2581
        %2583 = vmatprep.subr.mxu0 0.0
        %v2584 = vand.u32 %v650, 4294901760
        %v2585 = vsub.f32 %v650, %v2584
        %v2586 = vand.u32 %v2585, 4294901760
        %2587 = vmatpush1.msra.mxu0 %v2586
        %2588 = vmatprep.subr.mxu0 0.0
        %v2589 = vand.u32 %v651, 4294901760
        %v2590 = vsub.f32 %v651, %v2589
        %v2591 = vand.u32 %v2590, 4294901760
        %2592 = vmatpush1.msra.mxu0 %v2591
        %2593 = vmatprep.subr.mxu0 0.0
        %v2594 = vand.u32 %v652, 4294901760
        %v2595 = vsub.f32 %v652, %v2594
        %v2596 = vand.u32 %v2595, 4294901760
        %2597 = vmatpush1.msra.mxu0 %v2596
        %2598 = vmatprep.subr.mxu0 0.0
        %v2599 = vand.u32 %v653, 4294901760
        %v2600 = vsub.f32 %v653, %v2599
        %v2601 = vand.u32 %v2600, 4294901760
        %2602 = vmatpush1.msra.mxu0 %v2601
        %2603 = vmatprep.subr.mxu0 0.0
        %v2604 = vand.u32 %v654, 4294901760
        %v2605 = vsub.f32 %v654, %v2604
        %v2606 = vand.u32 %v2605, 4294901760
        %2607 = vmatpush1.msra.mxu0 %v2606
        %2608 = vmatprep.subr.mxu0 0.0
        %v2609 = vand.u32 %v655, 4294901760
        %v2610 = vsub.f32 %v655, %v2609
        %v2611 = vand.u32 %v2610, 4294901760
        %2612 = vmatpush1.msra.mxu0 %v2611
        %2613 = vmatprep.subr.mxu0 0.0
        %v2614 = vand.u32 %v656, 4294901760
        %v2615 = vsub.f32 %v656, %v2614
        %v2616 = vand.u32 %v2615, 4294901760
        %2617 = vmatpush1.msra.mxu0 %v2616
        %2618 = vmatprep.subr.mxu0 0.0
        %v2619 = vand.u32 %v657, 4294901760
        %v2620 = vsub.f32 %v657, %v2619
        %v2621 = vand.u32 %v2620, 4294901760
        %2622 = vmatpush1.msra.mxu0 %v2621
        %2623 = vmatprep.subr.mxu0 0.0
        %v2624 = vand.u32 %v658, 4294901760
        %v2625 = vsub.f32 %v658, %v2624
        %v2626 = vand.u32 %v2625, 4294901760
        %2627 = vmatpush1.msra.mxu0 %v2626
        %2628 = vmatprep.subr.mxu0 0.0
        %v2629 = vand.u32 %v659, 4294901760
        %v2630 = vsub.f32 %v659, %v2629
        %v2631 = vand.u32 %v2630, 4294901760
        %2632 = vmatpush1.msra.mxu0 %v2631
        %2633 = vmatprep.subr.mxu0 0.0
        %v2634 = vand.u32 %v660, 4294901760
        %v2635 = vsub.f32 %v660, %v2634
        %v2636 = vand.u32 %v2635, 4294901760
        %2637 = vmatpush1.msra.mxu0 %v2636
        %2638 = vmatprep.subr.mxu0 0.0
        %v2639 = vand.u32 %v661, 4294901760
        %v2640 = vsub.f32 %v661, %v2639
        %v2641 = vand.u32 %v2640, 4294901760
        %2642 = vmatpush1.msra.mxu0 %v2641
        %2643 = vmatprep.subr.mxu0 0.0
        %v2644 = vand.u32 %v662, 4294901760
        %v2645 = vsub.f32 %v662, %v2644
        %v2646 = vand.u32 %v2645, 4294901760
        %2647 = vmatpush1.msra.mxu0 %v2646
        %2648 = vmatprep.subr.mxu0 0.0
        %v2649 = vand.u32 %v663, 4294901760
        %v2650 = vsub.f32 %v663, %v2649
        %v2651 = vand.u32 %v2650, 4294901760
        %2652 = vmatpush1.msra.mxu0 %v2651
        %2653 = vmatprep.subr.mxu0 0.0
        %v2654 = vand.u32 %v664, 4294901760
        %v2655 = vsub.f32 %v664, %v2654
        %v2656 = vand.u32 %v2655, 4294901760
        %2657 = vmatpush1.msra.mxu0 %v2656
        %2658 = vmatprep.subr.mxu0 0.0
        %v2659 = vand.u32 %v665, 4294901760
        %v2660 = vsub.f32 %v665, %v2659
        %v2661 = vand.u32 %v2660, 4294901760
        %2662 = vmatpush1.msra.mxu0 %v2661
        %2663 = vmatprep.subr.mxu0 0.0
        %v2664 = vand.u32 %v666, 4294901760
        %v2665 = vsub.f32 %v666, %v2664
        %v2666 = vand.u32 %v2665, 4294901760
        %2667 = vmatpush1.msra.mxu0 %v2666
        %2668 = vmatprep.subr.mxu0 0.0
        %v2669 = vand.u32 %v667, 4294901760
        %v2670 = vsub.f32 %v667, %v2669
        %v2671 = vand.u32 %v2670, 4294901760
        %2672 = vmatpush1.msra.mxu0 %v2671
        %2673 = vmatprep.subr.mxu0 0.0
        %v2674 = vand.u32 %v668, 4294901760
        %v2675 = vsub.f32 %v668, %v2674
        %v2676 = vand.u32 %v2675, 4294901760
        %2677 = vmatpush1.msra.mxu0 %v2676
        %2678 = vmatprep.subr.mxu0 0.0
        %v2679 = vand.u32 %v669, 4294901760
        %v2680 = vsub.f32 %v669, %v2679
        %v2681 = vand.u32 %v2680, 4294901760
        %2682 = vmatpush1.msra.mxu0 %v2681
        %2683 = vmatprep.subr.mxu0 0.0
        %v2684 = vand.u32 %v670, 4294901760
        %v2685 = vsub.f32 %v670, %v2684
        %v2686 = vand.u32 %v2685, 4294901760
        %2687 = vmatpush1.msra.mxu0 %v2686
        %2688 = vmatprep.subr.mxu0 0.0
        %v2689 = vand.u32 %v671, 4294901760
        %v2690 = vsub.f32 %v671, %v2689
        %v2691 = vand.u32 %v2690, 4294901760
        %2692 = vmatpush1.msra.mxu0 %v2691
        %2693 = vmatprep.subr.mxu0 0.0
        %v2694 = vand.u32 %v672, 4294901760
        %v2695 = vsub.f32 %v672, %v2694
        %v2696 = vand.u32 %v2695, 4294901760
        %2697 = vmatpush1.msra.mxu0 %v2696
        %2698 = vmatprep.subr.mxu0 0.0
        %v2699 = vand.u32 %v673, 4294901760
        %v2700 = vsub.f32 %v673, %v2699
        %v2701 = vand.u32 %v2700, 4294901760
        %2702 = vmatpush1.msra.mxu0 %v2701
        %v2703 = vand.u32 %v1086, 4294901760
        %2704 = vmatprep.mubr.f32.mxu0 %v2703
        %v2705 = vand.u32 %v1007, 4294901760
        %2706 = vmatmul.mubr.f32.gmra.mrb[0].mxu0 %v2705
        %v2707 = vpop.f32.mrb[0].mxu0
        %v2708 = vadd.f32 %v2540, %v2707
        %v2709 = vpop.f32.mrb[0].mxu0
        %2710 = vdwg.mxu0
        %2711 = vmatprep.subr.mxu0 0.0
        %v2712 = vand.u32 %v642, 4294901760
        %2713 = vmatpush1.msra.mxu0 %v2712
        %2714 = vmatprep.subr.mxu0 0.0
        %v2715 = vand.u32 %v643, 4294901760
        %2716 = vmatpush1.msra.mxu0 %v2715
        %2717 = vmatprep.subr.mxu0 0.0
        %v2718 = vand.u32 %v644, 4294901760
        %2719 = vmatpush1.msra.mxu0 %v2718
        %2720 = vmatprep.subr.mxu0 0.0
        %v2721 = vand.u32 %v645, 4294901760
        %2722 = vmatpush1.msra.mxu0 %v2721
        %2723 = vmatprep.subr.mxu0 0.0
        %v2724 = vand.u32 %v646, 4294901760
        %2725 = vmatpush1.msra.mxu0 %v2724
        %2726 = vmatprep.subr.mxu0 0.0
        %v2727 = vand.u32 %v647, 4294901760
        %2728 = vmatpush1.msra.mxu0 %v2727
        %2729 = vmatprep.subr.mxu0 0.0
        %v2730 = vand.u32 %v648, 4294901760
        %2731 = vmatpush1.msra.mxu0 %v2730
        %2732 = vmatprep.subr.mxu0 0.0
        %v2733 = vand.u32 %v649, 4294901760
        %2734 = vmatpush1.msra.mxu0 %v2733
        %2735 = vmatprep.subr.mxu0 0.0
        %v2736 = vand.u32 %v650, 4294901760
        %2737 = vmatpush1.msra.mxu0 %v2736
        %2738 = vmatprep.subr.mxu0 0.0
        %v2739 = vand.u32 %v651, 4294901760
        %2740 = vmatpush1.msra.mxu0 %v2739
        %2741 = vmatprep.subr.mxu0 0.0
        %v2742 = vand.u32 %v652, 4294901760
        %2743 = vmatpush1.msra.mxu0 %v2742
        %2744 = vmatprep.subr.mxu0 0.0
        %v2745 = vand.u32 %v653, 4294901760
        %2746 = vmatpush1.msra.mxu0 %v2745
        %2747 = vmatprep.subr.mxu0 0.0
        %v2748 = vand.u32 %v654, 4294901760
        %2749 = vmatpush1.msra.mxu0 %v2748
        %2750 = vmatprep.subr.mxu0 0.0
        %v2751 = vand.u32 %v655, 4294901760
        %2752 = vmatpush1.msra.mxu0 %v2751
        %2753 = vmatprep.subr.mxu0 0.0
        %v2754 = vand.u32 %v656, 4294901760
        %2755 = vmatpush1.msra.mxu0 %v2754
        %2756 = vmatprep.subr.mxu0 0.0
        %v2757 = vand.u32 %v657, 4294901760
        %2758 = vmatpush1.msra.mxu0 %v2757
        %2759 = vmatprep.subr.mxu0 0.0
        %v2760 = vand.u32 %v658, 4294901760
        %2761 = vmatpush1.msra.mxu0 %v2760
        %2762 = vmatprep.subr.mxu0 0.0
        %v2763 = vand.u32 %v659, 4294901760
        %2764 = vmatpush1.msra.mxu0 %v2763
        %2765 = vmatprep.subr.mxu0 0.0
        %v2766 = vand.u32 %v660, 4294901760
        %2767 = vmatpush1.msra.mxu0 %v2766
        %2768 = vmatprep.subr.mxu0 0.0
        %v2769 = vand.u32 %v661, 4294901760
        %2770 = vmatpush1.msra.mxu0 %v2769
        %2771 = vmatprep.subr.mxu0 0.0
        %v2772 = vand.u32 %v662, 4294901760
        %2773 = vmatpush1.msra.mxu0 %v2772
        %2774 = vmatprep.subr.mxu0 0.0
        %v2775 = vand.u32 %v663, 4294901760
        %2776 = vmatpush1.msra.mxu0 %v2775
        %2777 = vmatprep.subr.mxu0 0.0
        %v2778 = vand.u32 %v664, 4294901760
        %2779 = vmatpush1.msra.mxu0 %v2778
        %2780 = vmatprep.subr.mxu0 0.0
        %v2781 = vand.u32 %v665, 4294901760
        %2782 = vmatpush1.msra.mxu0 %v2781
        %2783 = vmatprep.subr.mxu0 0.0
        %v2784 = vand.u32 %v666, 4294901760
        %2785 = vmatpush1.msra.mxu0 %v2784
        %2786 = vmatprep.subr.mxu0 0.0
        %v2787 = vand.u32 %v667, 4294901760
        %2788 = vmatpush1.msra.mxu0 %v2787
        %2789 = vmatprep.subr.mxu0 0.0
        %v2790 = vand.u32 %v668, 4294901760
        %2791 = vmatpush1.msra.mxu0 %v2790
        %2792 = vmatprep.subr.mxu0 0.0
        %v2793 = vand.u32 %v669, 4294901760
        %2794 = vmatpush1.msra.mxu0 %v2793
        %2795 = vmatprep.subr.mxu0 0.0
        %v2796 = vand.u32 %v670, 4294901760
        %2797 = vmatpush1.msra.mxu0 %v2796
        %2798 = vmatprep.subr.mxu0 0.0
        %v2799 = vand.u32 %v671, 4294901760
        %2800 = vmatpush1.msra.mxu0 %v2799
        %2801 = vmatprep.subr.mxu0 0.0
        %v2802 = vand.u32 %v672, 4294901760
        %2803 = vmatpush1.msra.mxu0 %v2802
        %2804 = vmatprep.subr.mxu0 0.0
        %v2805 = vand.u32 %v673, 4294901760
        %2806 = vmatpush1.msra.mxu0 %v2805
        %v2807 = vand.u32 %v1086, 4294901760
        %2808 = vmatprep.mubr.f32.mxu0 %v2807
        %v2809 = vand.u32 %v1007, 4294901760
        %2810 = vmatmul.mubr.f32.gmra.mrb[0].mxu0 %v2809
        %v2811 = vpop.f32.mrb[0].mxu0
        %v2812 = vadd.f32 %v2708, %v2811
        %v2813 = vpop.f32.mrb[0].mxu0
        %2814 = vdwg.mxu0
        %v2815 = vmax.f32 %v2812, 0.0
        %v2816 = vld [vmem:[%s3] sm:$0xff]
        %v2817 = vld [vmem:[%s3 + $0x8] sm:$0xff]
        %v2818 = vld [vmem:[%s3 + $0x10] sm:$0xff]
        %v2819 = vld [vmem:[%s3 + $0x18] sm:$0xff]
        %v2820 = vld [vmem:[%s3 + $0x20] sm:$0xff]
        %v2821 = vld [vmem:[%s3 + $0x28] sm:$0xff]
        %v2822 = vld [vmem:[%s3 + $0x30] sm:$0xff]
        %v2823 = vld [vmem:[%s3 + $0x38] sm:$0xff]
        %v2824 = vld [vmem:[%s3 + $0x40] sm:$0xff]
        %v2825 = vld [vmem:[%s3 + $0x48] sm:$0xff]
        %v2826 = vld [vmem:[%s3 + $0x50] sm:$0xff]
        %v2827 = vld [vmem:[%s3 + $0x58] sm:$0xff]
        %v2828 = vld [vmem:[%s3 + $0x60] sm:$0xff]
        %v2829 = vld [vmem:[%s3 + $0x68] sm:$0xff]
        %v2830 = vld [vmem:[%s3 + $0x70] sm:$0xff]
        %v2831 = vld [vmem:[%s3 + $0x78] sm:$0xff]
        %v2832 = vld [vmem:[%s4] sm:$0x1]
        %2833 = vmatprep.subr.mxu0 0.0
        %v2834 = vand.u32 %v2816, 4294901760
        %2835 = vmatpush1.msra.mxu0 %v2834
        %2836 = vmatprep.subr.mxu0 0.0
        %v2837 = vand.u32 %v2817, 4294901760
        %2838 = vmatpush1.msra.mxu0 %v2837
        %2839 = vmatprep.subr.mxu0 0.0
        %v2840 = vand.u32 %v2818, 4294901760
        %2841 = vmatpush1.msra.mxu0 %v2840
        %2842 = vmatprep.subr.mxu0 0.0
        %v2843 = vand.u32 %v2819, 4294901760
        %2844 = vmatpush1.msra.mxu0 %v2843
        %2845 = vmatprep.subr.mxu0 0.0
        %v2846 = vand.u32 %v2820, 4294901760
        %2847 = vmatpush1.msra.mxu0 %v2846
        %2848 = vmatprep.subr.mxu0 0.0
        %v2849 = vand.u32 %v2821, 4294901760
        %2850 = vmatpush1.msra.mxu0 %v2849
        %2851 = vmatprep.subr.mxu0 0.0
        %v2852 = vand.u32 %v2822, 4294901760
        %2853 = vmatpush1.msra.mxu0 %v2852
        %2854 = vmatprep.subr.mxu0 0.0
        %v2855 = vand.u32 %v2823, 4294901760
        %2856 = vmatpush1.msra.mxu0 %v2855
        %2857 = vmatprep.subr.mxu0 0.0
        %v2858 = vand.u32 %v2824, 4294901760
        %2859 = vmatpush1.msra.mxu0 %v2858
        %2860 = vmatprep.subr.mxu0 0.0
        %v2861 = vand.u32 %v2825, 4294901760
        %2862 = vmatpush1.msra.mxu0 %v2861
        %2863 = vmatprep.subr.mxu0 0.0
        %v2864 = vand.u32 %v2826, 4294901760
        %2865 = vmatpush1.msra.mxu0 %v2864
        %2866 = vmatprep.subr.mxu0 0.0
        %v2867 = vand.u32 %v2827, 4294901760
        %2868 = vmatpush1.msra.mxu0 %v2867
        %2869 = vmatprep.subr.mxu0 0.0
        %v2870 = vand.u32 %v2828, 4294901760
        %2871 = vmatpush1.msra.mxu0 %v2870
        %2872 = vmatprep.subr.mxu0 0.0
        %v2873 = vand.u32 %v2829, 4294901760
        %2874 = vmatpush1.msra.mxu0 %v2873
        %2875 = vmatprep.subr.mxu0 0.0
        %v2876 = vand.u32 %v2830, 4294901760
        %2877 = vmatpush1.msra.mxu0 %v2876
        %2878 = vmatprep.subr.mxu0 0.0
        %v2879 = vand.u32 %v2831, 4294901760
        %2880 = vmatpush1.msra.mxu0 %v2879
        %2881 = vmatprep.subr.mxu0 0.0
        %2882 = vmatpush1.msra.mxu0 0.0
        %2883 = vmatprep.subr.mxu0 0.0
        %2884 = vmatpush1.msra.mxu0 0.0
        %2885 = vmatprep.subr.mxu0 0.0
        %2886 = vmatpush1.msra.mxu0 0.0
        %2887 = vmatprep.subr.mxu0 0.0
        %2888 = vmatpush1.msra.mxu0 0.0
        %2889 = vmatprep.subr.mxu0 0.0
        %2890 = vmatpush1.msra.mxu0 0.0
        %2891 = vmatprep.subr.mxu0 0.0
        %2892 = vmatpush1.msra.mxu0 0.0
        %2893 = vmatprep.subr.mxu0 0.0
        %2894 = vmatpush1.msra.mxu0 0.0
        %2895 = vmatprep.subr.mxu0 0.0
        %2896 = vmatpush1.msra.mxu0 0.0
        %2897 = vmatprep.subr.mxu0 0.0
        %2898 = vmatpush1.msra.mxu0 0.0
        %2899 = vmatprep.subr.mxu0 0.0
        %2900 = vmatpush1.msra.mxu0 0.0
        %2901 = vmatprep.subr.mxu0 0.0
        %2902 = vmatpush1.msra.mxu0 0.0
        %2903 = vmatprep.subr.mxu0 0.0
        %2904 = vmatpush1.msra.mxu0 0.0
        %2905 = vmatprep.subr.mxu0 0.0
        %2906 = vmatpush1.msra.mxu0 0.0
        %2907 = vmatprep.subr.mxu0 0.0
        %2908 = vmatpush1.msra.mxu0 0.0
        %2909 = vmatprep.subr.mxu0 0.0
        %2910 = vmatpush1.msra.mxu0 0.0
        %2911 = vmatprep.subr.mxu0 0.0
        %2912 = vmatpush1.msra.mxu0 0.0
        %2913 = vmatprep.mubr.f32.mxu0 0.0
        %v2914 = vand.u32 %v2815, 4294901760
        %v2915 = vsub.f32 %v2815, %v2914
        %v2916 = vand.u32 %v2915, 4294901760
        %v2917 = vsub.f32 %v2915, %v2916
        %v2918 = vand.u32 %v2917, 4294901760
        %2919 = vmatmul.mubr.f32.gmra.mrb[0].mxu0 %v2918
        %v2920 = vpop.f32.mrb[0].mxu0
        %v2921 = vadd.f32 %v2832, %v2920
        %v2922 = vpop.f32.mrb[0].mxu0
        %2923 = vdwg.mxu0
        %2924 = vmatprep.subr.mxu0 0.0
        %v2925 = vand.u32 %v2816, 4294901760
        %v2926 = vsub.f32 %v2816, %v2925
        %v2927 = vand.u32 %v2926, 4294901760
        %v2928 = vsub.f32 %v2926, %v2927
        %v2929 = vand.u32 %v2928, 4294901760
        %2930 = vmatpush1.msra.mxu0 %v2929
        %2931 = vmatprep.subr.mxu0 0.0
        %v2932 = vand.u32 %v2817, 4294901760
        %v2933 = vsub.f32 %v2817, %v2932
        %v2934 = vand.u32 %v2933, 4294901760
        %v2935 = vsub.f32 %v2933, %v2934
        %v2936 = vand.u32 %v2935, 4294901760
        %2937 = vmatpush1.msra.mxu0 %v2936
        %2938 = vmatprep.subr.mxu0 0.0
        %v2939 = vand.u32 %v2818, 4294901760
        %v2940 = vsub.f32 %v2818, %v2939
        %v2941 = vand.u32 %v2940, 4294901760
        %v2942 = vsub.f32 %v2940, %v2941
        %v2943 = vand.u32 %v2942, 4294901760
        %2944 = vmatpush1.msra.mxu0 %v2943
        %2945 = vmatprep.subr.mxu0 0.0
        %v2946 = vand.u32 %v2819, 4294901760
        %v2947 = vsub.f32 %v2819, %v2946
        %v2948 = vand.u32 %v2947, 4294901760
        %v2949 = vsub.f32 %v2947, %v2948
        %v2950 = vand.u32 %v2949, 4294901760
        %2951 = vmatpush1.msra.mxu0 %v2950
        %2952 = vmatprep.subr.mxu0 0.0
        %v2953 = vand.u32 %v2820, 4294901760
        %v2954 = vsub.f32 %v2820, %v2953
        %v2955 = vand.u32 %v2954, 4294901760
        %v2956 = vsub.f32 %v2954, %v2955
        %v2957 = vand.u32 %v2956, 4294901760
        %2958 = vmatpush1.msra.mxu0 %v2957
        %2959 = vmatprep.subr.mxu0 0.0
        %v2960 = vand.u32 %v2821, 4294901760
        %v2961 = vsub.f32 %v2821, %v2960
        %v2962 = vand.u32 %v2961, 4294901760
        %v2963 = vsub.f32 %v2961, %v2962
        %v2964 = vand.u32 %v2963, 4294901760
        %2965 = vmatpush1.msra.mxu0 %v2964
        %2966 = vmatprep.subr.mxu0 0.0
        %v2967 = vand.u32 %v2822, 4294901760
        %v2968 = vsub.f32 %v2822, %v2967
        %v2969 = vand.u32 %v2968, 4294901760
        %v2970 = vsub.f32 %v2968, %v2969
        %v2971 = vand.u32 %v2970, 4294901760
        %2972 = vmatpush1.msra.mxu0 %v2971
        %2973 = vmatprep.subr.mxu0 0.0
        %v2974 = vand.u32 %v2823, 4294901760
        %v2975 = vsub.f32 %v2823, %v2974
        %v2976 = vand.u32 %v2975, 4294901760
        %v2977 = vsub.f32 %v2975, %v2976
        %v2978 = vand.u32 %v2977, 4294901760
        %2979 = vmatpush1.msra.mxu0 %v2978
        %2980 = vmatprep.subr.mxu0 0.0
        %v2981 = vand.u32 %v2824, 4294901760
        %v2982 = vsub.f32 %v2824, %v2981
        %v2983 = vand.u32 %v2982, 4294901760
        %v2984 = vsub.f32 %v2982, %v2983
        %v2985 = vand.u32 %v2984, 4294901760
        %2986 = vmatpush1.msra.mxu0 %v2985
        %2987 = vmatprep.subr.mxu0 0.0
        %v2988 = vand.u32 %v2825, 4294901760
        %v2989 = vsub.f32 %v2825, %v2988
        %v2990 = vand.u32 %v2989, 4294901760
        %v2991 = vsub.f32 %v2989, %v2990
        %v2992 = vand.u32 %v2991, 4294901760
        %2993 = vmatpush1.msra.mxu0 %v2992
        %2994 = vmatprep.subr.mxu0 0.0
        %v2995 = vand.u32 %v2826, 4294901760
        %v2996 = vsub.f32 %v2826, %v2995
        %v2997 = vand.u32 %v2996, 4294901760
        %v2998 = vsub.f32 %v2996, %v2997
        %v2999 = vand.u32 %v2998, 4294901760
        %3000 = vmatpush1.msra.mxu0 %v2999
        %3001 = vmatprep.subr.mxu0 0.0
        %v3002 = vand.u32 %v2827, 4294901760
        %v3003 = vsub.f32 %v2827, %v3002
        %v3004 = vand.u32 %v3003, 4294901760
        %v3005 = vsub.f32 %v3003, %v3004
        %v3006 = vand.u32 %v3005, 4294901760
        %3007 = vmatpush1.msra.mxu0 %v3006
        %3008 = vmatprep.subr.mxu0 0.0
        %v3009 = vand.u32 %v2828, 4294901760
        %v3010 = vsub.f32 %v2828, %v3009
        %v3011 = vand.u32 %v3010, 4294901760
        %v3012 = vsub.f32 %v3010, %v3011
        %v3013 = vand.u32 %v3012, 4294901760
        %3014 = vmatpush1.msra.mxu0 %v3013
        %3015 = vmatprep.subr.mxu0 0.0
        %v3016 = vand.u32 %v2829, 4294901760
        %v3017 = vsub.f32 %v2829, %v3016
        %v3018 = vand.u32 %v3017, 4294901760
        %v3019 = vsub.f32 %v3017, %v3018
        %v3020 = vand.u32 %v3019, 4294901760
        %3021 = vmatpush1.msra.mxu0 %v3020
        %3022 = vmatprep.subr.mxu0 0.0
        %v3023 = vand.u32 %v2830, 4294901760
        %v3024 = vsub.f32 %v2830, %v3023
        %v3025 = vand.u32 %v3024, 4294901760
        %v3026 = vsub.f32 %v3024, %v3025
        %v3027 = vand.u32 %v3026, 4294901760
        %3028 = vmatpush1.msra.mxu0 %v3027
        %3029 = vmatprep.subr.mxu0 0.0
        %v3030 = vand.u32 %v2831, 4294901760
        %v3031 = vsub.f32 %v2831, %v3030
        %v3032 = vand.u32 %v3031, 4294901760
        %v3033 = vsub.f32 %v3031, %v3032
        %v3034 = vand.u32 %v3033, 4294901760
        %3035 = vmatpush1.msra.mxu0 %v3034
        %3036 = vmatprep.subr.mxu0 0.0
        %3037 = vmatpush1.msra.mxu0 0.0
        %3038 = vmatprep.subr.mxu0 0.0
        %3039 = vmatpush1.msra.mxu0 0.0
        %3040 = vmatprep.subr.mxu0 0.0
        %3041 = vmatpush1.msra.mxu0 0.0
        %3042 = vmatprep.subr.mxu0 0.0
        %3043 = vmatpush1.msra.mxu0 0.0
        %3044 = vmatprep.subr.mxu0 0.0
        %3045 = vmatpush1.msra.mxu0 0.0
        %3046 = vmatprep.subr.mxu0 0.0
        %3047 = vmatpush1.msra.mxu0 0.0
        %3048 = vmatprep.subr.mxu0 0.0
        %3049 = vmatpush1.msra.mxu0 0.0
        %3050 = vmatprep.subr.mxu0 0.0
        %3051 = vmatpush1.msra.mxu0 0.0
        %3052 = vmatprep.subr.mxu0 0.0
        %3053 = vmatpush1.msra.mxu0 0.0
        %3054 = vmatprep.subr.mxu0 0.0
        %3055 = vmatpush1.msra.mxu0 0.0
        %3056 = vmatprep.subr.mxu0 0.0
        %3057 = vmatpush1.msra.mxu0 0.0
        %3058 = vmatprep.subr.mxu0 0.0
        %3059 = vmatpush1.msra.mxu0 0.0
        %3060 = vmatprep.subr.mxu0 0.0
        %3061 = vmatpush1.msra.mxu0 0.0
        %3062 = vmatprep.subr.mxu0 0.0
        %3063 = vmatpush1.msra.mxu0 0.0
        %3064 = vmatprep.subr.mxu0 0.0
        %3065 = vmatpush1.msra.mxu0 0.0
        %3066 = vmatprep.subr.mxu0 0.0
        %3067 = vmatpush1.msra.mxu0 0.0
        %3068 = vmatprep.mubr.f32.mxu0 0.0
        %v3069 = vand.u32 %v2815, 4294901760
        %3070 = vmatmul.mubr.f32.gmra.mrb[0].mxu0 %v3069
        %v3071 = vpop.f32.mrb[0].mxu0
        %v3072 = vadd.f32 %v2921, %v3071
        %v3073 = vpop.f32.mrb[0].mxu0
        %3074 = vdwg.mxu0
        %3075 = vmatprep.subr.mxu0 0.0
        %v3076 = vand.u32 %v2816, 4294901760
        %v3077 = vsub.f32 %v2816, %v3076
        %3078 = vmatpush1.msra.mxu0 %v3077
        %3079 = vmatprep.subr.mxu0 0.0
        %v3080 = vand.u32 %v2817, 4294901760
        %v3081 = vsub.f32 %v2817, %v3080
        %3082 = vmatpush1.msra.mxu0 %v3081
        %3083 = vmatprep.subr.mxu0 0.0
        %v3084 = vand.u32 %v2818, 4294901760
        %v3085 = vsub.f32 %v2818, %v3084
        %3086 = vmatpush1.msra.mxu0 %v3085
        %3087 = vmatprep.subr.mxu0 0.0
        %v3088 = vand.u32 %v2819, 4294901760
        %v3089 = vsub.f32 %v2819, %v3088
        %3090 = vmatpush1.msra.mxu0 %v3089
        %3091 = vmatprep.subr.mxu0 0.0
        %v3092 = vand.u32 %v2820, 4294901760
        %v3093 = vsub.f32 %v2820, %v3092
        %3094 = vmatpush1.msra.mxu0 %v3093
        %3095 = vmatprep.subr.mxu0 0.0
        %v3096 = vand.u32 %v2821, 4294901760
        %v3097 = vsub.f32 %v2821, %v3096
        %3098 = vmatpush1.msra.mxu0 %v3097
        %3099 = vmatprep.subr.mxu0 0.0
        %v3100 = vand.u32 %v2822, 4294901760
        %v3101 = vsub.f32 %v2822, %v3100
        %3102 = vmatpush1.msra.mxu0 %v3101
        %3103 = vmatprep.subr.mxu0 0.0
        %v3104 = vand.u32 %v2823, 4294901760
        %v3105 = vsub.f32 %v2823, %v3104
        %3106 = vmatpush1.msra.mxu0 %v3105
        %3107 = vmatprep.subr.mxu0 0.0
        %v3108 = vand.u32 %v2824, 4294901760
        %v3109 = vsub.f32 %v2824, %v3108
        %3110 = vmatpush1.msra.mxu0 %v3109
        %3111 = vmatprep.subr.mxu0 0.0
        %v3112 = vand.u32 %v2825, 4294901760
        %v3113 = vsub.f32 %v2825, %v3112
        %3114 = vmatpush1.msra.mxu0 %v3113
        %3115 = vmatprep.subr.mxu0 0.0
        %v3116 = vand.u32 %v2826, 4294901760
        %v3117 = vsub.f32 %v2826, %v3116
        %3118 = vmatpush1.msra.mxu0 %v3117
        %3119 = vmatprep.subr.mxu0 0.0
        %v3120 = vand.u32 %v2827, 4294901760
        %v3121 = vsub.f32 %v2827, %v3120
        %3122 = vmatpush1.msra.mxu0 %v3121
        %3123 = vmatprep.subr.mxu0 0.0
        %v3124 = vand.u32 %v2828, 4294901760
        %v3125 = vsub.f32 %v2828, %v3124
        %3126 = vmatpush1.msra.mxu0 %v3125
        %3127 = vmatprep.subr.mxu0 0.0
        %v3128 = vand.u32 %v2829, 4294901760
        %v3129 = vsub.f32 %v2829, %v3128
        %3130 = vmatpush1.msra.mxu0 %v3129
        %3131 = vmatprep.subr.mxu0 0.0
        %v3132 = vand.u32 %v2830, 4294901760
        %v3133 = vsub.f32 %v2830, %v3132
        %3134 = vmatpush1.msra.mxu0 %v3133
        %3135 = vmatprep.subr.mxu0 0.0
        %v3136 = vand.u32 %v2831, 4294901760
        %v3137 = vsub.f32 %v2831, %v3136
        %3138 = vmatpush1.msra.mxu0 %v3137
        %3139 = vmatprep.subr.mxu0 0.0
        %3140 = vmatpush1.msra.mxu0 0.0
        %3141 = vmatprep.subr.mxu0 0.0
        %3142 = vmatpush1.msra.mxu0 0.0
        %3143 = vmatprep.subr.mxu0 0.0
        %3144 = vmatpush1.msra.mxu0 0.0
        %3145 = vmatprep.subr.mxu0 0.0
        %3146 = vmatpush1.msra.mxu0 0.0
        %3147 = vmatprep.subr.mxu0 0.0
        %3148 = vmatpush1.msra.mxu0 0.0
        %3149 = vmatprep.subr.mxu0 0.0
        %3150 = vmatpush1.msra.mxu0 0.0
        %3151 = vmatprep.subr.mxu0 0.0
        %3152 = vmatpush1.msra.mxu0 0.0
        %3153 = vmatprep.subr.mxu0 0.0
        %3154 = vmatpush1.msra.mxu0 0.0
        %3155 = vmatprep.subr.mxu0 0.0
        %3156 = vmatpush1.msra.mxu0 0.0
        %3157 = vmatprep.subr.mxu0 0.0
        %3158 = vmatpush1.msra.mxu0 0.0
        %3159 = vmatprep.subr.mxu0 0.0
        %3160 = vmatpush1.msra.mxu0 0.0
        %3161 = vmatprep.subr.mxu0 0.0
        %3162 = vmatpush1.msra.mxu0 0.0
        %3163 = vmatprep.subr.mxu0 0.0
        %3164 = vmatpush1.msra.mxu0 0.0
        %3165 = vmatprep.subr.mxu0 0.0
        %3166 = vmatpush1.msra.mxu0 0.0
        %3167 = vmatprep.subr.mxu0 0.0
        %3168 = vmatpush1.msra.mxu0 0.0
        %3169 = vmatprep.subr.mxu0 0.0
        %3170 = vmatpush1.msra.mxu0 0.0
        %3171 = vmatprep.mubr.f32.mxu0 0.0
        %v3172 = vand.u32 %v2815, 4294901760
        %v3173 = vsub.f32 %v2815, %v3172
        %3174 = vmatmul.mubr.f32.gmra.mrb[0].mxu0 %v3173
        %v3175 = vpop.f32.mrb[0].mxu0
        %v3176 = vadd.f32 %v3072, %v3175
        %v3177 = vpop.f32.mrb[0].mxu0
        %3178 = vdwg.mxu0
        %3179 = vmatprep.subr.mxu0 0.0
        %v3180 = vand.u32 %v2816, 4294901760
        %3181 = vmatpush1.msra.mxu0 %v3180
        %3182 = vmatprep.subr.mxu0 0.0
        %v3183 = vand.u32 %v2817, 4294901760
        %3184 = vmatpush1.msra.mxu0 %v3183
        %3185 = vmatprep.subr.mxu0 0.0
        %v3186 = vand.u32 %v2818, 4294901760
        %3187 = vmatpush1.msra.mxu0 %v3186
        %3188 = vmatprep.subr.mxu0 0.0
        %v3189 = vand.u32 %v2819, 4294901760
        %3190 = vmatpush1.msra.mxu0 %v3189
        %3191 = vmatprep.subr.mxu0 0.0
        %v3192 = vand.u32 %v2820, 4294901760
        %3193 = vmatpush1.msra.mxu0 %v3192
        %3194 = vmatprep.subr.mxu0 0.0
        %v3195 = vand.u32 %v2821, 4294901760
        %3196 = vmatpush1.msra.mxu0 %v3195
        %3197 = vmatprep.subr.mxu0 0.0
        %v3198 = vand.u32 %v2822, 4294901760
        %3199 = vmatpush1.msra.mxu0 %v3198
        %3200 = vmatprep.subr.mxu0 0.0
        %v3201 = vand.u32 %v2823, 4294901760
        %3202 = vmatpush1.msra.mxu0 %v3201
        %3203 = vmatprep.subr.mxu0 0.0
        %v3204 = vand.u32 %v2824, 4294901760
        %3205 = vmatpush1.msra.mxu0 %v3204
        %3206 = vmatprep.subr.mxu0 0.0
        %v3207 = vand.u32 %v2825, 4294901760
        %3208 = vmatpush1.msra.mxu0 %v3207
        %3209 = vmatprep.subr.mxu0 0.0
        %v3210 = vand.u32 %v2826, 4294901760
        %3211 = vmatpush1.msra.mxu0 %v3210
        %3212 = vmatprep.subr.mxu0 0.0
        %v3213 = vand.u32 %v2827, 4294901760
        %3214 = vmatpush1.msra.mxu0 %v3213
        %3215 = vmatprep.subr.mxu0 0.0
        %v3216 = vand.u32 %v2828, 4294901760
        %3217 = vmatpush1.msra.mxu0 %v3216
        %3218 = vmatprep.subr.mxu0 0.0
        %v3219 = vand.u32 %v2829, 4294901760
        %3220 = vmatpush1.msra.mxu0 %v3219
        %3221 = vmatprep.subr.mxu0 0.0
        %v3222 = vand.u32 %v2830, 4294901760
        %3223 = vmatpush1.msra.mxu0 %v3222
        %3224 = vmatprep.subr.mxu0 0.0
        %v3225 = vand.u32 %v2831, 4294901760
        %3226 = vmatpush1.msra.mxu0 %v3225
        %3227 = vmatprep.subr.mxu0 0.0
        %3228 = vmatpush1.msra.mxu0 0.0
        %3229 = vmatprep.subr.mxu0 0.0
        %3230 = vmatpush1.msra.mxu0 0.0
        %3231 = vmatprep.subr.mxu0 0.0
        %3232 = vmatpush1.msra.mxu0 0.0
        %3233 = vmatprep.subr.mxu0 0.0
        %3234 = vmatpush1.msra.mxu0 0.0
        %3235 = vmatprep.subr.mxu0 0.0
        %3236 = vmatpush1.msra.mxu0 0.0
        %3237 = vmatprep.subr.mxu0 0.0
        %3238 = vmatpush1.msra.mxu0 0.0
        %3239 = vmatprep.subr.mxu0 0.0
        %3240 = vmatpush1.msra.mxu0 0.0
        %3241 = vmatprep.subr.mxu0 0.0
        %3242 = vmatpush1.msra.mxu0 0.0
        %3243 = vmatprep.subr.mxu0 0.0
        %3244 = vmatpush1.msra.mxu0 0.0
        %3245 = vmatprep.subr.mxu0 0.0
        %3246 = vmatpush1.msra.mxu0 0.0
        %3247 = vmatprep.subr.mxu0 0.0
        %3248 = vmatpush1.msra.mxu0 0.0
        %3249 = vmatprep.subr.mxu0 0.0
        %3250 = vmatpush1.msra.mxu0 0.0
        %3251 = vmatprep.subr.mxu0 0.0
        %3252 = vmatpush1.msra.mxu0 0.0
        %3253 = vmatprep.subr.mxu0 0.0
        %3254 = vmatpush1.msra.mxu0 0.0
        %3255 = vmatprep.subr.mxu0 0.0
        %3256 = vmatpush1.msra.mxu0 0.0
        %3257 = vmatprep.subr.mxu0 0.0
        %3258 = vmatpush1.msra.mxu0 0.0
        %3259 = vmatprep.mubr.f32.mxu0 0.0
        %v3260 = vand.u32 %v2815, 4294901760
        %v3261 = vsub.f32 %v2815, %v3260
        %v3262 = vand.u32 %v3261, 4294901760
        %3263 = vmatmul.mubr.f32.gmra.mrb[0].mxu0 %v3262
        %v3264 = vpop.f32.mrb[0].mxu0
        %v3265 = vadd.f32 %v3176, %v3264
        %v3266 = vpop.f32.mrb[0].mxu0
        %3267 = vdwg.mxu0
        %3268 = vmatprep.subr.mxu0 0.0
        %v3269 = vand.u32 %v2816, 4294901760
        %v3270 = vsub.f32 %v2816, %v3269
        %v3271 = vand.u32 %v3270, 4294901760
        %3272 = vmatpush1.msra.mxu0 %v3271
        %3273 = vmatprep.subr.mxu0 0.0
        %v3274 = vand.u32 %v2817, 4294901760
        %v3275 = vsub.f32 %v2817, %v3274
        %v3276 = vand.u32 %v3275, 4294901760
        %3277 = vmatpush1.msra.mxu0 %v3276
        %3278 = vmatprep.subr.mxu0 0.0
        %v3279 = vand.u32 %v2818, 4294901760
        %v3280 = vsub.f32 %v2818, %v3279
        %v3281 = vand.u32 %v3280, 4294901760
        %3282 = vmatpush1.msra.mxu0 %v3281
        %3283 = vmatprep.subr.mxu0 0.0
        %v3284 = vand.u32 %v2819, 4294901760
        %v3285 = vsub.f32 %v2819, %v3284
        %v3286 = vand.u32 %v3285, 4294901760
        %3287 = vmatpush1.msra.mxu0 %v3286
        %3288 = vmatprep.subr.mxu0 0.0
        %v3289 = vand.u32 %v2820, 4294901760
        %v3290 = vsub.f32 %v2820, %v3289
        %v3291 = vand.u32 %v3290, 4294901760
        %3292 = vmatpush1.msra.mxu0 %v3291
        %3293 = vmatprep.subr.mxu0 0.0
        %v3294 = vand.u32 %v2821, 4294901760
        %v3295 = vsub.f32 %v2821, %v3294
        %v3296 = vand.u32 %v3295, 4294901760
        %3297 = vmatpush1.msra.mxu0 %v3296
        %3298 = vmatprep.subr.mxu0 0.0
        %v3299 = vand.u32 %v2822, 4294901760
        %v3300 = vsub.f32 %v2822, %v3299
        %v3301 = vand.u32 %v3300, 4294901760
        %3302 = vmatpush1.msra.mxu0 %v3301
        %3303 = vmatprep.subr.mxu0 0.0
        %v3304 = vand.u32 %v2823, 4294901760
        %v3305 = vsub.f32 %v2823, %v3304
        %v3306 = vand.u32 %v3305, 4294901760
        %3307 = vmatpush1.msra.mxu0 %v3306
        %3308 = vmatprep.subr.mxu0 0.0
        %v3309 = vand.u32 %v2824, 4294901760
        %v3310 = vsub.f32 %v2824, %v3309
        %v3311 = vand.u32 %v3310, 4294901760
        %3312 = vmatpush1.msra.mxu0 %v3311
        %3313 = vmatprep.subr.mxu0 0.0
        %v3314 = vand.u32 %v2825, 4294901760
        %v3315 = vsub.f32 %v2825, %v3314
        %v3316 = vand.u32 %v3315, 4294901760
        %3317 = vmatpush1.msra.mxu0 %v3316
        %3318 = vmatprep.subr.mxu0 0.0
        %v3319 = vand.u32 %v2826, 4294901760
        %v3320 = vsub.f32 %v2826, %v3319
        %v3321 = vand.u32 %v3320, 4294901760
        %3322 = vmatpush1.msra.mxu0 %v3321
        %3323 = vmatprep.subr.mxu0 0.0
        %v3324 = vand.u32 %v2827, 4294901760
        %v3325 = vsub.f32 %v2827, %v3324
        %v3326 = vand.u32 %v3325, 4294901760
        %3327 = vmatpush1.msra.mxu0 %v3326
        %3328 = vmatprep.subr.mxu0 0.0
        %v3329 = vand.u32 %v2828, 4294901760
        %v3330 = vsub.f32 %v2828, %v3329
        %v3331 = vand.u32 %v3330, 4294901760
        %3332 = vmatpush1.msra.mxu0 %v3331
        %3333 = vmatprep.subr.mxu0 0.0
        %v3334 = vand.u32 %v2829, 4294901760
        %v3335 = vsub.f32 %v2829, %v3334
        %v3336 = vand.u32 %v3335, 4294901760
        %3337 = vmatpush1.msra.mxu0 %v3336
        %3338 = vmatprep.subr.mxu0 0.0
        %v3339 = vand.u32 %v2830, 4294901760
        %v3340 = vsub.f32 %v2830, %v3339
        %v3341 = vand.u32 %v3340, 4294901760
        %3342 = vmatpush1.msra.mxu0 %v3341
        %3343 = vmatprep.subr.mxu0 0.0
        %v3344 = vand.u32 %v2831, 4294901760
        %v3345 = vsub.f32 %v2831, %v3344
        %v3346 = vand.u32 %v3345, 4294901760
        %3347 = vmatpush1.msra.mxu0 %v3346
        %3348 = vmatprep.subr.mxu0 0.0
        %3349 = vmatpush1.msra.mxu0 0.0
        %3350 = vmatprep.subr.mxu0 0.0
        %3351 = vmatpush1.msra.mxu0 0.0
        %3352 = vmatprep.subr.mxu0 0.0
        %3353 = vmatpush1.msra.mxu0 0.0
        %3354 = vmatprep.subr.mxu0 0.0
        %3355 = vmatpush1.msra.mxu0 0.0
        %3356 = vmatprep.subr.mxu0 0.0
        %3357 = vmatpush1.msra.mxu0 0.0
        %3358 = vmatprep.subr.mxu0 0.0
        %3359 = vmatpush1.msra.mxu0 0.0
        %3360 = vmatprep.subr.mxu0 0.0
        %3361 = vmatpush1.msra.mxu0 0.0
        %3362 = vmatprep.subr.mxu0 0.0
        %3363 = vmatpush1.msra.mxu0 0.0
        %3364 = vmatprep.subr.mxu0 0.0
        %3365 = vmatpush1.msra.mxu0 0.0
        %3366 = vmatprep.subr.mxu0 0.0
        %3367 = vmatpush1.msra.mxu0 0.0
        %3368 = vmatprep.subr.mxu0 0.0
        %3369 = vmatpush1.msra.mxu0 0.0
        %3370 = vmatprep.subr.mxu0 0.0
        %3371 = vmatpush1.msra.mxu0 0.0
        %3372 = vmatprep.subr.mxu0 0.0
        %3373 = vmatpush1.msra.mxu0 0.0
        %3374 = vmatprep.subr.mxu0 0.0
        %3375 = vmatpush1.msra.mxu0 0.0
        %3376 = vmatprep.subr.mxu0 0.0
        %3377 = vmatpush1.msra.mxu0 0.0
        %3378 = vmatprep.subr.mxu0 0.0
        %3379 = vmatpush1.msra.mxu0 0.0
        %3380 = vmatprep.mubr.f32.mxu0 0.0
        %v3381 = vand.u32 %v2815, 4294901760
        %3382 = vmatmul.mubr.f32.gmra.mrb[0].mxu0 %v3381
        %v3383 = vpop.f32.mrb[0].mxu0
        %v3384 = vadd.f32 %v3265, %v3383
        %v3385 = vpop.f32.mrb[0].mxu0
        %3386 = vdwg.mxu0
        %3387 = vmatprep.subr.mxu0 0.0
        %v3388 = vand.u32 %v2816, 4294901760
        %3389 = vmatpush1.msra.mxu0 %v3388
        %3390 = vmatprep.subr.mxu0 0.0
        %v3391 = vand.u32 %v2817, 4294901760
        %3392 = vmatpush1.msra.mxu0 %v3391
        %3393 = vmatprep.subr.mxu0 0.0
        %v3394 = vand.u32 %v2818, 4294901760
        %3395 = vmatpush1.msra.mxu0 %v3394
        %3396 = vmatprep.subr.mxu0 0.0
        %v3397 = vand.u32 %v2819, 4294901760
        %3398 = vmatpush1.msra.mxu0 %v3397
        %3399 = vmatprep.subr.mxu0 0.0
        %v3400 = vand.u32 %v2820, 4294901760
        %3401 = vmatpush1.msra.mxu0 %v3400
        %3402 = vmatprep.subr.mxu0 0.0
        %v3403 = vand.u32 %v2821, 4294901760
        %3404 = vmatpush1.msra.mxu0 %v3403
        %3405 = vmatprep.subr.mxu0 0.0
        %v3406 = vand.u32 %v2822, 4294901760
        %3407 = vmatpush1.msra.mxu0 %v3406
        %3408 = vmatprep.subr.mxu0 0.0
        %v3409 = vand.u32 %v2823, 4294901760
        %3410 = vmatpush1.msra.mxu0 %v3409
        %3411 = vmatprep.subr.mxu0 0.0
        %v3412 = vand.u32 %v2824, 4294901760
        %3413 = vmatpush1.msra.mxu0 %v3412
        %3414 = vmatprep.subr.mxu0 0.0
        %v3415 = vand.u32 %v2825, 4294901760
        %3416 = vmatpush1.msra.mxu0 %v3415
        %3417 = vmatprep.subr.mxu0 0.0
        %v3418 = vand.u32 %v2826, 4294901760
        %3419 = vmatpush1.msra.mxu0 %v3418
        %3420 = vmatprep.subr.mxu0 0.0
        %v3421 = vand.u32 %v2827, 4294901760
        %3422 = vmatpush1.msra.mxu0 %v3421
        %3423 = vmatprep.subr.mxu0 0.0
        %v3424 = vand.u32 %v2828, 4294901760
        %3425 = vmatpush1.msra.mxu0 %v3424
        %3426 = vmatprep.subr.mxu0 0.0
        %v3427 = vand.u32 %v2829, 4294901760
        %3428 = vmatpush1.msra.mxu0 %v3427
        %3429 = vmatprep.subr.mxu0 0.0
        %v3430 = vand.u32 %v2830, 4294901760
        %3431 = vmatpush1.msra.mxu0 %v3430
        %3432 = vmatprep.subr.mxu0 0.0
        %v3433 = vand.u32 %v2831, 4294901760
        %3434 = vmatpush1.msra.mxu0 %v3433
        %3435 = vmatprep.subr.mxu0 0.0
        %3436 = vmatpush1.msra.mxu0 0.0
        %3437 = vmatprep.subr.mxu0 0.0
        %3438 = vmatpush1.msra.mxu0 0.0
        %3439 = vmatprep.subr.mxu0 0.0
        %3440 = vmatpush1.msra.mxu0 0.0
        %3441 = vmatprep.subr.mxu0 0.0
        %3442 = vmatpush1.msra.mxu0 0.0
        %3443 = vmatprep.subr.mxu0 0.0
        %3444 = vmatpush1.msra.mxu0 0.0
        %3445 = vmatprep.subr.mxu0 0.0
        %3446 = vmatpush1.msra.mxu0 0.0
        %3447 = vmatprep.subr.mxu0 0.0
        %3448 = vmatpush1.msra.mxu0 0.0
        %3449 = vmatprep.subr.mxu0 0.0
        %3450 = vmatpush1.msra.mxu0 0.0
        %3451 = vmatprep.subr.mxu0 0.0
        %3452 = vmatpush1.msra.mxu0 0.0
        %3453 = vmatprep.subr.mxu0 0.0
        %3454 = vmatpush1.msra.mxu0 0.0
        %3455 = vmatprep.subr.mxu0 0.0
        %3456 = vmatpush1.msra.mxu0 0.0
        %3457 = vmatprep.subr.mxu0 0.0
        %3458 = vmatpush1.msra.mxu0 0.0
        %3459 = vmatprep.subr.mxu0 0.0
        %3460 = vmatpush1.msra.mxu0 0.0
        %3461 = vmatprep.subr.mxu0 0.0
        %3462 = vmatpush1.msra.mxu0 0.0
        %3463 = vmatprep.subr.mxu0 0.0
        %3464 = vmatpush1.msra.mxu0 0.0
        %3465 = vmatprep.subr.mxu0 0.0
        %3466 = vmatpush1.msra.mxu0 0.0
        %3467 = vmatprep.mubr.f32.mxu0 0.0
        %v3468 = vand.u32 %v2815, 4294901760
        %3469 = vmatmul.mubr.f32.gmra.mrb[0].mxu0 %v3468
        %v3470 = vpop.f32.mrb[0].mxu0
        %v3471 = vadd.f32 %v3384, %v3470
        %v3472 = vpop.f32.mrb[0].mxu0
        %3473 = vdwg.mxu0
        %v3474 = vmax.f32 %v3471, 0.0
        %v3475 = vld [vmem:[%s5] sm:$0xff]
        %v3476 = vld [vmem:[%s5 + $0x8] sm:$0xff]
        %v3477 = vld [vmem:[%s5 + $0x10] sm:$0xff]
        %v3478 = vld [vmem:[%s5 + $0x18] sm:$0xff]
        %v3479 = vld [vmem:[%s5 + $0x20] sm:$0xff]
        %v3480 = vld [vmem:[%s5 + $0x28] sm:$0xff]
        %v3481 = vld [vmem:[%s5 + $0x30] sm:$0xff]
        %v3482 = vld [vmem:[%s5 + $0x38] sm:$0xff]
        %v3483 = vld [vmem:[%s6] sm:$0x1]
        %vm3484 = vcmask 523264
        %v3486 = vsel %vm3484, %v3474, 0
        %3488 = vmatprep.subr.mxu0 0.0
        %v3489 = vand.u32 %v3475, 4294901760
        %3490 = vmatpush1.msra.mxu0 %v3489
        %3491 = vmatprep.subr.mxu0 0.0
        %v3492 = vand.u32 %v3476, 4294901760
        %3493 = vmatpush1.msra.mxu0 %v3492
        %3494 = vmatprep.subr.mxu0 0.0
        %v3495 = vand.u32 %v3477, 4294901760
        %3496 = vmatpush1.msra.mxu0 %v3495
        %3497 = vmatprep.subr.mxu0 0.0
        %v3498 = vand.u32 %v3478, 4294901760
        %3499 = vmatpush1.msra.mxu0 %v3498
        %3500 = vmatprep.subr.mxu0 0.0
        %v3501 = vand.u32 %v3479, 4294901760
        %3502 = vmatpush1.msra.mxu0 %v3501
        %3503 = vmatprep.subr.mxu0 0.0
        %v3504 = vand.u32 %v3480, 4294901760
        %3505 = vmatpush1.msra.mxu0 %v3504
        %3506 = vmatprep.subr.mxu0 0.0
        %v3507 = vand.u32 %v3481, 4294901760
        %3508 = vmatpush1.msra.mxu0 %v3507
        %3509 = vmatprep.subr.mxu0 0.0
        %v3510 = vand.u32 %v3482, 4294901760
        %3511 = vmatpush1.msra.mxu0 %v3510
        %3512 = vmatprep.subr.mxu0 0.0
        %3513 = vmatpush1.msra.mxu0 0.0
        %3514 = vmatprep.subr.mxu0 0.0
        %3515 = vmatpush1.msra.mxu0 0.0
        %3516 = vmatprep.subr.mxu0 0.0
        %3517 = vmatpush1.msra.mxu0 0.0
        %3518 = vmatprep.subr.mxu0 0.0
        %3519 = vmatpush1.msra.mxu0 0.0
        %3520 = vmatprep.subr.mxu0 0.0
        %3521 = vmatpush1.msra.mxu0 0.0
        %3522 = vmatprep.subr.mxu0 0.0
        %3523 = vmatpush1.msra.mxu0 0.0
        %3524 = vmatprep.subr.mxu0 0.0
        %3525 = vmatpush1.msra.mxu0 0.0
        %3526 = vmatprep.subr.mxu0 0.0
        %3527 = vmatpush1.msra.mxu0 0.0
        %3528 = vmatprep.subr.mxu0 0.0
        %3529 = vmatpush1.msra.mxu0 0.0
        %3530 = vmatprep.subr.mxu0 0.0
        %3531 = vmatpush1.msra.mxu0 0.0
        %3532 = vmatprep.subr.mxu0 0.0
        %3533 = vmatpush1.msra.mxu0 0.0
        %3534 = vmatprep.subr.mxu0 0.0
        %3535 = vmatpush1.msra.mxu0 0.0
        %3536 = vmatprep.subr.mxu0 0.0
        %3537 = vmatpush1.msra.mxu0 0.0
        %3538 = vmatprep.subr.mxu0 0.0
        %3539 = vmatpush1.msra.mxu0 0.0
        %3540 = vmatprep.subr.mxu0 0.0
        %3541 = vmatpush1.msra.mxu0 0.0
        %3542 = vmatprep.subr.mxu0 0.0
        %3543 = vmatpush1.msra.mxu0 0.0
        %3544 = vmatprep.subr.mxu0 0.0
        %3545 = vmatpush1.msra.mxu0 0.0
        %3546 = vmatprep.subr.mxu0 0.0
        %3547 = vmatpush1.msra.mxu0 0.0
        %3548 = vmatprep.subr.mxu0 0.0
        %3549 = vmatpush1.msra.mxu0 0.0
        %3550 = vmatprep.subr.mxu0 0.0
        %3551 = vmatpush1.msra.mxu0 0.0
        %3552 = vmatprep.subr.mxu0 0.0
        %3553 = vmatpush1.msra.mxu0 0.0
        %3554 = vmatprep.subr.mxu0 0.0
        %3555 = vmatpush1.msra.mxu0 0.0
        %3556 = vmatprep.subr.mxu0 0.0
        %3557 = vmatpush1.msra.mxu0 0.0
        %3558 = vmatprep.subr.mxu0 0.0
        %3559 = vmatpush1.msra.mxu0 0.0
        %3560 = vmatprep.mubr.f32.mxu0 0.0
        %v3561 = vand.u32 %v3486, 4294901760
        %v3562 = vsub.f32 %v3486, %v3561
        %v3563 = vand.u32 %v3562, 4294901760
        %v3564 = vsub.f32 %v3562, %v3563
        %v3565 = vand.u32 %v3564, 4294901760
        %3566 = vmatmul.mubr.f32.gmra.mrb[0].mxu0 %v3565
        %v3567 = vpop.f32.mrb[0].mxu0
        %v3568 = vadd.f32 %v3483, %v3567
        %v3569 = vpop.f32.mrb[0].mxu0
        %3570 = vdwg.mxu0
        %3571 = vmatprep.subr.mxu0 0.0
        %v3572 = vand.u32 %v3475, 4294901760
        %v3573 = vsub.f32 %v3475, %v3572
        %v3574 = vand.u32 %v3573, 4294901760
        %v3575 = vsub.f32 %v3573, %v3574
        %v3576 = vand.u32 %v3575, 4294901760
        %3577 = vmatpush1.msra.mxu0 %v3576
        %3578 = vmatprep.subr.mxu0 0.0
        %v3579 = vand.u32 %v3476, 4294901760
        %v3580 = vsub.f32 %v3476, %v3579
        %v3581 = vand.u32 %v3580, 4294901760
        %v3582 = vsub.f32 %v3580, %v3581
        %v3583 = vand.u32 %v3582, 4294901760
        %3584 = vmatpush1.msra.mxu0 %v3583
        %3585 = vmatprep.subr.mxu0 0.0
        %v3586 = vand.u32 %v3477, 4294901760
        %v3587 = vsub.f32 %v3477, %v3586
        %v3588 = vand.u32 %v3587, 4294901760
        %v3589 = vsub.f32 %v3587, %v3588
        %v3590 = vand.u32 %v3589, 4294901760
        %3591 = vmatpush1.msra.mxu0 %v3590
        %3592 = vmatprep.subr.mxu0 0.0
        %v3593 = vand.u32 %v3478, 4294901760
        %v3594 = vsub.f32 %v3478, %v3593
        %v3595 = vand.u32 %v3594, 4294901760
        %v3596 = vsub.f32 %v3594, %v3595
        %v3597 = vand.u32 %v3596, 4294901760
        %3598 = vmatpush1.msra.mxu0 %v3597
        %3599 = vmatprep.subr.mxu0 0.0
        %v3600 = vand.u32 %v3479, 4294901760
        %v3601 = vsub.f32 %v3479, %v3600
        %v3602 = vand.u32 %v3601, 4294901760
        %v3603 = vsub.f32 %v3601, %v3602
        %v3604 = vand.u32 %v3603, 4294901760
        %3605 = vmatpush1.msra.mxu0 %v3604
        %3606 = vmatprep.subr.mxu0 0.0
        %v3607 = vand.u32 %v3480, 4294901760
        %v3608 = vsub.f32 %v3480, %v3607
        %v3609 = vand.u32 %v3608, 4294901760
        %v3610 = vsub.f32 %v3608, %v3609
        %v3611 = vand.u32 %v3610, 4294901760
        %3612 = vmatpush1.msra.mxu0 %v3611
        %3613 = vmatprep.subr.mxu0 0.0
        %v3614 = vand.u32 %v3481, 4294901760
        %v3615 = vsub.f32 %v3481, %v3614
        %v3616 = vand.u32 %v3615, 4294901760
        %v3617 = vsub.f32 %v3615, %v3616
        %v3618 = vand.u32 %v3617, 4294901760
        %3619 = vmatpush1.msra.mxu0 %v3618
        %3620 = vmatprep.subr.mxu0 0.0
        %v3621 = vand.u32 %v3482, 4294901760
        %v3622 = vsub.f32 %v3482, %v3621
        %v3623 = vand.u32 %v3622, 4294901760
        %v3624 = vsub.f32 %v3622, %v3623
        %v3625 = vand.u32 %v3624, 4294901760
        %3626 = vmatpush1.msra.mxu0 %v3625
        %3627 = vmatprep.subr.mxu0 0.0
        %3628 = vmatpush1.msra.mxu0 0.0
        %3629 = vmatprep.subr.mxu0 0.0
        %3630 = vmatpush1.msra.mxu0 0.0
        %3631 = vmatprep.subr.mxu0 0.0
        %3632 = vmatpush1.msra.mxu0 0.0
        %3633 = vmatprep.subr.mxu0 0.0
        %3634 = vmatpush1.msra.mxu0 0.0
        %3635 = vmatprep.subr.mxu0 0.0
        %3636 = vmatpush1.msra.mxu0 0.0
        %3637 = vmatprep.subr.mxu0 0.0
        %3638 = vmatpush1.msra.mxu0 0.0
        %3639 = vmatprep.subr.mxu0 0.0
        %3640 = vmatpush1.msra.mxu0 0.0
        %3641 = vmatprep.subr.mxu0 0.0
        %3642 = vmatpush1.msra.mxu0 0.0
        %3643 = vmatprep.subr.mxu0 0.0
        %3644 = vmatpush1.msra.mxu0 0.0
        %3645 = vmatprep.subr.mxu0 0.0
        %3646 = vmatpush1.msra.mxu0 0.0
        %3647 = vmatprep.subr.mxu0 0.0
        %3648 = vmatpush1.msra.mxu0 0.0
        %3649 = vmatprep.subr.mxu0 0.0
        %3650 = vmatpush1.msra.mxu0 0.0
        %3651 = vmatprep.subr.mxu0 0.0
        %3652 = vmatpush1.msra.mxu0 0.0
        %3653 = vmatprep.subr.mxu0 0.0
        %3654 = vmatpush1.msra.mxu0 0.0
        %3655 = vmatprep.subr.mxu0 0.0
        %3656 = vmatpush1.msra.mxu0 0.0
        %3657 = vmatprep.subr.mxu0 0.0
        %3658 = vmatpush1.msra.mxu0 0.0
        %3659 = vmatprep.subr.mxu0 0.0
        %3660 = vmatpush1.msra.mxu0 0.0
        %3661 = vmatprep.subr.mxu0 0.0
        %3662 = vmatpush1.msra.mxu0 0.0
        %3663 = vmatprep.subr.mxu0 0.0
        %3664 = vmatpush1.msra.mxu0 0.0
        %3665 = vmatprep.subr.mxu0 0.0
        %3666 = vmatpush1.msra.mxu0 0.0
        %3667 = vmatprep.subr.mxu0 0.0
        %3668 = vmatpush1.msra.mxu0 0.0
        %3669 = vmatprep.subr.mxu0 0.0
        %3670 = vmatpush1.msra.mxu0 0.0
        %3671 = vmatprep.subr.mxu0 0.0
        %3672 = vmatpush1.msra.mxu0 0.0
        %3673 = vmatprep.subr.mxu0 0.0
        %3674 = vmatpush1.msra.mxu0 0.0
        %3675 = vmatprep.mubr.f32.mxu0 0.0
        %v3676 = vand.u32 %v3486, 4294901760
        %3677 = vmatmul.mubr.f32.gmra.mrb[0].mxu0 %v3676
        %v3678 = vpop.f32.mrb[0].mxu0
        %v3679 = vadd.f32 %v3568, %v3678
        %v3680 = vpop.f32.mrb[0].mxu0
        %3681 = vdwg.mxu0
        %3682 = vmatprep.subr.mxu0 0.0
        %v3683 = vand.u32 %v3475, 4294901760
        %v3684 = vsub.f32 %v3475, %v3683
        %3685 = vmatpush1.msra.mxu0 %v3684
        %3686 = vmatprep.subr.mxu0 0.0
        %v3687 = vand.u32 %v3476, 4294901760
        %v3688 = vsub.f32 %v3476, %v3687
        %3689 = vmatpush1.msra.mxu0 %v3688
        %3690 = vmatprep.subr.mxu0 0.0
        %v3691 = vand.u32 %v3477, 4294901760
        %v3692 = vsub.f32 %v3477, %v3691
        %3693 = vmatpush1.msra.mxu0 %v3692
        %3694 = vmatprep.subr.mxu0 0.0
        %v3695 = vand.u32 %v3478, 4294901760
        %v3696 = vsub.f32 %v3478, %v3695
        %3697 = vmatpush1.msra.mxu0 %v3696
        %3698 = vmatprep.subr.mxu0 0.0
        %v3699 = vand.u32 %v3479, 4294901760
        %v3700 = vsub.f32 %v3479, %v3699
        %3701 = vmatpush1.msra.mxu0 %v3700
        %3702 = vmatprep.subr.mxu0 0.0
        %v3703 = vand.u32 %v3480, 4294901760
        %v3704 = vsub.f32 %v3480, %v3703
        %3705 = vmatpush1.msra.mxu0 %v3704
        %3706 = vmatprep.subr.mxu0 0.0
        %v3707 = vand.u32 %v3481, 4294901760
        %v3708 = vsub.f32 %v3481, %v3707
        %3709 = vmatpush1.msra.mxu0 %v3708
        %3710 = vmatprep.subr.mxu0 0.0
        %v3711 = vand.u32 %v3482, 4294901760
        %v3712 = vsub.f32 %v3482, %v3711
        %3713 = vmatpush1.msra.mxu0 %v3712
        %3714 = vmatprep.subr.mxu0 0.0
        %3715 = vmatpush1.msra.mxu0 0.0
        %3716 = vmatprep.subr.mxu0 0.0
        %3717 = vmatpush1.msra.mxu0 0.0
        %3718 = vmatprep.subr.mxu0 0.0
        %3719 = vmatpush1.msra.mxu0 0.0
        %3720 = vmatprep.subr.mxu0 0.0
        %3721 = vmatpush1.msra.mxu0 0.0
        %3722 = vmatprep.subr.mxu0 0.0
        %3723 = vmatpush1.msra.mxu0 0.0
        %3724 = vmatprep.subr.mxu0 0.0
        %3725 = vmatpush1.msra.mxu0 0.0
        %3726 = vmatprep.subr.mxu0 0.0
        %3727 = vmatpush1.msra.mxu0 0.0
        %3728 = vmatprep.subr.mxu0 0.0
        %3729 = vmatpush1.msra.mxu0 0.0
        %3730 = vmatprep.subr.mxu0 0.0
        %3731 = vmatpush1.msra.mxu0 0.0
        %3732 = vmatprep.subr.mxu0 0.0
        %3733 = vmatpush1.msra.mxu0 0.0
        %3734 = vmatprep.subr.mxu0 0.0
        %3735 = vmatpush1.msra.mxu0 0.0
        %3736 = vmatprep.subr.mxu0 0.0
        %3737 = vmatpush1.msra.mxu0 0.0
        %3738 = vmatprep.subr.mxu0 0.0
        %3739 = vmatpush1.msra.mxu0 0.0
        %3740 = vmatprep.subr.mxu0 0.0
        %3741 = vmatpush1.msra.mxu0 0.0
        %3742 = vmatprep.subr.mxu0 0.0
        %3743 = vmatpush1.msra.mxu0 0.0
        %3744 = vmatprep.subr.mxu0 0.0
        %3745 = vmatpush1.msra.mxu0 0.0
        %3746 = vmatprep.subr.mxu0 0.0
        %3747 = vmatpush1.msra.mxu0 0.0
        %3748 = vmatprep.subr.mxu0 0.0
        %3749 = vmatpush1.msra.mxu0 0.0
        %3750 = vmatprep.subr.mxu0 0.0
        %3751 = vmatpush1.msra.mxu0 0.0
        %3752 = vmatprep.subr.mxu0 0.0
        %3753 = vmatpush1.msra.mxu0 0.0
        %3754 = vmatprep.subr.mxu0 0.0
        %3755 = vmatpush1.msra.mxu0 0.0
        %3756 = vmatprep.subr.mxu0 0.0
        %3757 = vmatpush1.msra.mxu0 0.0
        %3758 = vmatprep.subr.mxu0 0.0
        %3759 = vmatpush1.msra.mxu0 0.0
        %3760 = vmatprep.subr.mxu0 0.0
        %3761 = vmatpush1.msra.mxu0 0.0
        %3762 = vmatprep.mubr.f32.mxu0 0.0
        %v3763 = vand.u32 %v3486, 4294901760
        %v3764 = vsub.f32 %v3486, %v3763
        %3765 = vmatmul.mubr.f32.gmra.mrb[0].mxu0 %v3764
        %v3766 = vpop.f32.mrb[0].mxu0
        %v3767 = vadd.f32 %v3679, %v3766
        %v3768 = vpop.f32.mrb[0].mxu0
        %3769 = vdwg.mxu0
        %3770 = vmatprep.subr.mxu0 0.0
        %v3771 = vand.u32 %v3475, 4294901760
        %3772 = vmatpush1.msra.mxu0 %v3771
        %3773 = vmatprep.subr.mxu0 0.0
        %v3774 = vand.u32 %v3476, 4294901760
        %3775 = vmatpush1.msra.mxu0 %v3774
        %3776 = vmatprep.subr.mxu0 0.0
        %v3777 = vand.u32 %v3477, 4294901760
        %3778 = vmatpush1.msra.mxu0 %v3777
        %3779 = vmatprep.subr.mxu0 0.0
        %v3780 = vand.u32 %v3478, 4294901760
        %3781 = vmatpush1.msra.mxu0 %v3780
        %3782 = vmatprep.subr.mxu0 0.0
        %v3783 = vand.u32 %v3479, 4294901760
        %3784 = vmatpush1.msra.mxu0 %v3783
        %3785 = vmatprep.subr.mxu0 0.0
        %v3786 = vand.u32 %v3480, 4294901760
        %3787 = vmatpush1.msra.mxu0 %v3786
        %3788 = vmatprep.subr.mxu0 0.0
        %v3789 = vand.u32 %v3481, 4294901760
        %3790 = vmatpush1.msra.mxu0 %v3789
        %3791 = vmatprep.subr.mxu0 0.0
        %v3792 = vand.u32 %v3482, 4294901760
        %3793 = vmatpush1.msra.mxu0 %v3792
        %3794 = vmatprep.subr.mxu0 0.0
        %3795 = vmatpush1.msra.mxu0 0.0
        %3796 = vmatprep.subr.mxu0 0.0
        %3797 = vmatpush1.msra.mxu0 0.0
        %3798 = vmatprep.subr.mxu0 0.0
        %3799 = vmatpush1.msra.mxu0 0.0
        %3800 = vmatprep.subr.mxu0 0.0
        %3801 = vmatpush1.msra.mxu0 0.0
        %3802 = vmatprep.subr.mxu0 0.0
        %3803 = vmatpush1.msra.mxu0 0.0
        %3804 = vmatprep.subr.mxu0 0.0
        %3805 = vmatpush1.msra.mxu0 0.0
        %3806 = vmatprep.subr.mxu0 0.0
        %3807 = vmatpush1.msra.mxu0 0.0
        %3808 = vmatprep.subr.mxu0 0.0
        %3809 = vmatpush1.msra.mxu0 0.0
        %3810 = vmatprep.subr.mxu0 0.0
        %3811 = vmatpush1.msra.mxu0 0.0
        %3812 = vmatprep.subr.mxu0 0.0
        %3813 = vmatpush1.msra.mxu0 0.0
        %3814 = vmatprep.subr.mxu0 0.0
        %3815 = vmatpush1.msra.mxu0 0.0
        %3816 = vmatprep.subr.mxu0 0.0
        %3817 = vmatpush1.msra.mxu0 0.0
        %3818 = vmatprep.subr.mxu0 0.0
        %3819 = vmatpush1.msra.mxu0 0.0
        %3820 = vmatprep.subr.mxu0 0.0
        %3821 = vmatpush1.msra.mxu0 0.0
        %3822 = vmatprep.subr.mxu0 0.0
        %3823 = vmatpush1.msra.mxu0 0.0
        %3824 = vmatprep.subr.mxu0 0.0
        %3825 = vmatpush1.msra.mxu0 0.0
        %3826 = vmatprep.subr.mxu0 0.0
        %3827 = vmatpush1.msra.mxu0 0.0
        %3828 = vmatprep.subr.mxu0 0.0
        %3829 = vmatpush1.msra.mxu0 0.0
        %3830 = vmatprep.subr.mxu0 0.0
        %3831 = vmatpush1.msra.mxu0 0.0
        %3832 = vmatprep.subr.mxu0 0.0
        %3833 = vmatpush1.msra.mxu0 0.0
        %3834 = vmatprep.subr.mxu0 0.0
        %3835 = vmatpush1.msra.mxu0 0.0
        %3836 = vmatprep.subr.mxu0 0.0
        %3837 = vmatpush1.msra.mxu0 0.0
        %3838 = vmatprep.subr.mxu0 0.0
        %3839 = vmatpush1.msra.mxu0 0.0
        %3840 = vmatprep.subr.mxu0 0.0
        %3841 = vmatpush1.msra.mxu0 0.0
        %3842 = vmatprep.mubr.f32.mxu0 0.0
        %v3843 = vand.u32 %v3486, 4294901760
        %v3844 = vsub.f32 %v3486, %v3843
        %v3845 = vand.u32 %v3844, 4294901760
        %3846 = vmatmul.mubr.f32.gmra.mrb[0].mxu0 %v3845
        %v3847 = vpop.f32.mrb[0].mxu0
        %v3848 = vadd.f32 %v3767, %v3847
        %v3849 = vpop.f32.mrb[0].mxu0
        %3850 = vdwg.mxu0
        %3851 = vmatprep.subr.mxu0 0.0
        %v3852 = vand.u32 %v3475, 4294901760
        %v3853 = vsub.f32 %v3475, %v3852
        %v3854 = vand.u32 %v3853, 4294901760
        %3855 = vmatpush1.msra.mxu0 %v3854
        %3856 = vmatprep.subr.mxu0 0.0
        %v3857 = vand.u32 %v3476, 4294901760
        %v3858 = vsub.f32 %v3476, %v3857
        %v3859 = vand.u32 %v3858, 4294901760
        %3860 = vmatpush1.msra.mxu0 %v3859
        %3861 = vmatprep.subr.mxu0 0.0
        %v3862 = vand.u32 %v3477, 4294901760
        %v3863 = vsub.f32 %v3477, %v3862
        %v3864 = vand.u32 %v3863, 4294901760
        %3865 = vmatpush1.msra.mxu0 %v3864
        %3866 = vmatprep.subr.mxu0 0.0
        %v3867 = vand.u32 %v3478, 4294901760
        %v3868 = vsub.f32 %v3478, %v3867
        %v3869 = vand.u32 %v3868, 4294901760
        %3870 = vmatpush1.msra.mxu0 %v3869
        %3871 = vmatprep.subr.mxu0 0.0
        %v3872 = vand.u32 %v3479, 4294901760
        %v3873 = vsub.f32 %v3479, %v3872
        %v3874 = vand.u32 %v3873, 4294901760
        %3875 = vmatpush1.msra.mxu0 %v3874
        %3876 = vmatprep.subr.mxu0 0.0
        %v3877 = vand.u32 %v3480, 4294901760
        %v3878 = vsub.f32 %v3480, %v3877
        %v3879 = vand.u32 %v3878, 4294901760
        %3880 = vmatpush1.msra.mxu0 %v3879
        %3881 = vmatprep.subr.mxu0 0.0
        %v3882 = vand.u32 %v3481, 4294901760
        %v3883 = vsub.f32 %v3481, %v3882
        %v3884 = vand.u32 %v3883, 4294901760
        %3885 = vmatpush1.msra.mxu0 %v3884
        %3886 = vmatprep.subr.mxu0 0.0
        %v3887 = vand.u32 %v3482, 4294901760
        %v3888 = vsub.f32 %v3482, %v3887
        %v3889 = vand.u32 %v3888, 4294901760
        %3890 = vmatpush1.msra.mxu0 %v3889
        %3891 = vmatprep.subr.mxu0 0.0
        %3892 = vmatpush1.msra.mxu0 0.0
        %3893 = vmatprep.subr.mxu0 0.0
        %3894 = vmatpush1.msra.mxu0 0.0
        %3895 = vmatprep.subr.mxu0 0.0
        %3896 = vmatpush1.msra.mxu0 0.0
        %3897 = vmatprep.subr.mxu0 0.0
        %3898 = vmatpush1.msra.mxu0 0.0
        %3899 = vmatprep.subr.mxu0 0.0
        %3900 = vmatpush1.msra.mxu0 0.0
        %3901 = vmatprep.subr.mxu0 0.0
        %3902 = vmatpush1.msra.mxu0 0.0
        %3903 = vmatprep.subr.mxu0 0.0
        %3904 = vmatpush1.msra.mxu0 0.0
        %3905 = vmatprep.subr.mxu0 0.0
        %3906 = vmatpush1.msra.mxu0 0.0
        %3907 = vmatprep.subr.mxu0 0.0
        %3908 = vmatpush1.msra.mxu0 0.0
        %3909 = vmatprep.subr.mxu0 0.0
        %3910 = vmatpush1.msra.mxu0 0.0
        %3911 = vmatprep.subr.mxu0 0.0
        %3912 = vmatpush1.msra.mxu0 0.0
        %3913 = vmatprep.subr.mxu0 0.0
        %3914 = vmatpush1.msra.mxu0 0.0
        %3915 = vmatprep.subr.mxu0 0.0
        %3916 = vmatpush1.msra.mxu0 0.0
        %3917 = vmatprep.subr.mxu0 0.0
        %3918 = vmatpush1.msra.mxu0 0.0
        %3919 = vmatprep.subr.mxu0 0.0
        %3920 = vmatpush1.msra.mxu0 0.0
        %3921 = vmatprep.subr.mxu0 0.0
        %3922 = vmatpush1.msra.mxu0 0.0
        %3923 = vmatprep.subr.mxu0 0.0
        %3924 = vmatpush1.msra.mxu0 0.0
        %3925 = vmatprep.subr.mxu0 0.0
        %3926 = vmatpush1.msra.mxu0 0.0
        %3927 = vmatprep.subr.mxu0 0.0
        %3928 = vmatpush1.msra.mxu0 0.0
        %3929 = vmatprep.subr.mxu0 0.0
        %3930 = vmatpush1.msra.mxu0 0.0
        %3931 = vmatprep.subr.mxu0 0.0
        %3932 = vmatpush1.msra.mxu0 0.0
        %3933 = vmatprep.subr.mxu0 0.0
        %3934 = vmatpush1.msra.mxu0 0.0
        %3935 = vmatprep.subr.mxu0 0.0
        %3936 = vmatpush1.msra.mxu0 0.0
        %3937 = vmatprep.subr.mxu0 0.0
        %3938 = vmatpush1.msra.mxu0 0.0
        %3939 = vmatprep.mubr.f32.mxu0 0.0
        %v3940 = vand.u32 %v3486, 4294901760
        %3941 = vmatmul.mubr.f32.gmra.mrb[0].mxu0 %v3940
        %v3942 = vpop.f32.mrb[0].mxu0
        %v3943 = vadd.f32 %v3848, %v3942
        %v3944 = vpop.f32.mrb[0].mxu0
        %3945 = vdwg.mxu0
        %3946 = vmatprep.subr.mxu0 0.0
        %v3947 = vand.u32 %v3475, 4294901760
        %3948 = vmatpush1.msra.mxu0 %v3947
        %3949 = vmatprep.subr.mxu0 0.0
        %v3950 = vand.u32 %v3476, 4294901760
        %3951 = vmatpush1.msra.mxu0 %v3950
        %3952 = vmatprep.subr.mxu0 0.0
        %v3953 = vand.u32 %v3477, 4294901760
        %3954 = vmatpush1.msra.mxu0 %v3953
        %3955 = vmatprep.subr.mxu0 0.0
        %v3956 = vand.u32 %v3478, 4294901760
        %3957 = vmatpush1.msra.mxu0 %v3956
        %3958 = vmatprep.subr.mxu0 0.0
        %v3959 = vand.u32 %v3479, 4294901760
        %3960 = vmatpush1.msra.mxu0 %v3959
        %3961 = vmatprep.subr.mxu0 0.0
        %v3962 = vand.u32 %v3480, 4294901760
        %3963 = vmatpush1.msra.mxu0 %v3962
        %3964 = vmatprep.subr.mxu0 0.0
        %v3965 = vand.u32 %v3481, 4294901760
        %3966 = vmatpush1.msra.mxu0 %v3965
        %3967 = vmatprep.subr.mxu0 0.0
        %v3968 = vand.u32 %v3482, 4294901760
        %3969 = vmatpush1.msra.mxu0 %v3968
        %3970 = vmatprep.subr.mxu0 0.0
        %3971 = vmatpush1.msra.mxu0 0.0
        %3972 = vmatprep.subr.mxu0 0.0
        %3973 = vmatpush1.msra.mxu0 0.0
        %3974 = vmatprep.subr.mxu0 0.0
        %3975 = vmatpush1.msra.mxu0 0.0
        %3976 = vmatprep.subr.mxu0 0.0
        %3977 = vmatpush1.msra.mxu0 0.0
        %3978 = vmatprep.subr.mxu0 0.0
        %3979 = vmatpush1.msra.mxu0 0.0
        %3980 = vmatprep.subr.mxu0 0.0
        %3981 = vmatpush1.msra.mxu0 0.0
        %3982 = vmatprep.subr.mxu0 0.0
        %3983 = vmatpush1.msra.mxu0 0.0
        %3984 = vmatprep.subr.mxu0 0.0
        %3985 = vmatpush1.msra.mxu0 0.0
        %3986 = vmatprep.subr.mxu0 0.0
        %3987 = vmatpush1.msra.mxu0 0.0
        %3988 = vmatprep.subr.mxu0 0.0
        %3989 = vmatpush1.msra.mxu0 0.0
        %3990 = vmatprep.subr.mxu0 0.0
        %3991 = vmatpush1.msra.mxu0 0.0
        %3992 = vmatprep.subr.mxu0 0.0
        %3993 = vmatpush1.msra.mxu0 0.0
        %3994 = vmatprep.subr.mxu0 0.0
        %3995 = vmatpush1.msra.mxu0 0.0
        %3996 = vmatprep.subr.mxu0 0.0
        %3997 = vmatpush1.msra.mxu0 0.0
        %3998 = vmatprep.subr.mxu0 0.0
        %3999 = vmatpush1.msra.mxu0 0.0
        %4000 = vmatprep.subr.mxu0 0.0
        %4001 = vmatpush1.msra.mxu0 0.0
        %4002 = vmatprep.subr.mxu0 0.0
        %4003 = vmatpush1.msra.mxu0 0.0
        %4004 = vmatprep.subr.mxu0 0.0
        %4005 = vmatpush1.msra.mxu0 0.0
        %4006 = vmatprep.subr.mxu0 0.0
        %4007 = vmatpush1.msra.mxu0 0.0
        %4008 = vmatprep.subr.mxu0 0.0
        %4009 = vmatpush1.msra.mxu0 0.0
        %4010 = vmatprep.subr.mxu0 0.0
        %4011 = vmatpush1.msra.mxu0 0.0
        %4012 = vmatprep.subr.mxu0 0.0
        %4013 = vmatpush1.msra.mxu0 0.0
        %4014 = vmatprep.subr.mxu0 0.0
        %4015 = vmatpush1.msra.mxu0 0.0
        %4016 = vmatprep.subr.mxu0 0.0
        %4017 = vmatpush1.msra.mxu0 0.0
        %4018 = vmatprep.mubr.f32.mxu0 0.0
        %v4019 = vand.u32 %v3486, 4294901760
        %4020 = vmatmul.mubr.f32.gmra.mrb[0].mxu0 %v4019
        %v4021 = vpop.f32.mrb[0].mxu0
        %v4022 = vadd.f32 %v3943, %v4021
        %v4023 = vpop.f32.mrb[0].mxu0
        %4024 = vdwg.mxu0
        %v4025 = vmax.f32 %v4022, 0.0
        %v4026 = vld [vmem:[%s7] sm:$0xff]
        %v4027 = vld [vmem:[%s7 + $0x8] sm:$0xff]
        %v4028 = vld [vmem:[%s7 + $0x10] sm:$0xff]
        %v4029 = vld [vmem:[%s7 + $0x18] sm:$0xff]
        %v4030 = vld [vmem:[%s8] sm:$0x1]
        %vm4031 = vcmask 261120
        %v4033 = vsel %vm4031, %v4025, 0
        %4035 = vmatprep.subr.mxu0 0.0
        %v4036 = vand.u32 %v4026, 4294901760
        %4037 = vmatpush1.msra.mxu0 %v4036
        %4038 = vmatprep.subr.mxu0 0.0
        %v4039 = vand.u32 %v4027, 4294901760
        %4040 = vmatpush1.msra.mxu0 %v4039
        %4041 = vmatprep.subr.mxu0 0.0
        %v4042 = vand.u32 %v4028, 4294901760
        %4043 = vmatpush1.msra.mxu0 %v4042
        %4044 = vmatprep.subr.mxu0 0.0
        %v4045 = vand.u32 %v4029, 4294901760
        %4046 = vmatpush1.msra.mxu0 %v4045
        %4047 = vmatprep.subr.mxu0 0.0
        %4048 = vmatpush1.msra.mxu0 0.0
        %4049 = vmatprep.subr.mxu0 0.0
        %4050 = vmatpush1.msra.mxu0 0.0
        %4051 = vmatprep.subr.mxu0 0.0
        %4052 = vmatpush1.msra.mxu0 0.0
        %4053 = vmatprep.subr.mxu0 0.0
        %4054 = vmatpush1.msra.mxu0 0.0
        %4055 = vmatprep.subr.mxu0 0.0
        %4056 = vmatpush1.msra.mxu0 0.0
        %4057 = vmatprep.subr.mxu0 0.0
        %4058 = vmatpush1.msra.mxu0 0.0
        %4059 = vmatprep.subr.mxu0 0.0
        %4060 = vmatpush1.msra.mxu0 0.0
        %4061 = vmatprep.subr.mxu0 0.0
        %4062 = vmatpush1.msra.mxu0 0.0
        %4063 = vmatprep.subr.mxu0 0.0
        %4064 = vmatpush1.msra.mxu0 0.0
        %4065 = vmatprep.subr.mxu0 0.0
        %4066 = vmatpush1.msra.mxu0 0.0
        %4067 = vmatprep.subr.mxu0 0.0
        %4068 = vmatpush1.msra.mxu0 0.0
        %4069 = vmatprep.subr.mxu0 0.0
        %4070 = vmatpush1.msra.mxu0 0.0
        %4071 = vmatprep.subr.mxu0 0.0
        %4072 = vmatpush1.msra.mxu0 0.0
        %4073 = vmatprep.subr.mxu0 0.0
        %4074 = vmatpush1.msra.mxu0 0.0
        %4075 = vmatprep.subr.mxu0 0.0
        %4076 = vmatpush1.msra.mxu0 0.0
        %4077 = vmatprep.subr.mxu0 0.0
        %4078 = vmatpush1.msra.mxu0 0.0
        %4079 = vmatprep.subr.mxu0 0.0
        %4080 = vmatpush1.msra.mxu0 0.0
        %4081 = vmatprep.subr.mxu0 0.0
        %4082 = vmatpush1.msra.mxu0 0.0
        %4083 = vmatprep.subr.mxu0 0.0
        %4084 = vmatpush1.msra.mxu0 0.0
        %4085 = vmatprep.subr.mxu0 0.0
        %4086 = vmatpush1.msra.mxu0 0.0
        %4087 = vmatprep.subr.mxu0 0.0
        %4088 = vmatpush1.msra.mxu0 0.0
        %4089 = vmatprep.subr.mxu0 0.0
        %4090 = vmatpush1.msra.mxu0 0.0
        %4091 = vmatprep.subr.mxu0 0.0
        %4092 = vmatpush1.msra.mxu0 0.0
        %4093 = vmatprep.subr.mxu0 0.0
        %4094 = vmatpush1.msra.mxu0 0.0
        %4095 = vmatprep.subr.mxu0 0.0
        %4096 = vmatpush1.msra.mxu0 0.0
        %4097 = vmatprep.subr.mxu0 0.0
        %4098 = vmatpush1.msra.mxu0 0.0
        %4099 = vmatprep.subr.mxu0 0.0
        %4100 = vmatpush1.msra.mxu0 0.0
        %4101 = vmatprep.subr.mxu0 0.0
        %4102 = vmatpush1.msra.mxu0 0.0
        %4103 = vmatprep.mubr.f32.mxu0 0.0
        %v4104 = vand.u32 %v4033, 4294901760
        %v4105 = vsub.f32 %v4033, %v4104
        %v4106 = vand.u32 %v4105, 4294901760
        %v4107 = vsub.f32 %v4105, %v4106
        %v4108 = vand.u32 %v4107, 4294901760
        %4109 = vmatmul.mubr.f32.gmra.mrb[0].mxu0 %v4108
        %v4110 = vpop.f32.mrb[0].mxu0
        %v4111 = vadd.f32 %v4030, %v4110
        %v4112 = vpop.f32.mrb[0].mxu0
        %4113 = vdwg.mxu0
        %4114 = vmatprep.subr.mxu0 0.0
        %v4115 = vand.u32 %v4026, 4294901760
        %v4116 = vsub.f32 %v4026, %v4115
        %v4117 = vand.u32 %v4116, 4294901760
        %v4118 = vsub.f32 %v4116, %v4117
        %v4119 = vand.u32 %v4118, 4294901760
        %4120 = vmatpush1.msra.mxu0 %v4119
        %4121 = vmatprep.subr.mxu0 0.0
        %v4122 = vand.u32 %v4027, 4294901760
        %v4123 = vsub.f32 %v4027, %v4122
        %v4124 = vand.u32 %v4123, 4294901760
        %v4125 = vsub.f32 %v4123, %v4124
        %v4126 = vand.u32 %v4125, 4294901760
        %4127 = vmatpush1.msra.mxu0 %v4126
        %4128 = vmatprep.subr.mxu0 0.0
        %v4129 = vand.u32 %v4028, 4294901760
        %v4130 = vsub.f32 %v4028, %v4129
        %v4131 = vand.u32 %v4130, 4294901760
        %v4132 = vsub.f32 %v4130, %v4131
        %v4133 = vand.u32 %v4132, 4294901760
        %4134 = vmatpush1.msra.mxu0 %v4133
        %4135 = vmatprep.subr.mxu0 0.0
        %v4136 = vand.u32 %v4029, 4294901760
        %v4137 = vsub.f32 %v4029, %v4136
        %v4138 = vand.u32 %v4137, 4294901760
        %v4139 = vsub.f32 %v4137, %v4138
        %v4140 = vand.u32 %v4139, 4294901760
        %4141 = vmatpush1.msra.mxu0 %v4140
        %4142 = vmatprep.subr.mxu0 0.0
        %4143 = vmatpush1.msra.mxu0 0.0
        %4144 = vmatprep.subr.mxu0 0.0
        %4145 = vmatpush1.msra.mxu0 0.0
        %4146 = vmatprep.subr.mxu0 0.0
        %4147 = vmatpush1.msra.mxu0 0.0
        %4148 = vmatprep.subr.mxu0 0.0
        %4149 = vmatpush1.msra.mxu0 0.0
        %4150 = vmatprep.subr.mxu0 0.0
        %4151 = vmatpush1.msra.mxu0 0.0
        %4152 = vmatprep.subr.mxu0 0.0
        %4153 = vmatpush1.msra.mxu0 0.0
        %4154 = vmatprep.subr.mxu0 0.0
        %4155 = vmatpush1.msra.mxu0 0.0
        %4156 = vmatprep.subr.mxu0 0.0
        %4157 = vmatpush1.msra.mxu0 0.0
        %4158 = vmatprep.subr.mxu0 0.0
        %4159 = vmatpush1.msra.mxu0 0.0
        %4160 = vmatprep.subr.mxu0 0.0
        %4161 = vmatpush1.msra.mxu0 0.0
        %4162 = vmatprep.subr.mxu0 0.0
        %4163 = vmatpush1.msra.mxu0 0.0
        %4164 = vmatprep.subr.mxu0 0.0
        %4165 = vmatpush1.msra.mxu0 0.0
        %4166 = vmatprep.subr.mxu0 0.0
        %4167 = vmatpush1.msra.mxu0 0.0
        %4168 = vmatprep.subr.mxu0 0.0
        %4169 = vmatpush1.msra.mxu0 0.0
        %4170 = vmatprep.subr.mxu0 0.0
        %4171 = vmatpush1.msra.mxu0 0.0
        %4172 = vmatprep.subr.mxu0 0.0
        %4173 = vmatpush1.msra.mxu0 0.0
        %4174 = vmatprep.subr.mxu0 0.0
        %4175 = vmatpush1.msra.mxu0 0.0
        %4176 = vmatprep.subr.mxu0 0.0
        %4177 = vmatpush1.msra.mxu0 0.0
        %4178 = vmatprep.subr.mxu0 0.0
        %4179 = vmatpush1.msra.mxu0 0.0
        %4180 = vmatprep.subr.mxu0 0.0
        %4181 = vmatpush1.msra.mxu0 0.0
        %4182 = vmatprep.subr.mxu0 0.0
        %4183 = vmatpush1.msra.mxu0 0.0
        %4184 = vmatprep.subr.mxu0 0.0
        %4185 = vmatpush1.msra.mxu0 0.0
        %4186 = vmatprep.subr.mxu0 0.0
        %4187 = vmatpush1.msra.mxu0 0.0
        %4188 = vmatprep.subr.mxu0 0.0
        %4189 = vmatpush1.msra.mxu0 0.0
        %4190 = vmatprep.subr.mxu0 0.0
        %4191 = vmatpush1.msra.mxu0 0.0
        %4192 = vmatprep.subr.mxu0 0.0
        %4193 = vmatpush1.msra.mxu0 0.0
        %4194 = vmatprep.subr.mxu0 0.0
        %4195 = vmatpush1.msra.mxu0 0.0
        %4196 = vmatprep.subr.mxu0 0.0
        %4197 = vmatpush1.msra.mxu0 0.0
        %4198 = vmatprep.mubr.f32.mxu0 0.0
        %v4199 = vand.u32 %v4033, 4294901760
        %4200 = vmatmul.mubr.f32.gmra.mrb[0].mxu0 %v4199
        %v4201 = vpop.f32.mrb[0].mxu0
        %v4202 = vadd.f32 %v4111, %v4201
        %v4203 = vpop.f32.mrb[0].mxu0
        %4204 = vdwg.mxu0
        %4205 = vmatprep.subr.mxu0 0.0
        %v4206 = vand.u32 %v4026, 4294901760
        %v4207 = vsub.f32 %v4026, %v4206
        %4208 = vmatpush1.msra.mxu0 %v4207
        %4209 = vmatprep.subr.mxu0 0.0
        %v4210 = vand.u32 %v4027, 4294901760
        %v4211 = vsub.f32 %v4027, %v4210
        %4212 = vmatpush1.msra.mxu0 %v4211
        %4213 = vmatprep.subr.mxu0 0.0
        %v4214 = vand.u32 %v4028, 4294901760
        %v4215 = vsub.f32 %v4028, %v4214
        %4216 = vmatpush1.msra.mxu0 %v4215
        %4217 = vmatprep.subr.mxu0 0.0
        %v4218 = vand.u32 %v4029, 4294901760
        %v4219 = vsub.f32 %v4029, %v4218
        %4220 = vmatpush1.msra.mxu0 %v4219
        %4221 = vmatprep.subr.mxu0 0.0
        %4222 = vmatpush1.msra.mxu0 0.0
        %4223 = vmatprep.subr.mxu0 0.0
        %4224 = vmatpush1.msra.mxu0 0.0
        %4225 = vmatprep.subr.mxu0 0.0
        %4226 = vmatpush1.msra.mxu0 0.0
        %4227 = vmatprep.subr.mxu0 0.0
        %4228 = vmatpush1.msra.mxu0 0.0
        %4229 = vmatprep.subr.mxu0 0.0
        %4230 = vmatpush1.msra.mxu0 0.0
        %4231 = vmatprep.subr.mxu0 0.0
        %4232 = vmatpush1.msra.mxu0 0.0
        %4233 = vmatprep.subr.mxu0 0.0
        %4234 = vmatpush1.msra.mxu0 0.0
        %4235 = vmatprep.subr.mxu0 0.0
        %4236 = vmatpush1.msra.mxu0 0.0
        %4237 = vmatprep.subr.mxu0 0.0
        %4238 = vmatpush1.msra.mxu0 0.0
        %4239 = vmatprep.subr.mxu0 0.0
        %4240 = vmatpush1.msra.mxu0 0.0
        %4241 = vmatprep.subr.mxu0 0.0
        %4242 = vmatpush1.msra.mxu0 0.0
        %4243 = vmatprep.subr.mxu0 0.0
        %4244 = vmatpush1.msra.mxu0 0.0
        %4245 = vmatprep.subr.mxu0 0.0
        %4246 = vmatpush1.msra.mxu0 0.0
        %4247 = vmatprep.subr.mxu0 0.0
        %4248 = vmatpush1.msra.mxu0 0.0
        %4249 = vmatprep.subr.mxu0 0.0
        %4250 = vmatpush1.msra.mxu0 0.0
        %4251 = vmatprep.subr.mxu0 0.0
        %4252 = vmatpush1.msra.mxu0 0.0
        %4253 = vmatprep.subr.mxu0 0.0
        %4254 = vmatpush1.msra.mxu0 0.0
        %4255 = vmatprep.subr.mxu0 0.0
        %4256 = vmatpush1.msra.mxu0 0.0
        %4257 = vmatprep.subr.mxu0 0.0
        %4258 = vmatpush1.msra.mxu0 0.0
        %4259 = vmatprep.subr.mxu0 0.0
        %4260 = vmatpush1.msra.mxu0 0.0
        %4261 = vmatprep.subr.mxu0 0.0
        %4262 = vmatpush1.msra.mxu0 0.0
        %4263 = vmatprep.subr.mxu0 0.0
        %4264 = vmatpush1.msra.mxu0 0.0
        %4265 = vmatprep.subr.mxu0 0.0
        %4266 = vmatpush1.msra.mxu0 0.0
        %4267 = vmatprep.subr.mxu0 0.0
        %4268 = vmatpush1.msra.mxu0 0.0
        %4269 = vmatprep.subr.mxu0 0.0
        %4270 = vmatpush1.msra.mxu0 0.0
        %4271 = vmatprep.subr.mxu0 0.0
        %4272 = vmatpush1.msra.mxu0 0.0
        %4273 = vmatprep.subr.mxu0 0.0
        %4274 = vmatpush1.msra.mxu0 0.0
        %4275 = vmatprep.subr.mxu0 0.0
        %4276 = vmatpush1.msra.mxu0 0.0
        %4277 = vmatprep.mubr.f32.mxu0 0.0
        %v4278 = vand.u32 %v4033, 4294901760
        %v4279 = vsub.f32 %v4033, %v4278
        %4280 = vmatmul.mubr.f32.gmra.mrb[0].mxu0 %v4279
        %v4281 = vpop.f32.mrb[0].mxu0
        %v4282 = vadd.f32 %v4202, %v4281
        %v4283 = vpop.f32.mrb[0].mxu0
        %4284 = vdwg.mxu0
        %4285 = vmatprep.subr.mxu0 0.0
        %v4286 = vand.u32 %v4026, 4294901760
        %4287 = vmatpush1.msra.mxu0 %v4286
        %4288 = vmatprep.subr.mxu0 0.0
        %v4289 = vand.u32 %v4027, 4294901760
        %4290 = vmatpush1.msra.mxu0 %v4289
        %4291 = vmatprep.subr.mxu0 0.0
        %v4292 = vand.u32 %v4028, 4294901760
        %4293 = vmatpush1.msra.mxu0 %v4292
        %4294 = vmatprep.subr.mxu0 0.0
        %v4295 = vand.u32 %v4029, 4294901760
        %4296 = vmatpush1.msra.mxu0 %v4295
        %4297 = vmatprep.subr.mxu0 0.0
        %4298 = vmatpush1.msra.mxu0 0.0
        %4299 = vmatprep.subr.mxu0 0.0
        %4300 = vmatpush1.msra.mxu0 0.0
        %4301 = vmatprep.subr.mxu0 0.0
        %4302 = vmatpush1.msra.mxu0 0.0
        %4303 = vmatprep.subr.mxu0 0.0
        %4304 = vmatpush1.msra.mxu0 0.0
        %4305 = vmatprep.subr.mxu0 0.0
        %4306 = vmatpush1.msra.mxu0 0.0
        %4307 = vmatprep.subr.mxu0 0.0
        %4308 = vmatpush1.msra.mxu0 0.0
        %4309 = vmatprep.subr.mxu0 0.0
        %4310 = vmatpush1.msra.mxu0 0.0
        %4311 = vmatprep.subr.mxu0 0.0
        %4312 = vmatpush1.msra.mxu0 0.0
        %4313 = vmatprep.subr.mxu0 0.0
        %4314 = vmatpush1.msra.mxu0 0.0
        %4315 = vmatprep.subr.mxu0 0.0
        %4316 = vmatpush1.msra.mxu0 0.0
        %4317 = vmatprep.subr.mxu0 0.0
        %4318 = vmatpush1.msra.mxu0 0.0
        %4319 = vmatprep.subr.mxu0 0.0
        %4320 = vmatpush1.msra.mxu0 0.0
        %4321 = vmatprep.subr.mxu0 0.0
        %4322 = vmatpush1.msra.mxu0 0.0
        %4323 = vmatprep.subr.mxu0 0.0
        %4324 = vmatpush1.msra.mxu0 0.0
        %4325 = vmatprep.subr.mxu0 0.0
        %4326 = vmatpush1.msra.mxu0 0.0
        %4327 = vmatprep.subr.mxu0 0.0
        %4328 = vmatpush1.msra.mxu0 0.0
        %4329 = vmatprep.subr.mxu0 0.0
        %4330 = vmatpush1.msra.mxu0 0.0
        %4331 = vmatprep.subr.mxu0 0.0
        %4332 = vmatpush1.msra.mxu0 0.0
        %4333 = vmatprep.subr.mxu0 0.0
        %4334 = vmatpush1.msra.mxu0 0.0
        %4335 = vmatprep.subr.mxu0 0.0
        %4336 = vmatpush1.msra.mxu0 0.0
        %4337 = vmatprep.subr.mxu0 0.0
        %4338 = vmatpush1.msra.mxu0 0.0
        %4339 = vmatprep.subr.mxu0 0.0
        %4340 = vmatpush1.msra.mxu0 0.0
        %4341 = vmatprep.subr.mxu0 0.0
        %4342 = vmatpush1.msra.mxu0 0.0
        %4343 = vmatprep.subr.mxu0 0.0
        %4344 = vmatpush1.msra.mxu0 0.0
        %4345 = vmatprep.subr.mxu0 0.0
        %4346 = vmatpush1.msra.mxu0 0.0
        %4347 = vmatprep.subr.mxu0 0.0
        %4348 = vmatpush1.msra.mxu0 0.0
        %4349 = vmatprep.subr.mxu0 0.0
        %4350 = vmatpush1.msra.mxu0 0.0
        %4351 = vmatprep.subr.mxu0 0.0
        %4352 = vmatpush1.msra.mxu0 0.0
        %4353 = vmatprep.mubr.f32.mxu0 0.0
        %v4354 = vand.u32 %v4033, 4294901760
        %v4355 = vsub.f32 %v4033, %v4354
        %v4356 = vand.u32 %v4355, 4294901760
        %4357 = vmatmul.mubr.f32.gmra.mrb[0].mxu0 %v4356
        %v4358 = vpop.f32.mrb[0].mxu0
        %v4359 = vadd.f32 %v4282, %v4358
        %v4360 = vpop.f32.mrb[0].mxu0
        %4361 = vdwg.mxu0
        %4362 = vmatprep.subr.mxu0 0.0
        %v4363 = vand.u32 %v4026, 4294901760
        %v4364 = vsub.f32 %v4026, %v4363
        %v4365 = vand.u32 %v4364, 4294901760
        %4366 = vmatpush1.msra.mxu0 %v4365
        %4367 = vmatprep.subr.mxu0 0.0
        %v4368 = vand.u32 %v4027, 4294901760
        %v4369 = vsub.f32 %v4027, %v4368
        %v4370 = vand.u32 %v4369, 4294901760
        %4371 = vmatpush1.msra.mxu0 %v4370
        %4372 = vmatprep.subr.mxu0 0.0
        %v4373 = vand.u32 %v4028, 4294901760
        %v4374 = vsub.f32 %v4028, %v4373
        %v4375 = vand.u32 %v4374, 4294901760
        %4376 = vmatpush1.msra.mxu0 %v4375
        %4377 = vmatprep.subr.mxu0 0.0
        %v4378 = vand.u32 %v4029, 4294901760
        %v4379 = vsub.f32 %v4029, %v4378
        %v4380 = vand.u32 %v4379, 4294901760
        %4381 = vmatpush1.msra.mxu0 %v4380
        %4382 = vmatprep.subr.mxu0 0.0
        %4383 = vmatpush1.msra.mxu0 0.0
        %4384 = vmatprep.subr.mxu0 0.0
        %4385 = vmatpush1.msra.mxu0 0.0
        %4386 = vmatprep.subr.mxu0 0.0
        %4387 = vmatpush1.msra.mxu0 0.0
        %4388 = vmatprep.subr.mxu0 0.0
        %4389 = vmatpush1.msra.mxu0 0.0
        %4390 = vmatprep.subr.mxu0 0.0
        %4391 = vmatpush1.msra.mxu0 0.0
        %4392 = vmatprep.subr.mxu0 0.0
        %4393 = vmatpush1.msra.mxu0 0.0
        %4394 = vmatprep.subr.mxu0 0.0
        %4395 = vmatpush1.msra.mxu0 0.0
        %4396 = vmatprep.subr.mxu0 0.0
        %4397 = vmatpush1.msra.mxu0 0.0
        %4398 = vmatprep.subr.mxu0 0.0
        %4399 = vmatpush1.msra.mxu0 0.0
        %4400 = vmatprep.subr.mxu0 0.0
        %4401 = vmatpush1.msra.mxu0 0.0
        %4402 = vmatprep.subr.mxu0 0.0
        %4403 = vmatpush1.msra.mxu0 0.0
        %4404 = vmatprep.subr.mxu0 0.0
        %4405 = vmatpush1.msra.mxu0 0.0
        %4406 = vmatprep.subr.mxu0 0.0
        %4407 = vmatpush1.msra.mxu0 0.0
        %4408 = vmatprep.subr.mxu0 0.0
        %4409 = vmatpush1.msra.mxu0 0.0
        %4410 = vmatprep.subr.mxu0 0.0
        %4411 = vmatpush1.msra.mxu0 0.0
        %4412 = vmatprep.subr.mxu0 0.0
        %4413 = vmatpush1.msra.mxu0 0.0
        %4414 = vmatprep.subr.mxu0 0.0
        %4415 = vmatpush1.msra.mxu0 0.0
        %4416 = vmatprep.subr.mxu0 0.0
        %4417 = vmatpush1.msra.mxu0 0.0
        %4418 = vmatprep.subr.mxu0 0.0
        %4419 = vmatpush1.msra.mxu0 0.0
        %4420 = vmatprep.subr.mxu0 0.0
        %4421 = vmatpush1.msra.mxu0 0.0
        %4422 = vmatprep.subr.mxu0 0.0
        %4423 = vmatpush1.msra.mxu0 0.0
        %4424 = vmatprep.subr.mxu0 0.0
        %4425 = vmatpush1.msra.mxu0 0.0
        %4426 = vmatprep.subr.mxu0 0.0
        %4427 = vmatpush1.msra.mxu0 0.0
        %4428 = vmatprep.subr.mxu0 0.0
        %4429 = vmatpush1.msra.mxu0 0.0
        %4430 = vmatprep.subr.mxu0 0.0
        %4431 = vmatpush1.msra.mxu0 0.0
        %4432 = vmatprep.subr.mxu0 0.0
        %4433 = vmatpush1.msra.mxu0 0.0
        %4434 = vmatprep.subr.mxu0 0.0
        %4435 = vmatpush1.msra.mxu0 0.0
        %4436 = vmatprep.subr.mxu0 0.0
        %4437 = vmatpush1.msra.mxu0 0.0
        %4438 = vmatprep.mubr.f32.mxu0 0.0
        %v4439 = vand.u32 %v4033, 4294901760
        %4440 = vmatmul.mubr.f32.gmra.mrb[0].mxu0 %v4439
        %v4441 = vpop.f32.mrb[0].mxu0
        %v4442 = vadd.f32 %v4359, %v4441
        %v4443 = vpop.f32.mrb[0].mxu0
        %4444 = vdwg.mxu0
        %4445 = vmatprep.subr.mxu0 0.0
        %v4446 = vand.u32 %v4026, 4294901760
        %4447 = vmatpush1.msra.mxu0 %v4446
        %4448 = vmatprep.subr.mxu0 0.0
        %v4449 = vand.u32 %v4027, 4294901760
        %4450 = vmatpush1.msra.mxu0 %v4449
        %4451 = vmatprep.subr.mxu0 0.0
        %v4452 = vand.u32 %v4028, 4294901760
        %4453 = vmatpush1.msra.mxu0 %v4452
        %4454 = vmatprep.subr.mxu0 0.0
        %v4455 = vand.u32 %v4029, 4294901760
        %4456 = vmatpush1.msra.mxu0 %v4455
        %4457 = vmatprep.subr.mxu0 0.0
        %4458 = vmatpush1.msra.mxu0 0.0
        %4459 = vmatprep.subr.mxu0 0.0
        %4460 = vmatpush1.msra.mxu0 0.0
        %4461 = vmatprep.subr.mxu0 0.0
        %4462 = vmatpush1.msra.mxu0 0.0
        %4463 = vmatprep.subr.mxu0 0.0
        %4464 = vmatpush1.msra.mxu0 0.0
        %4465 = vmatprep.subr.mxu0 0.0
        %4466 = vmatpush1.msra.mxu0 0.0
        %4467 = vmatprep.subr.mxu0 0.0
        %4468 = vmatpush1.msra.mxu0 0.0
        %4469 = vmatprep.subr.mxu0 0.0
        %4470 = vmatpush1.msra.mxu0 0.0
        %4471 = vmatprep.subr.mxu0 0.0
        %4472 = vmatpush1.msra.mxu0 0.0
        %4473 = vmatprep.subr.mxu0 0.0
        %4474 = vmatpush1.msra.mxu0 0.0
        %4475 = vmatprep.subr.mxu0 0.0
        %4476 = vmatpush1.msra.mxu0 0.0
        %4477 = vmatprep.subr.mxu0 0.0
        %4478 = vmatpush1.msra.mxu0 0.0
        %4479 = vmatprep.subr.mxu0 0.0
        %4480 = vmatpush1.msra.mxu0 0.0
        %4481 = vmatprep.subr.mxu0 0.0
        %4482 = vmatpush1.msra.mxu0 0.0
        %4483 = vmatprep.subr.mxu0 0.0
        %4484 = vmatpush1.msra.mxu0 0.0
        %4485 = vmatprep.subr.mxu0 0.0
        %4486 = vmatpush1.msra.mxu0 0.0
        %4487 = vmatprep.subr.mxu0 0.0
        %4488 = vmatpush1.msra.mxu0 0.0
        %4489 = vmatprep.subr.mxu0 0.0
        %4490 = vmatpush1.msra.mxu0 0.0
        %4491 = vmatprep.subr.mxu0 0.0
        %4492 = vmatpush1.msra.mxu0 0.0
        %4493 = vmatprep.subr.mxu0 0.0
        %4494 = vmatpush1.msra.mxu0 0.0
        %4495 = vmatprep.subr.mxu0 0.0
        %4496 = vmatpush1.msra.mxu0 0.0
        %4497 = vmatprep.subr.mxu0 0.0
        %4498 = vmatpush1.msra.mxu0 0.0
        %4499 = vmatprep.subr.mxu0 0.0
        %4500 = vmatpush1.msra.mxu0 0.0
        %4501 = vmatprep.subr.mxu0 0.0
        %4502 = vmatpush1.msra.mxu0 0.0
        %4503 = vmatprep.subr.mxu0 0.0
        %4504 = vmatpush1.msra.mxu0 0.0
        %4505 = vmatprep.subr.mxu0 0.0
        %4506 = vmatpush1.msra.mxu0 0.0
        %4507 = vmatprep.subr.mxu0 0.0
        %4508 = vmatpush1.msra.mxu0 0.0
        %4509 = vmatprep.subr.mxu0 0.0
        %4510 = vmatpush1.msra.mxu0 0.0
        %4511 = vmatprep.subr.mxu0 0.0
        %4512 = vmatpush1.msra.mxu0 0.0
        %4513 = vmatprep.mubr.f32.mxu0 0.0
        %v4514 = vand.u32 %v4033, 4294901760
        %4515 = vmatmul.mubr.f32.gmra.mrb[0].mxu0 %v4514
        %v4516 = vpop.f32.mrb[0].mxu0
        %v4517 = vadd.f32 %v4442, %v4516
        %v4518 = vpop.f32.mrb[0].mxu0
        %4519 = vdwg.mxu0
        %v4520 = vxor.u32 %v4517, 2147483648
        %v4521 = vmul.f32 %v4520, 1.442695
        %v4522 = vpow.pop %v4521
        %v4523 = vadd.f32 %v4522, 1.0
        %v4524 = vrcp.pop %v4523
        %v4525 = vmul.f32 1.0, %v4524
        %vm4526 = vcmask 57344
        %4527 = vst.msk [vmem:[%s344] sm:$0x1] %vm4526, %v4525
        %s4528 = sand.u32 %s239, 1
        %s4529 = scalar_lea.sflag [#allocation4], %s4528
        %s4530 = sand.u32 %s239, 1
        %s4531 = scalar_lea.vmem [#allocation3], %s4530
        // Predicated region
        $region57: #{tpu_custom_call.1} parent=55 // pred_check
          %p4532 = pneg %p249
        $region58: #{tpu_custom_call.1} parent=55 // pred_check_branch
          %4534 = sbr.rel (%p4532) target = $region60
        $region59: #{tpu_custom_call.1} parent=55 // pred_region
          %s4536 = ssub.s32 16, 16
          %4537 = vsyncadd %s4529, %s4536
          %s4538 = smul.addr %s27, 16
          %s4539 = scalar_lea.hbm %s9, %s4538
          %s4541 = sshll.u32 %s4531, 4
          %s4542 = int_to_ptr.vmem [resolvable:$true] %s4541
          %4544 = dma.vmem_to_hbm [thread:$0]  %s4542, 16, %s4539, %s4529
        $region60: #{tpu_custom_call.1} parent=55 // pred_fallthru
          _
      $region56: #{tpu_custom_call.1} parent=5 // pred_fallthru
        _
      %p4545 = scmp.le.s32.totalorder 2, %s18
      // Predicated region
      $region61: #{tpu_custom_call.1} parent=5 // pred_check
        %p4546 = pneg %p4545
      $region62: #{tpu_custom_call.1} parent=5 // pred_check_branch
        %4548 = sbr.rel (%p4546) target = $region64
      $region63: #{tpu_custom_call.1} parent=5 // pred_region
        %s4549 = ssub.s32 %s18, 2
        // Predicated region
        $region65: #{tpu_custom_call.1} parent=63 // pred_check
          %p4550 = pneg %p255
        $region66: #{tpu_custom_call.1} parent=63 // pred_check_branch
          %4552 = sbr.rel (%p4550) target = $region68
        $region67: #{tpu_custom_call.1} parent=63 // pred_region
          %s4553 = sand.u32 %s240, 1
          %s4554 = scalar_lea.sflag [#allocation4], %s4553
          %s4555 = sand.u32 %s240, 1
          %s4556 = scalar_lea.vmem [#allocation3], %s4555
          %4557 = dma.done %s4554, 16
        $region68: #{tpu_custom_call.1} parent=63 // pred_fallthru
          _
      $region64: #{tpu_custom_call.1} parent=5 // pred_fallthru
        _
    $region6: #{tpu_custom_call.1} parent=1 // loop_footer
      %s22 = sadd.s32 1, %s18
    $region7: #{tpu_custom_call.1} parent=1 // loop_footer_branch
      %17 = sbr.rel target = $region3
    $region8: #{tpu_custom_call.1} parent=1 // loop_exit
      _
    %4558 = vsyncpa [#allocation4], 1
    %s4559 = scalar_lea.sflag [#allocation4], 1
    %4560 = vsyncpa %s4559, 1

</llo_original>
